<compile_context>
chip_gen: v6e
topology: v6e:2x2x1
jax: 0.10.0
libtpu: 0.0.40
codegen_flags: <defaults>
</compile_context>

<pallas_src>
import jax
import jax.numpy as jnp
import numpy as np
from jax.experimental import pallas as pl
from jax.experimental.pallas import tpu as pltpu

C_IN = 76      # SE squeezed channels
C_MID = 1824   # expanded channels
C_OUT = 304    # projected channels
H = W = 7
HW = H * W

TCO = 160      # C_OUT tile (multiple of 8/16/32 sublane tilings); cdiv(304,160)=2 blocks -> dual-TC on v7x


def _se_proj_kernel(x_se_ref, w1_ref, b1_ref, x_main_ref, w2_ref, out_ref):
    # conv2d156 (1x1 on a 1x1 spatial tensor) == (1,76)@(76,1824) matvec + bias, f32 accumulation.
    s = jnp.dot(x_se_ref[...].astype(jnp.bfloat16), w1_ref[...],
                preferred_element_type=jnp.float32) + b1_ref[...]          # (1, C_MID) f32
    gate = jax.nn.sigmoid(s)                                               # sigmoid31, (1, C_MID)

    # Fold the per-channel gate into this block's rows of w2 (lane-aligned sublane broadcast):
    #   (w2 * g) @ x_main  ==  w2 @ (g * x_main)   (the original gated conv2d157)
    w2g = (w2_ref[...].astype(jnp.float32) * gate).astype(jnp.bfloat16)    # (TCO, C_MID) bf16

    # conv2d157 (1x1, no bias) == matmul over channels; bf16 MXU inputs, f32 accumulation.
    out_ref[...] = jnp.dot(w2g, x_main_ref[...].astype(jnp.bfloat16),
                           preferred_element_type=jnp.float32).astype(out_ref.dtype)  # (TCO, HW)


def prepare_params(w1, b1, w2, weight_dtype=jnp.bfloat16):
    """One-time parameter prep (weight-load / module-init time, NOT per forward call).

    w1: (C_MID, C_IN) conv2d156 weight (1x1 kernel squeezed)
    b1: (C_MID,)      conv2d156 bias
    w2: (C_OUT, C_MID) conv2d157 weight (1x1 kernel squeezed, no bias)
    """
    w1_t = jnp.asarray(w1).T.astype(weight_dtype)            # (C_IN, C_MID)
    b1_r = jnp.asarray(b1).reshape(1, C_MID).astype(jnp.float32)
    w2_n = jnp.asarray(w2).astype(weight_dtype)              # (C_OUT, C_MID) — native layout
    return w1_t, b1_r, w2_n


def se_block(x487, x484, w1_t, b1_r, w2):
    """x487: (1, C_IN, 1, 1) NCHW, x484: (1, C_MID, H, W) NCHW.
    w1_t/b1_r/w2 come from prepare_params. Returns (1, C_OUT, H, W) NCHW."""
    x_se = x487.reshape(1, C_IN)          # free reshape (contiguous)
    x_main = x484.reshape(C_MID, HW)      # free reshape: NCHW (1,C,H,W) -> (C, H*W)

    n_co = pl.cdiv(C_OUT, TCO)

    cost = pl.CostEstimate(
        flops=2 * C_MID * C_IN + C_OUT * C_MID + 2 * C_OUT * C_MID * HW,
        transcendentals=C_MID,
        bytes_accessed=(x_se.size * 4
                        + w1_t.size * w1_t.dtype.itemsize
                        + b1_r.size * 4
                        + x_main.size * 4
                        + w2.size * w2.dtype.itemsize
                        + C_OUT * HW * 4),
    )

    out_flat = pl.pallas_call(
        _se_proj_kernel,
        out_shape=jax.ShapeDtypeStruct((C_OUT, HW), x484.dtype),
        grid=(n_co,),
        in_specs=[
            pl.BlockSpec((1, C_IN),     lambda j: (0, 0)),   # x_se   (shared across blocks)
            pl.BlockSpec((C_IN, C_MID), lambda j: (0, 0)),   # w1_t   (shared)
            pl.BlockSpec((1, C_MID),    lambda j: (0, 0)),   # b1     (shared)
            pl.BlockSpec((C_MID, HW),   lambda j: (0, 0)),   # x_main (shared)
            pl.BlockSpec((TCO, C_MID),  lambda j: (j, 0)),   # w2 row block
        ],
        out_specs=pl.BlockSpec((TCO, HW), lambda j: (j, 0)),
        compiler_params=pltpu.CompilerParams(
            dimension_semantics=("parallel",)),              # 2 TCs on v7x; no-op on v5e/v6e
        cost_estimate=cost,
    )(x_se, w1_t, b1_r, x_main, w2)

    # back to NCHW — free reshape
    return out_flat.reshape(1, C_OUT, H, W)


def _reference(x487, x484, w1, b1, w2):
    """Pure f32 reference matching the PyTorch module."""
    s = x487.reshape(1, C_IN) @ w1.T + b1[None, :]             # (1, C_MID)
    gate = jax.nn.sigmoid(s)
    gated = x484.reshape(C_MID, HW) * gate.reshape(C_MID, 1)   # broadcast over the 49 positions
    out = w2 @ gated                                           # (C_OUT, HW)
    return out.reshape(1, C_OUT, H, W)


if __name__ == "__main__":
    key = jax.random.PRNGKey(0)
    k1, k2, k3, k4, k5 = jax.random.split(key, 5)

    # inputs (shapes implied by the module's forward)
    x484 = jax.random.normal(k1, (1, C_MID, H, W), dtype=jnp.float32)
    x487 = jax.random.normal(k2, (1, C_IN, 1, 1), dtype=jnp.float32)

    # deterministic parameter init (1x1 conv kernels squeezed to 2-D)
    w1 = jax.random.normal(k3, (C_MID, C_IN), dtype=jnp.float32) * 0.05    # conv2d156 weight
    b1 = jax.random.normal(k4, (C_MID,), dtype=jnp.float32) * 0.05         # conv2d156 bias
    w2 = jax.random.normal(k5, (C_OUT, C_MID), dtype=jnp.float32) * 0.02   # conv2d157 weight (no bias)

    params = prepare_params(w1, b1, w2)        # one-time prep: transpose/reshape/bf16 cast
    fwd = jax.jit(se_block)

    out = jax.block_until_ready(fwd(x487, x484, *params))

    ref = _reference(x487, x484, w1, b1, w2)
    assert out.shape == (1, C_OUT, H, W), out.shape
    # tolerance loosened vs the original 1e-4 because weights are streamed in bf16 (f32 accumulation)
    np.testing.assert_allclose(np.asarray(out), np.asarray(ref), rtol=2e-2, atol=2e-2)

    print("KERNEL_OK")
</pallas_src>

<mosaic_0001>
module attributes {stable_mosaic.version = 11 : i64} {
  func.func @_se_proj_kernel(%arg0: i32, %arg1: memref<1x76xf32, #tpu.memory_space<vmem>>, %arg2: memref<76x1824xbf16, #tpu.memory_space<vmem>>, %arg3: memref<1x1824xf32, #tpu.memory_space<vmem>>, %arg4: memref<1824x49xf32, #tpu.memory_space<vmem>>, %arg5: memref<160x1824xbf16, #tpu.memory_space<vmem>>, %arg6: memref<160x49xf32, #tpu.memory_space<vmem>>) attributes {dimension_semantics = [#tpu.dimension_semantics<parallel>], iteration_bounds = array<i64: 2>, scalar_prefetch = 0 : i64, scratch_operands = 0 : i64, tpu.core_type = #tpu.core_type<tc>, window_params = [{pipeline_mode = #tpu.pipeline_mode<synchronous>, transform_indices = @transform_0, window_bounds = array<i64: 1, 76>}, {pipeline_mode = #tpu.pipeline_mode<synchronous>, transform_indices = @transform_1, window_bounds = array<i64: 76, 1824>}, {pipeline_mode = #tpu.pipeline_mode<synchronous>, transform_indices = @transform_2, window_bounds = array<i64: 1, 1824>}, {pipeline_mode = #tpu.pipeline_mode<synchronous>, transform_indices = @transform_3, window_bounds = array<i64: 1824, 49>}, {transform_indices = @transform_4, window_bounds = array<i64: 160, 1824>}, {transform_indices = @transform_5, window_bounds = array<i64: 160, 49>}]} {
    %c0 = arith.constant 0 : index
    %c0_0 = arith.constant 0 : index
    %0 = vector.load %arg1[%c0, %c0_0] : memref<1x76xf32, #tpu.memory_space<vmem>>, vector<1x76xf32>
    %1 = arith.truncf %0 : vector<1x76xf32> to vector<1x76xbf16>
    %c0_1 = arith.constant 0 : index
    %c0_2 = arith.constant 0 : index
    %2 = vector.load %arg2[%c0_1, %c0_2] : memref<76x1824xbf16, #tpu.memory_space<vmem>>, vector<76x1824xbf16>
    %cst = arith.constant dense<0.000000e+00> : vector<1x1824xf32>
    %3 = tpu.matmul %1, %2, %cst {dimension_numbers = #tpu.dot_dimension_numbers<[1], [0], [0], [1], [0, 0, 1, 1], [], []>} : vector<1x76xbf16>, vector<76x1824xbf16>, vector<1x1824xf32> -> vector<1x1824xf32>
    %c0_3 = arith.constant 0 : index
    %c0_4 = arith.constant 0 : index
    %4 = vector.load %arg3[%c0_3, %c0_4] : memref<1x1824xf32, #tpu.memory_space<vmem>>, vector<1x1824xf32>
    %5 = arith.addf %3, %4 : vector<1x1824xf32>
    %6 = arith.negf %5 : vector<1x1824xf32>
    %7 = math.exp %6 : vector<1x1824xf32>
    %cst_5 = arith.constant 1.000000e+00 : f32
    %8 = vector.broadcast %cst_5 : f32 to vector<1x1824xf32>
    %9 = arith.addf %8, %7 : vector<1x1824xf32>
    %10 = arith.divf %8, %9 : vector<1x1824xf32>
    %c0_6 = arith.constant 0 : index
    %c0_7 = arith.constant 0 : index
    %11 = vector.load %arg5[%c0_6, %c0_7] : memref<160x1824xbf16, #tpu.memory_space<vmem>>, vector<160x1824xbf16>
    %12 = arith.extf %11 : vector<160x1824xbf16> to vector<160x1824xf32>
    %13 = vector.broadcast %10 : vector<1x1824xf32> to vector<160x1824xf32>
    %14 = arith.mulf %12, %13 : vector<160x1824xf32>
    %15 = arith.truncf %14 : vector<160x1824xf32> to vector<160x1824xbf16>
    %c0_8 = arith.constant 0 : index
    %c0_9 = arith.constant 0 : index
    %16 = vector.load %arg4[%c0_8, %c0_9] : memref<1824x49xf32, #tpu.memory_space<vmem>>, vector<1824x49xf32>
    %17 = arith.truncf %16 : vector<1824x49xf32> to vector<1824x49xbf16>
    %cst_10 = arith.constant dense<0.000000e+00> : vector<160x49xf32>
    %18 = tpu.matmul %15, %17, %cst_10 {dimension_numbers = #tpu.dot_dimension_numbers<[1], [0], [0], [1], [0, 0, 1, 1], [], []>} : vector<160x1824xbf16>, vector<1824x49xbf16>, vector<160x49xf32> -> vector<160x49xf32>
    %c0_11 = arith.constant 0 : index
    %c0_12 = arith.constant 0 : index
    %19 = vector.load %arg6[%c0_11, %c0_12] : memref<160x49xf32, #tpu.memory_space<vmem>>, vector<160x49xf32>
    tpu.vector_store %arg6[%c0_11, %c0_12], %18 {strides = array<i32>} : memref<160x49xf32, #tpu.memory_space<vmem>>, vector<160x49xf32>,
    return
  }
  func.func @transform_0(%arg0: i32) -> (i32, i32) {
    %c0_i32 = arith.constant 0 : i32
    %c0_i32_0 = arith.constant 0 : i32
    %c0_i32_1 = arith.constant 0 : i32
    return %c0_i32, %c0_i32_0 : i32, i32
  }
  func.func @transform_1(%arg0: i32) -> (i32, i32) {
    %c0_i32 = arith.constant 0 : i32
    %c0_i32_0 = arith.constant 0 : i32
    %c0_i32_1 = arith.constant 0 : i32
    return %c0_i32, %c0_i32_0 : i32, i32
  }
  func.func @transform_2(%arg0: i32) -> (i32, i32) {
    %c0_i32 = arith.constant 0 : i32
    %c0_i32_0 = arith.constant 0 : i32
    %c0_i32_1 = arith.constant 0 : i32
    return %c0_i32, %c0_i32_0 : i32, i32
  }
  func.func @transform_3(%arg0: i32) -> (i32, i32) {
    %c0_i32 = arith.constant 0 : i32
    %c0_i32_0 = arith.constant 0 : i32
    %c0_i32_1 = arith.constant 0 : i32
    return %c0_i32, %c0_i32_0 : i32, i32
  }
  func.func @transform_4(%arg0: i32) -> (i32, i32) {
    %c0_i32 = arith.constant 0 : i32
    %c0_i32_0 = arith.constant 0 : i32
    return %arg0, %c0_i32 : i32, i32
  }
  func.func @transform_5(%arg0: i32) -> (i32, i32) {
    %c0_i32 = arith.constant 0 : i32
    %c0_i32_0 = arith.constant 0 : i32
    return %arg0, %c0_i32 : i32, i32
  }
}

</mosaic_0001>

<llo_original>
// kernel: se_block.1
$region0: #{se_block.1}
  #allocation0 [shape = 'u32[]', space=smem, size = 0x4, offset = 0x4, fixed_abs, tag = 'smem constant byte address 0x4 - core index']
  #allocation1 [shape = 'u32[144,128]{1,0:T(1,128)}', space=vmem, size = 0x12000, scoped, tag = 'internal scratch']
  %s0 = inlined_call_operand.vmem [shape: f32[1,76], index: 0, kind: input, shape index: {}]
  %s1 = inlined_call_operand.vmem [shape: bf16[76,1824], index: 1, kind: input, shape index: {}]
  %s2 = inlined_call_operand.vmem [shape: f32[1,1824], index: 2, kind: input, shape index: {}]
  %s3 = inlined_call_operand.vmem [shape: f32[1824,49], index: 3, kind: input, shape index: {}]
  %s4 = inlined_call_operand.vmem [shape: bf16[304,1824], index: 4, kind: input, shape index: {}]
  %s5 = inlined_call_operand.vmem [shape: f32[304,49], index: 5, kind: output, shape index: {}]
  %s6 = sld [smem:[#allocation0]]
  $region101: #{se_block.1} parent=0
    _
  %s8 = ssub.s32 1, %s6
  %s9 = scalar_select 0, %s8, %s6
  $region1: #{se_block.1} parent=0
    #allocation2 [shape = 'u8[163840]{0}', space=vmem, size = 0x28000, scoped, tag = 'output window, operand 0']
    loop: start=0, step=1, limit=4
    $region2: #{se_block.1} parent=1 // loop_pre_header
      _
    $region3: #{se_block.1} parent=1 // loop_header
      %s11 = sphi 0, %s15
      %p12 = scmp.ge.s32.totalorder %s11, 4
      %s19 = sphi 0, %s19
      %s21 = sphi 0, %s19
      %s22 = sphi 0, %s21
      %s36 = sphi 0, %s22
      %s40 = sphi 0, %s40
      %s42 = sphi 0, %s40
      %s43 = sphi 0, %s42
      %s57 = sphi 0, %s43
      %s61 = sphi 0, %s61
      %s63 = sphi 0, %s61
      %s64 = sphi 0, %s63
      %s78 = sphi 0, %s64
      %s82 = sphi 0, %s82
      %s84 = sphi 0, %s82
      %s85 = sphi 0, %s84
      %s99 = sphi 0, %s85
      %s105 = sphi 0, %s107
      %s108 = sphi 0, %s105
      %s109 = sphi 0, %s108
      %s125 = sphi 0, %s109
      %s131 = sphi 0, %s133
      %s134 = sphi 0, %s131
      %s135 = sphi 0, %s134
      %s151 = sphi 0, %s135
    $region4: #{se_block.1} parent=1 // loop_header_branch
      %14 = sbr.rel (%p12) target = $region8
    $region5: #{se_block.1} parent=1 // loop_body
      %s16 = ssub.s32 %s11, 1
      %s17 = ssub.s32 %s11, 2
      %s18 = sadd.s32 %s11, 1
      %s20 = sadd.s32 %s19, 1
      %p23 = scmp.eq.s32.totalorder %s11, 1
      %p24 = scmp.ne.s32.totalorder %s19, %s21
      %p25 = scmp.eq.s32.totalorder %s11, 0
      %p26 = por %p24, %p25
      %p27 = scmp.ne.s32.totalorder %s19, %s21
      %p28 = scmp.eq.s32.totalorder %s16, 1
      %p29 = por %p27, %p28
      %p30 = scmp.ne.s32.totalorder %s21, %s22
      %p31 = scmp.eq.s32.totalorder %s16, 0
      %p32 = por %p30, %p31
      %p33 = scmp.ne.s32.totalorder %s21, %s22
      %p34 = scmp.eq.s32.totalorder %s17, 1
      %p35 = por %p33, %p34
      %p37 = scmp.ne.s32.totalorder %s22, %s36
      %p38 = scmp.eq.s32.totalorder %s17, 0
      %p39 = por %p37, %p38
      %s41 = sadd.s32 %s40, 1
      %p44 = scmp.eq.s32.totalorder %s11, 1
      %p45 = scmp.ne.s32.totalorder %s40, %s42
      %p46 = scmp.eq.s32.totalorder %s11, 0
      %p47 = por %p45, %p46
      %p48 = scmp.ne.s32.totalorder %s40, %s42
      %p49 = scmp.eq.s32.totalorder %s16, 1
      %p50 = por %p48, %p49
      %p51 = scmp.ne.s32.totalorder %s42, %s43
      %p52 = scmp.eq.s32.totalorder %s16, 0
      %p53 = por %p51, %p52
      %p54 = scmp.ne.s32.totalorder %s42, %s43
      %p55 = scmp.eq.s32.totalorder %s17, 1
      %p56 = por %p54, %p55
      %p58 = scmp.ne.s32.totalorder %s43, %s57
      %p59 = scmp.eq.s32.totalorder %s17, 0
      %p60 = por %p58, %p59
      %s62 = sadd.s32 %s61, 1
      %p65 = scmp.eq.s32.totalorder %s11, 1
      %p66 = scmp.ne.s32.totalorder %s61, %s63
      %p67 = scmp.eq.s32.totalorder %s11, 0
      %p68 = por %p66, %p67
      %p69 = scmp.ne.s32.totalorder %s61, %s63
      %p70 = scmp.eq.s32.totalorder %s16, 1
      %p71 = por %p69, %p70
      %p72 = scmp.ne.s32.totalorder %s63, %s64
      %p73 = scmp.eq.s32.totalorder %s16, 0
      %p74 = por %p72, %p73
      %p75 = scmp.ne.s32.totalorder %s63, %s64
      %p76 = scmp.eq.s32.totalorder %s17, 1
      %p77 = por %p75, %p76
      %p79 = scmp.ne.s32.totalorder %s64, %s78
      %p80 = scmp.eq.s32.totalorder %s17, 0
      %p81 = por %p79, %p80
      %s83 = sadd.s32 %s82, 1
      %p86 = scmp.eq.s32.totalorder %s11, 1
      %p87 = scmp.ne.s32.totalorder %s82, %s84
      %p88 = scmp.eq.s32.totalorder %s11, 0
      %p89 = por %p87, %p88
      %p90 = scmp.ne.s32.totalorder %s82, %s84
      %p91 = scmp.eq.s32.totalorder %s16, 1
      %p92 = por %p90, %p91
      %p93 = scmp.ne.s32.totalorder %s84, %s85
      %p94 = scmp.eq.s32.totalorder %s16, 0
      %p95 = por %p93, %p94
      %p96 = scmp.ne.s32.totalorder %s84, %s85
      %p97 = scmp.eq.s32.totalorder %s17, 1
      %p98 = por %p96, %p97
      %p100 = scmp.ne.s32.totalorder %s85, %s99
      %p101 = scmp.eq.s32.totalorder %s17, 0
      %p102 = por %p100, %p101
      %s103 = ssub.s32 %s11, %s18
      %p104 = scmp.eq.s32.totalorder %s103, 0
      %s106 = sadd.s32 %s105, 1
      %s107 = scalar_select %p104, %s105, %s106
      %p110 = pneg %p104
      %p111 = scmp.eq.s32.totalorder %s11, 1
      %p112 = por %p110, %p111
      %p113 = scmp.ne.s32.totalorder %s105, %s108
      %p114 = scmp.eq.s32.totalorder %s11, 0
      %p115 = por %p113, %p114
      %p116 = scmp.ne.s32.totalorder %s105, %s108
      %p117 = scmp.eq.s32.totalorder %s16, 1
      %p118 = por %p116, %p117
      %p119 = scmp.ne.s32.totalorder %s108, %s109
      %p120 = scmp.eq.s32.totalorder %s16, 0
      %p121 = por %p119, %p120
      %p122 = scmp.ne.s32.totalorder %s108, %s109
      %p123 = scmp.eq.s32.totalorder %s17, 1
      %p124 = por %p122, %p123
      %p126 = scmp.ne.s32.totalorder %s109, %s125
      %p127 = scmp.eq.s32.totalorder %s17, 0
      %p128 = por %p126, %p127
      %s129 = ssub.s32 %s11, %s18
      %p130 = scmp.eq.s32.totalorder %s129, 0
      %s132 = sadd.s32 %s131, 1
      %s133 = scalar_select %p130, %s131, %s132
      %p136 = pneg %p130
      %p137 = scmp.eq.s32.totalorder %s11, 1
      %p138 = por %p136, %p137
      %p139 = scmp.ne.s32.totalorder %s131, %s134
      %p140 = scmp.eq.s32.totalorder %s11, 0
      %p141 = por %p139, %p140
      %p142 = scmp.ne.s32.totalorder %s131, %s134
      %p143 = scmp.eq.s32.totalorder %s16, 1
      %p144 = por %p142, %p143
      %p145 = scmp.ne.s32.totalorder %s134, %s135
      %p146 = scmp.eq.s32.totalorder %s16, 0
      %p147 = por %p145, %p146
      %p148 = scmp.ne.s32.totalorder %s134, %s135
      %p149 = scmp.eq.s32.totalorder %s17, 1
      %p150 = por %p148, %p149
      %p152 = scmp.ne.s32.totalorder %s135, %s151
      %p153 = scmp.eq.s32.totalorder %s17, 0
      %p154 = por %p152, %p153
      %p155 = scmp.le.s32.totalorder 1, %s11
      %p156 = scmp.lt.s32.totalorder %s11, 3
      %p157 = pnand %p155, %p156
      %p158 = pneg %p157
      // Predicated region
      $region9: #{se_block.1} parent=5 // pred_check
        _
      $region10: #{se_block.1} parent=5 // pred_check_branch
        %160 = sbr.rel (%p157) target = $region12
      $region11: #{se_block.1} parent=5 // pred_region
        %s161 = ssub.s32 %s11, 1
        // Predicated region
        $region13: #{se_block.1} parent=11 // pred_check
          %p162 = pneg %p32
        $region14: #{se_block.1} parent=11 // pred_check_branch
          %164 = sbr.rel (%p162) target = $region16
        $region15: #{se_block.1} parent=11 // pred_region
          _
        $region16: #{se_block.1} parent=11 // pred_fallthru
          _
        // Predicated region
        $region17: #{se_block.1} parent=11 // pred_check
          %p165 = pneg %p53
        $region18: #{se_block.1} parent=11 // pred_check_branch
          %167 = sbr.rel (%p165) target = $region20
        $region19: #{se_block.1} parent=11 // pred_region
          _
        $region20: #{se_block.1} parent=11 // pred_fallthru
          _
        // Predicated region
        $region21: #{se_block.1} parent=11 // pred_check
          %p168 = pneg %p74
        $region22: #{se_block.1} parent=11 // pred_check_branch
          %170 = sbr.rel (%p168) target = $region24
        $region23: #{se_block.1} parent=11 // pred_region
          _
        $region24: #{se_block.1} parent=11 // pred_fallthru
          _
        // Predicated region
        $region25: #{se_block.1} parent=11 // pred_check
          %p171 = pneg %p95
        $region26: #{se_block.1} parent=11 // pred_check_branch
          %173 = sbr.rel (%p171) target = $region28
        $region27: #{se_block.1} parent=11 // pred_region
          _
        $region28: #{se_block.1} parent=11 // pred_fallthru
          _
      $region12: #{se_block.1} parent=5 // pred_fallthru
        _
      %p174 = scmp.lt.s32.totalorder %s11, 2
      // Predicated region
      $region29: #{se_block.1} parent=5 // pred_check
        %p175 = pneg %p174
      $region30: #{se_block.1} parent=5 // pred_check_branch
        %177 = sbr.rel (%p175) target = $region32
      $region31: #{se_block.1} parent=5 // pred_region
        // Predicated region
        $region33: #{se_block.1} parent=31 // pred_check
          %p178 = pneg %p115
        $region34: #{se_block.1} parent=31 // pred_check_branch
          %180 = sbr.rel (%p178) target = $region36
        $region35: #{se_block.1} parent=31 // pred_region
          %s181 = smul.u32 20, %s11
          %s182 = ssub.s32 38, %s181
          %p183 = scmp.lt.s32.totalorder %s182, 20
          %s184 = scalar_select %p183, %s182, 20
          %s185 = smul.u32 64, %s184
          %s186 = smul.u32 %s185, 15
          %p187 = scmp.lt.s32.totalorder %s181, 37
          %s188 = scalar_select %p187, %s181, 37
          %s189 = smul.addr %s188, 15
          %s190 = smul.addr %s189, 4
          %s191 = scalar_lea.vmem %s4, %s190
          %s192 = smul.u32 20, %s11
          %s193 = ssub.s32 38, %s192
          %p194 = scmp.lt.s32.totalorder %s193, 20
          %s195 = scalar_select %p194, %s193, 20
          %s196 = smul.u32 64, %s195
          %s197 = smul.u32 %s196, 15
        $region36: #{se_block.1} parent=31 // pred_fallthru
          _
      $region32: #{se_block.1} parent=5 // pred_fallthru
        _
      %p198 = scmp.le.s32.totalorder 1, %s11
      %p199 = scmp.lt.s32.totalorder %s11, 3
      %p200 = pnand %p198, %p199
      %p201 = pneg %p200
      // Predicated region
      $region37: #{se_block.1} parent=5 // pred_check
        _
      $region38: #{se_block.1} parent=5 // pred_check_branch
        %203 = sbr.rel (%p200) target = $region40
      $region39: #{se_block.1} parent=5 // pred_region
        %s204 = ssub.s32 %s11, 1
        %p205 = pneg %p32
        %p206 = pneg %p29
        %p207 = pneg %p53
        %p208 = pneg %p50
        %p209 = pneg %p74
        %p210 = pneg %p71
        %p211 = pneg %p95
        %p212 = pneg %p92
        %s213 = smul.u32 20, %s16
        %s214 = ssub.s32 38, %s213
        %p215 = scmp.lt.s32.totalorder %s214, 20
        %s216 = scalar_select %p215, %s214, 20
        %s217 = smul.u32 64, %s216
        %s218 = smul.u32 %s217, 15
        %p219 = scmp.lt.s32.totalorder %s213, 37
        %s220 = scalar_select %p219, %s213, 37
        %s221 = smul.addr %s220, 15
        %s222 = smul.addr %s221, 4
        %s223 = scalar_lea.vmem %s4, %s222
        %p224 = pneg %p121
        %p225 = pneg %p118
        %p226 = pneg %p147
        %p227 = pneg %p144
        %s228 = sand.u32 %s134, 1
        %s229 = sand.u32 %s134, 1
        %s230 = smul.addr %s229, 160
        %s231 = scalar_lea.vmem [#allocation2], %s230
        %s232 = smul.u32 20, %s16
        %s233 = ssub.s32 38, %s232
        %p234 = scmp.lt.s32.totalorder %s233, 20
        %s235 = scalar_select %p234, %s233, 20
        %s236 = smul.u32 64, %s235
        %s237 = smul.u32 %s236, 15
        %p238 = scmp.lt.s32.totalorder %s232, 37
        %s239 = scalar_select %p238, %s232, 37
        %s240 = smul.addr %s239, 15
        %s241 = smul.addr %s240, 4
        %s242 = scalar_lea.vmem %s4, %s241
        %s243 = smul.u32 20, %s16
        %s244 = ssub.s32 38, %s243
        %p245 = scmp.lt.s32.totalorder %s244, 20
        %s246 = scalar_select %p245, %s244, 20
        %s247 = smul.u32 64, %s246
        %s248 = smul.u32 %s247, 15
        %s249 = smul.u32 20, %s16
        %s250 = ssub.s32 38, %s249
        %p251 = scmp.lt.s32.totalorder %s250, 20
        %s252 = scalar_select %p251, %s250, 20
        %s253 = smul.u32 128, %s252
        %v255 = vld [vmem:[%s0] sm:$0x1]
        %v256 = vpack.c.bf16 %v255, %v255
        %v257 = vld [vmem:[%s1] sm:$0xff]
        %v258 = vld [vmem:[%s1 + $0x8] sm:$0xff]
        %v259 = vld [vmem:[%s1 + $0x10] sm:$0xff]
        %v260 = vld [vmem:[%s1 + $0x18] sm:$0xff]
        %v261 = vld [vmem:[%s1 + $0x20] sm:$0xff]
        %v262 = vld [vmem:[%s1 + $0x28] sm:$0xff]
        %v263 = vld [vmem:[%s1 + $0x30] sm:$0xff]
        %v264 = vld [vmem:[%s1 + $0x38] sm:$0xf]
        %v265 = vld [vmem:[%s1 + $0x3c] sm:$0xff]
        %v266 = vld [vmem:[%s1 + $0x44] sm:$0xff]
        %v267 = vld [vmem:[%s1 + $0x4c] sm:$0xff]
        %v268 = vld [vmem:[%s1 + $0x54] sm:$0xff]
        %v269 = vld [vmem:[%s1 + $0x5c] sm:$0xff]
        %v270 = vld [vmem:[%s1 + $0x64] sm:$0xff]
        %v271 = vld [vmem:[%s1 + $0x6c] sm:$0xff]
        %v272 = vld [vmem:[%s1 + $0x74] sm:$0xf]
        %v273 = vld [vmem:[%s1 + $0x78] sm:$0xff]
        %v274 = vld [vmem:[%s1 + $0x80] sm:$0xff]
        %v275 = vld [vmem:[%s1 + $0x88] sm:$0xff]
        %v276 = vld [vmem:[%s1 + $0x90] sm:$0xff]
        %v277 = vld [vmem:[%s1 + $0x98] sm:$0xff]
        %v278 = vld [vmem:[%s1 + $0xa0] sm:$0xff]
        %v279 = vld [vmem:[%s1 + $0xa8] sm:$0xff]
        %v280 = vld [vmem:[%s1 + $0xb0] sm:$0xf]
        %v281 = vld [vmem:[%s1 + $0xb4] sm:$0xff]
        %v282 = vld [vmem:[%s1 + $0xbc] sm:$0xff]
        %v283 = vld [vmem:[%s1 + $0xc4] sm:$0xff]
        %v284 = vld [vmem:[%s1 + $0xcc] sm:$0xff]
        %v285 = vld [vmem:[%s1 + $0xd4] sm:$0xff]
        %v286 = vld [vmem:[%s1 + $0xdc] sm:$0xff]
        %v287 = vld [vmem:[%s1 + $0xe4] sm:$0xff]
        %v288 = vld [vmem:[%s1 + $0xec] sm:$0xf]
        %v289 = vld [vmem:[%s1 + $0xf0] sm:$0xff]
        %v290 = vld [vmem:[%s1 + $0xf8] sm:$0xff]
        %v291 = vld [vmem:[%s1 + $0x100] sm:$0xff]
        %v292 = vld [vmem:[%s1 + $0x108] sm:$0xff]
        %v293 = vld [vmem:[%s1 + $0x110] sm:$0xff]
        %v294 = vld [vmem:[%s1 + $0x118] sm:$0xff]
        %v295 = vld [vmem:[%s1 + $0x120] sm:$0xff]
        %v296 = vld [vmem:[%s1 + $0x128] sm:$0xf]
        %v297 = vld [vmem:[%s1 + $0x12c] sm:$0xff]
        %v298 = vld [vmem:[%s1 + $0x134] sm:$0xff]
        %v299 = vld [vmem:[%s1 + $0x13c] sm:$0xff]
        %v300 = vld [vmem:[%s1 + $0x144] sm:$0xff]
        %v301 = vld [vmem:[%s1 + $0x14c] sm:$0xff]
        %v302 = vld [vmem:[%s1 + $0x154] sm:$0xff]
        %v303 = vld [vmem:[%s1 + $0x15c] sm:$0xff]
        %v304 = vld [vmem:[%s1 + $0x164] sm:$0xf]
        %v305 = vld [vmem:[%s1 + $0x168] sm:$0xff]
        %v306 = vld [vmem:[%s1 + $0x170] sm:$0xff]
        %v307 = vld [vmem:[%s1 + $0x178] sm:$0xff]
        %v308 = vld [vmem:[%s1 + $0x180] sm:$0xff]
        %v309 = vld [vmem:[%s1 + $0x188] sm:$0xff]
        %v310 = vld [vmem:[%s1 + $0x190] sm:$0xff]
        %v311 = vld [vmem:[%s1 + $0x198] sm:$0xff]
        %v312 = vld [vmem:[%s1 + $0x1a0] sm:$0xf]
        %v313 = vld [vmem:[%s1 + $0x1a4] sm:$0xff]
        %v314 = vld [vmem:[%s1 + $0x1ac] sm:$0xff]
        %v315 = vld [vmem:[%s1 + $0x1b4] sm:$0xff]
        %v316 = vld [vmem:[%s1 + $0x1bc] sm:$0xff]
        %v317 = vld [vmem:[%s1 + $0x1c4] sm:$0xff]
        %v318 = vld [vmem:[%s1 + $0x1cc] sm:$0xff]
        %v319 = vld [vmem:[%s1 + $0x1d4] sm:$0xff]
        %v320 = vld [vmem:[%s1 + $0x1dc] sm:$0xf]
        %v321 = vld [vmem:[%s1 + $0x1e0] sm:$0xff]
        %v322 = vld [vmem:[%s1 + $0x1e8] sm:$0xff]
        %v323 = vld [vmem:[%s1 + $0x1f0] sm:$0xff]
        %v324 = vld [vmem:[%s1 + $0x1f8] sm:$0xff]
        %v325 = vld [vmem:[%s1 + $0x200] sm:$0xff]
        %v326 = vld [vmem:[%s1 + $0x208] sm:$0xff]
        %v327 = vld [vmem:[%s1 + $0x210] sm:$0xff]
        %v328 = vld [vmem:[%s1 + $0x218] sm:$0xf]
        %v329 = vld [vmem:[%s1 + $0x21c] sm:$0x33]
        %v330 = vld [vmem:[%s1 + $0x224] sm:$0x33]
        %v331 = vld [vmem:[%s1 + $0x22c] sm:$0x33]
        %v332 = vld [vmem:[%s1 + $0x234] sm:$0x33]
        %v333 = vld [vmem:[%s1 + $0x23c] sm:$0x33]
        %v334 = vld [vmem:[%s1 + $0x244] sm:$0x33]
        %v335 = vld [vmem:[%s1 + $0x24c] sm:$0x33]
        %v336 = vld [vmem:[%s1 + $0x254] sm:$0x3]
        %v337 = vld [vmem:[%s2] sm:$0xff]
        %v338 = vld [vmem:[%s2 + $0x8] sm:$0x7f]
        %v419 = vunpack.c.l.b16 %v257
        %v420 = vunpack.c.h.b16 %v257
        %v421 = vunpack.c.l.b16 %v258
        %v422 = vunpack.c.h.b16 %v258
        %v423 = vunpack.c.l.b16 %v259
        %v424 = vunpack.c.h.b16 %v259
        %v425 = vunpack.c.l.b16 %v260
        %v426 = vunpack.c.h.b16 %v260
        %v427 = vunpack.c.l.b16 %v261
        %v428 = vunpack.c.h.b16 %v261
        %v429 = vunpack.c.l.b16 %v262
        %v430 = vunpack.c.h.b16 %v262
        %v431 = vunpack.c.l.b16 %v263
        %v432 = vunpack.c.h.b16 %v263
        %v433 = vunpack.c.l.b16 %v264
        %v434 = vunpack.c.l.b16 %v265
        %v435 = vunpack.c.h.b16 %v265
        %v436 = vunpack.c.l.b16 %v266
        %v437 = vunpack.c.h.b16 %v266
        %v438 = vunpack.c.l.b16 %v267
        %v439 = vunpack.c.h.b16 %v267
        %v440 = vunpack.c.l.b16 %v268
        %v441 = vunpack.c.h.b16 %v268
        %v442 = vunpack.c.l.b16 %v269
        %v443 = vunpack.c.h.b16 %v269
        %v444 = vunpack.c.l.b16 %v270
        %v445 = vunpack.c.h.b16 %v270
        %v446 = vunpack.c.l.b16 %v271
        %v447 = vunpack.c.h.b16 %v271
        %v448 = vunpack.c.l.b16 %v272
        %v449 = vunpack.c.l.b16 %v273
        %v450 = vunpack.c.h.b16 %v273
        %v451 = vunpack.c.l.b16 %v274
        %v452 = vunpack.c.h.b16 %v274
        %v453 = vunpack.c.l.b16 %v275
        %v454 = vunpack.c.h.b16 %v275
        %v455 = vunpack.c.l.b16 %v276
        %v456 = vunpack.c.h.b16 %v276
        %v457 = vunpack.c.l.b16 %v277
        %v458 = vunpack.c.h.b16 %v277
        %v459 = vunpack.c.l.b16 %v278
        %v460 = vunpack.c.h.b16 %v278
        %v461 = vunpack.c.l.b16 %v279
        %v462 = vunpack.c.h.b16 %v279
        %v463 = vunpack.c.l.b16 %v280
        %v464 = vunpack.c.l.b16 %v281
        %v465 = vunpack.c.h.b16 %v281
        %v466 = vunpack.c.l.b16 %v282
        %v467 = vunpack.c.h.b16 %v282
        %v468 = vunpack.c.l.b16 %v283
        %v469 = vunpack.c.h.b16 %v283
        %v470 = vunpack.c.l.b16 %v284
        %v471 = vunpack.c.h.b16 %v284
        %v472 = vunpack.c.l.b16 %v285
        %v473 = vunpack.c.h.b16 %v285
        %v474 = vunpack.c.l.b16 %v286
        %v475 = vunpack.c.h.b16 %v286
        %v476 = vunpack.c.l.b16 %v287
        %v477 = vunpack.c.h.b16 %v287
        %v478 = vunpack.c.l.b16 %v288
        %v479 = vunpack.c.l.b16 %v289
        %v480 = vunpack.c.h.b16 %v289
        %v481 = vunpack.c.l.b16 %v290
        %v482 = vunpack.c.h.b16 %v290
        %v483 = vunpack.c.l.b16 %v291
        %v484 = vunpack.c.h.b16 %v291
        %v485 = vunpack.c.l.b16 %v292
        %v486 = vunpack.c.h.b16 %v292
        %v487 = vunpack.c.l.b16 %v293
        %v488 = vunpack.c.h.b16 %v293
        %v489 = vunpack.c.l.b16 %v294
        %v490 = vunpack.c.h.b16 %v294
        %v491 = vunpack.c.l.b16 %v295
        %v492 = vunpack.c.h.b16 %v295
        %v493 = vunpack.c.l.b16 %v296
        %v494 = vunpack.c.l.b16 %v297
        %v495 = vunpack.c.h.b16 %v297
        %v496 = vunpack.c.l.b16 %v298
        %v497 = vunpack.c.h.b16 %v298
        %v498 = vunpack.c.l.b16 %v299
        %v499 = vunpack.c.h.b16 %v299
        %v500 = vunpack.c.l.b16 %v300
        %v501 = vunpack.c.h.b16 %v300
        %v502 = vunpack.c.l.b16 %v301
        %v503 = vunpack.c.h.b16 %v301
        %v504 = vunpack.c.l.b16 %v302
        %v505 = vunpack.c.h.b16 %v302
        %v506 = vunpack.c.l.b16 %v303
        %v507 = vunpack.c.h.b16 %v303
        %v508 = vunpack.c.l.b16 %v304
        %v509 = vunpack.c.l.b16 %v305
        %v510 = vunpack.c.h.b16 %v305
        %v511 = vunpack.c.l.b16 %v306
        %v512 = vunpack.c.h.b16 %v306
        %v513 = vunpack.c.l.b16 %v307
        %v514 = vunpack.c.h.b16 %v307
        %v515 = vunpack.c.l.b16 %v308
        %v516 = vunpack.c.h.b16 %v308
        %v517 = vunpack.c.l.b16 %v309
        %v518 = vunpack.c.h.b16 %v309
        %v519 = vunpack.c.l.b16 %v310
        %v520 = vunpack.c.h.b16 %v310
        %v521 = vunpack.c.l.b16 %v311
        %v522 = vunpack.c.h.b16 %v311
        %v523 = vunpack.c.l.b16 %v312
        %v524 = vunpack.c.l.b16 %v313
        %v525 = vunpack.c.h.b16 %v313
        %v526 = vunpack.c.l.b16 %v314
        %v527 = vunpack.c.h.b16 %v314
        %v528 = vunpack.c.l.b16 %v315
        %v529 = vunpack.c.h.b16 %v315
        %v530 = vunpack.c.l.b16 %v316
        %v531 = vunpack.c.h.b16 %v316
        %v532 = vunpack.c.l.b16 %v317
        %v533 = vunpack.c.h.b16 %v317
        %v534 = vunpack.c.l.b16 %v318
        %v535 = vunpack.c.h.b16 %v318
        %v536 = vunpack.c.l.b16 %v319
        %v537 = vunpack.c.h.b16 %v319
        %v538 = vunpack.c.l.b16 %v320
        %v539 = vunpack.c.l.b16 %v321
        %v540 = vunpack.c.h.b16 %v321
        %v541 = vunpack.c.l.b16 %v322
        %v542 = vunpack.c.h.b16 %v322
        %v543 = vunpack.c.l.b16 %v323
        %v544 = vunpack.c.h.b16 %v323
        %v545 = vunpack.c.l.b16 %v324
        %v546 = vunpack.c.h.b16 %v324
        %v547 = vunpack.c.l.b16 %v325
        %v548 = vunpack.c.h.b16 %v325
        %v549 = vunpack.c.l.b16 %v326
        %v550 = vunpack.c.h.b16 %v326
        %v551 = vunpack.c.l.b16 %v327
        %v552 = vunpack.c.h.b16 %v327
        %v553 = vunpack.c.l.b16 %v328
        %v554 = vunpack.c.l.b16 %v329
        %v555 = vunpack.c.h.b16 %v329
        %v556 = vunpack.c.l.b16 %v330
        %v557 = vunpack.c.h.b16 %v330
        %v558 = vunpack.c.l.b16 %v331
        %v559 = vunpack.c.h.b16 %v331
        %v560 = vunpack.c.l.b16 %v332
        %v561 = vunpack.c.h.b16 %v332
        %v562 = vunpack.c.l.b16 %v333
        %v563 = vunpack.c.h.b16 %v333
        %v564 = vunpack.c.l.b16 %v334
        %v565 = vunpack.c.h.b16 %v334
        %v566 = vunpack.c.l.b16 %v335
        %v567 = vunpack.c.h.b16 %v335
        %v568 = vunpack.c.l.b16 %v336
        %v569 = vpack.c.b16 %v434, %v419
        %v570 = vpack.c.b16 %v435, %v420
        %v571 = vpack.c.b16 %v436, %v421
        %v572 = vpack.c.b16 %v437, %v422
        %v573 = vpack.c.b16 %v438, %v423
        %v574 = vpack.c.b16 %v439, %v424
        %v575 = vpack.c.b16 %v440, %v425
        %v576 = vpack.c.b16 %v441, %v426
        %v577 = vpack.c.b16 %v442, %v427
        %v578 = vpack.c.b16 %v443, %v428
        %v579 = vpack.c.b16 %v444, %v429
        %v580 = vpack.c.b16 %v445, %v430
        %v581 = vpack.c.b16 %v446, %v431
        %v582 = vpack.c.b16 %v447, %v432
        %v583 = vpack.c.b16 %v448, %v433
        %v584 = vpack.c.b16 %v464, %v449
        %v585 = vpack.c.b16 %v465, %v450
        %v586 = vpack.c.b16 %v466, %v451
        %v587 = vpack.c.b16 %v467, %v452
        %v588 = vpack.c.b16 %v468, %v453
        %v589 = vpack.c.b16 %v469, %v454
        %v590 = vpack.c.b16 %v470, %v455
        %v591 = vpack.c.b16 %v471, %v456
        %v592 = vpack.c.b16 %v472, %v457
        %v593 = vpack.c.b16 %v473, %v458
        %v594 = vpack.c.b16 %v474, %v459
        %v595 = vpack.c.b16 %v475, %v460
        %v596 = vpack.c.b16 %v476, %v461
        %v597 = vpack.c.b16 %v477, %v462
        %v598 = vpack.c.b16 %v478, %v463
        %v599 = vpack.c.b16 %v494, %v479
        %v600 = vpack.c.b16 %v495, %v480
        %v601 = vpack.c.b16 %v496, %v481
        %v602 = vpack.c.b16 %v497, %v482
        %v603 = vpack.c.b16 %v498, %v483
        %v604 = vpack.c.b16 %v499, %v484
        %v605 = vpack.c.b16 %v500, %v485
        %v606 = vpack.c.b16 %v501, %v486
        %v607 = vpack.c.b16 %v502, %v487
        %v608 = vpack.c.b16 %v503, %v488
        %v609 = vpack.c.b16 %v504, %v489
        %v610 = vpack.c.b16 %v505, %v490
        %v611 = vpack.c.b16 %v506, %v491
        %v612 = vpack.c.b16 %v507, %v492
        %v613 = vpack.c.b16 %v508, %v493
        %v614 = vpack.c.b16 %v524, %v509
        %v615 = vpack.c.b16 %v525, %v510
        %v616 = vpack.c.b16 %v526, %v511
        %v617 = vpack.c.b16 %v527, %v512
        %v618 = vpack.c.b16 %v528, %v513
        %v619 = vpack.c.b16 %v529, %v514
        %v620 = vpack.c.b16 %v530, %v515
        %v621 = vpack.c.b16 %v531, %v516
        %v622 = vpack.c.b16 %v532, %v517
        %v623 = vpack.c.b16 %v533, %v518
        %v624 = vpack.c.b16 %v534, %v519
        %v625 = vpack.c.b16 %v535, %v520
        %v626 = vpack.c.b16 %v536, %v521
        %v627 = vpack.c.b16 %v537, %v522
        %v628 = vpack.c.b16 %v538, %v523
        %v629 = vpack.c.b16 %v554, %v539
        %v630 = vpack.c.b16 %v555, %v540
        %v631 = vpack.c.b16 %v556, %v541
        %v632 = vpack.c.b16 %v557, %v542
        %v633 = vpack.c.b16 %v558, %v543
        %v634 = vpack.c.b16 %v559, %v544
        %v635 = vpack.c.b16 %v560, %v545
        %v636 = vpack.c.b16 %v561, %v546
        %v637 = vpack.c.b16 %v562, %v547
        %v638 = vpack.c.b16 %v563, %v548
        %v639 = vpack.c.b16 %v564, %v549
        %v640 = vpack.c.b16 %v565, %v550
        %v641 = vpack.c.b16 %v566, %v551
        %v642 = vpack.c.b16 %v567, %v552
        %v643 = vpack.c.b16 %v568, %v553
        %v706 = vlaneseq
        %v707 = vshrl.u32 %v706, 7
        %v708 = vsub.s32 0, %v707
        %v709 = vrot.slane %v337, %v708
        %v710 = vlaneseq
        %v711 = vshrl.u32 %v710, 7
        %v712 = vsub.s32 1, %v711
        %v713 = vrot.slane %v337, %v712
        %v714 = vlaneseq
        %v715 = vshrl.u32 %v714, 7
        %v716 = vsub.s32 2, %v715
        %v717 = vrot.slane %v337, %v716
        %v718 = vlaneseq
        %v719 = vshrl.u32 %v718, 7
        %v720 = vsub.s32 3, %v719
        %v721 = vrot.slane %v337, %v720
        %v722 = vlaneseq
        %v723 = vshrl.u32 %v722, 7
        %v724 = vsub.s32 4, %v723
        %v725 = vrot.slane %v337, %v724
        %v726 = vlaneseq
        %v727 = vshrl.u32 %v726, 7
        %v728 = vsub.s32 5, %v727
        %v729 = vrot.slane %v337, %v728
        %v730 = vlaneseq
        %v731 = vshrl.u32 %v730, 7
        %v732 = vsub.s32 6, %v731
        %v733 = vrot.slane %v337, %v732
        %v734 = vlaneseq
        %v735 = vshrl.u32 %v734, 7
        %v736 = vsub.s32 7, %v735
        %v737 = vrot.slane %v337, %v736
        %v738 = vlaneseq
        %v739 = vshrl.u32 %v738, 7
        %v740 = vsub.s32 0, %v739
        %v741 = vrot.slane %v338, %v740
        %v742 = vlaneseq
        %v743 = vshrl.u32 %v742, 7
        %v744 = vsub.s32 1, %v743
        %v745 = vrot.slane %v338, %v744
        %v746 = vlaneseq
        %v747 = vshrl.u32 %v746, 7
        %v748 = vsub.s32 2, %v747
        %v749 = vrot.slane %v338, %v748
        %v750 = vlaneseq
        %v751 = vshrl.u32 %v750, 7
        %v752 = vsub.s32 3, %v751
        %v753 = vrot.slane %v338, %v752
        %v754 = vlaneseq
        %v755 = vshrl.u32 %v754, 7
        %v756 = vsub.s32 4, %v755
        %v757 = vrot.slane %v338, %v756
        %v758 = vlaneseq
        %v759 = vshrl.u32 %v758, 7
        %v760 = vsub.s32 5, %v759
        %v761 = vrot.slane %v338, %v760
        %v762 = vlaneseq
        %v763 = vshrl.u32 %v762, 7
        %v764 = vsub.s32 6, %v763
        %v765 = vrot.slane %v338, %v764
        %vm781 = vcmask 621568
        %v783 = vsel %vm781, %v256, 0
        %vm785 = vcmask 1045504
        %v787 = vsel %vm785, %v629, 0
        %v790 = vsel %vm785, %v630, 0
        %v793 = vsel %vm785, %v631, 0
        %v796 = vsel %vm785, %v632, 0
        %v799 = vsel %vm785, %v633, 0
        %v802 = vsel %vm785, %v634, 0
        %v805 = vsel %vm785, %v635, 0
        %v808 = vsel %vm785, %v636, 0
        %v811 = vsel %vm785, %v637, 0
        %v814 = vsel %vm785, %v638, 0
        %v817 = vsel %vm785, %v639, 0
        %v820 = vsel %vm785, %v640, 0
        %v823 = vsel %vm785, %v641, 0
        %v826 = vsel %vm785, %v642, 0
        %v829 = vsel %vm785, %v643, 0
        %831 = vmatprep.subr.bf16.mxu0 0
        %832 = vmatpush1.bf16.msra.mxu0 0
        %833 = vmatprep.subr.bf16.mxu0 0
        %834 = vmatpush1.bf16.msra.mxu0 0
        %835 = vmatprep.subr.bf16.mxu0 0
        %836 = vmatpush1.bf16.msra.mxu0 0
        %837 = vmatprep.subr.bf16.mxu0 %v790
        %838 = vmatpush1.bf16.msra.mxu0 %v787
        %839 = vmatprep.subr.bf16.mxu0 %v615
        %840 = vmatpush1.bf16.msra.mxu0 %v614
        %841 = vmatprep.subr.bf16.mxu0 %v600
        %842 = vmatpush1.bf16.msra.mxu0 %v599
        %843 = vmatprep.subr.bf16.mxu0 %v585
        %844 = vmatpush1.bf16.msra.mxu0 %v584
        %845 = vmatprep.subr.bf16.mxu0 %v570
        %846 = vmatpush1.bf16.msra.mxu0 %v569
        %847 = vmatprep.subr.bf16.mxu0 0
        %848 = vmatpush2.bf16.msra.mxu0 0
        %849 = vmatprep.subr.bf16.mxu0 0
        %850 = vmatpush2.bf16.msra.mxu0 0
        %851 = vmatprep.subr.bf16.mxu0 0
        %852 = vmatpush2.bf16.msra.mxu0 0
        %853 = vmatprep.subr.bf16.mxu0 0
        %854 = vmatpush2.bf16.msra.mxu0 0
        %855 = vmatprep.subr.bf16.mxu0 0
        %856 = vmatpush2.bf16.msra.mxu0 0
        %857 = vmatprep.subr.bf16.mxu0 0
        %858 = vmatpush2.bf16.msra.mxu0 0
        %859 = vmatprep.subr.bf16.mxu0 0
        %860 = vmatpush2.bf16.msra.mxu0 0
        %861 = vmatprep.subr.bf16.mxu0 0
        %862 = vmatpush2.bf16.msra.mxu0 0
        %863 = vmatprep.mubr.bf16.mxu0 0
        %864 = vmatmul.mubr.bf16.gmra.mxu0 %v783
        %v865 = vpop.f32.mrf.mxu0
        %v866 = vadd.f32 %v709, %v865
        %v867 = vpop.f32.mrf.mxu0
        %v868 = vadd.f32 %v713, %v867
        %v869 = vpop.f32.mrf.mxu0
        %v870 = vpop.f32.mrf.mxu0
        %871 = vdwg.mxu0
        %872 = vmatprep.subr.bf16.mxu0 0
        %873 = vmatpush1.bf16.msra.mxu0 0
        %874 = vmatprep.subr.bf16.mxu0 0
        %875 = vmatpush1.bf16.msra.mxu0 0
        %876 = vmatprep.subr.bf16.mxu0 0
        %877 = vmatpush1.bf16.msra.mxu0 0
        %878 = vmatprep.subr.bf16.mxu0 %v796
        %879 = vmatpush1.bf16.msra.mxu0 %v793
        %880 = vmatprep.subr.bf16.mxu0 %v617
        %881 = vmatpush1.bf16.msra.mxu0 %v616
        %882 = vmatprep.subr.bf16.mxu0 %v602
        %883 = vmatpush1.bf16.msra.mxu0 %v601
        %884 = vmatprep.subr.bf16.mxu0 %v587
        %885 = vmatpush1.bf16.msra.mxu0 %v586
        %886 = vmatprep.subr.bf16.mxu0 %v572
        %887 = vmatpush1.bf16.msra.mxu0 %v571
        %888 = vmatprep.subr.bf16.mxu0 0
        %889 = vmatpush2.bf16.msra.mxu0 0
        %890 = vmatprep.subr.bf16.mxu0 0
        %891 = vmatpush2.bf16.msra.mxu0 0
        %892 = vmatprep.subr.bf16.mxu0 0
        %893 = vmatpush2.bf16.msra.mxu0 0
        %894 = vmatprep.subr.bf16.mxu0 0
        %895 = vmatpush2.bf16.msra.mxu0 0
        %896 = vmatprep.subr.bf16.mxu0 0
        %897 = vmatpush2.bf16.msra.mxu0 0
        %898 = vmatprep.subr.bf16.mxu0 0
        %899 = vmatpush2.bf16.msra.mxu0 0
        %900 = vmatprep.subr.bf16.mxu0 0
        %901 = vmatpush2.bf16.msra.mxu0 0
        %902 = vmatprep.subr.bf16.mxu0 0
        %903 = vmatpush2.bf16.msra.mxu0 0
        %904 = vmatprep.mubr.bf16.mxu0 0
        %905 = vmatmul.mubr.bf16.gmra.mxu0 %v783
        %v906 = vpop.f32.mrf.mxu0
        %v907 = vadd.f32 %v717, %v906
        %v908 = vpop.f32.mrf.mxu0
        %v909 = vadd.f32 %v721, %v908
        %v910 = vpop.f32.mrf.mxu0
        %v911 = vpop.f32.mrf.mxu0
        %912 = vdwg.mxu0
        %913 = vmatprep.subr.bf16.mxu0 0
        %914 = vmatpush1.bf16.msra.mxu0 0
        %915 = vmatprep.subr.bf16.mxu0 0
        %916 = vmatpush1.bf16.msra.mxu0 0
        %917 = vmatprep.subr.bf16.mxu0 0
        %918 = vmatpush1.bf16.msra.mxu0 0
        %919 = vmatprep.subr.bf16.mxu0 %v802
        %920 = vmatpush1.bf16.msra.mxu0 %v799
        %921 = vmatprep.subr.bf16.mxu0 %v619
        %922 = vmatpush1.bf16.msra.mxu0 %v618
        %923 = vmatprep.subr.bf16.mxu0 %v604
        %924 = vmatpush1.bf16.msra.mxu0 %v603
        %925 = vmatprep.subr.bf16.mxu0 %v589
        %926 = vmatpush1.bf16.msra.mxu0 %v588
        %927 = vmatprep.subr.bf16.mxu0 %v574
        %928 = vmatpush1.bf16.msra.mxu0 %v573
        %929 = vmatprep.subr.bf16.mxu0 0
        %930 = vmatpush2.bf16.msra.mxu0 0
        %931 = vmatprep.subr.bf16.mxu0 0
        %932 = vmatpush2.bf16.msra.mxu0 0
        %933 = vmatprep.subr.bf16.mxu0 0
        %934 = vmatpush2.bf16.msra.mxu0 0
        %935 = vmatprep.subr.bf16.mxu0 0
        %936 = vmatpush2.bf16.msra.mxu0 0
        %937 = vmatprep.subr.bf16.mxu0 0
        %938 = vmatpush2.bf16.msra.mxu0 0
        %939 = vmatprep.subr.bf16.mxu0 0
        %940 = vmatpush2.bf16.msra.mxu0 0
        %941 = vmatprep.subr.bf16.mxu0 0
        %942 = vmatpush2.bf16.msra.mxu0 0
        %943 = vmatprep.subr.bf16.mxu0 0
        %944 = vmatpush2.bf16.msra.mxu0 0
        %945 = vmatprep.mubr.bf16.mxu0 0
        %946 = vmatmul.mubr.bf16.gmra.mxu0 %v783
        %v947 = vpop.f32.mrf.mxu0
        %v948 = vadd.f32 %v725, %v947
        %v949 = vpop.f32.mrf.mxu0
        %v950 = vadd.f32 %v729, %v949
        %v951 = vpop.f32.mrf.mxu0
        %v952 = vpop.f32.mrf.mxu0
        %953 = vdwg.mxu0
        %954 = vmatprep.subr.bf16.mxu0 0
        %955 = vmatpush1.bf16.msra.mxu0 0
        %956 = vmatprep.subr.bf16.mxu0 0
        %957 = vmatpush1.bf16.msra.mxu0 0
        %958 = vmatprep.subr.bf16.mxu0 0
        %959 = vmatpush1.bf16.msra.mxu0 0
        %960 = vmatprep.subr.bf16.mxu0 %v808
        %961 = vmatpush1.bf16.msra.mxu0 %v805
        %962 = vmatprep.subr.bf16.mxu0 %v621
        %963 = vmatpush1.bf16.msra.mxu0 %v620
        %964 = vmatprep.subr.bf16.mxu0 %v606
        %965 = vmatpush1.bf16.msra.mxu0 %v605
        %966 = vmatprep.subr.bf16.mxu0 %v591
        %967 = vmatpush1.bf16.msra.mxu0 %v590
        %968 = vmatprep.subr.bf16.mxu0 %v576
        %969 = vmatpush1.bf16.msra.mxu0 %v575
        %970 = vmatprep.subr.bf16.mxu0 0
        %971 = vmatpush2.bf16.msra.mxu0 0
        %972 = vmatprep.subr.bf16.mxu0 0
        %973 = vmatpush2.bf16.msra.mxu0 0
        %974 = vmatprep.subr.bf16.mxu0 0
        %975 = vmatpush2.bf16.msra.mxu0 0
        %976 = vmatprep.subr.bf16.mxu0 0
        %977 = vmatpush2.bf16.msra.mxu0 0
        %978 = vmatprep.subr.bf16.mxu0 0
        %979 = vmatpush2.bf16.msra.mxu0 0
        %980 = vmatprep.subr.bf16.mxu0 0
        %981 = vmatpush2.bf16.msra.mxu0 0
        %982 = vmatprep.subr.bf16.mxu0 0
        %983 = vmatpush2.bf16.msra.mxu0 0
        %984 = vmatprep.subr.bf16.mxu0 0
        %985 = vmatpush2.bf16.msra.mxu0 0
        %986 = vmatprep.mubr.bf16.mxu0 0
        %987 = vmatmul.mubr.bf16.gmra.mxu0 %v783
        %v988 = vpop.f32.mrf.mxu0
        %v989 = vadd.f32 %v733, %v988
        %v990 = vpop.f32.mrf.mxu0
        %v991 = vadd.f32 %v737, %v990
        %v992 = vpop.f32.mrf.mxu0
        %v993 = vpop.f32.mrf.mxu0
        %994 = vdwg.mxu0
        %995 = vmatprep.subr.bf16.mxu0 0
        %996 = vmatpush1.bf16.msra.mxu0 0
        %997 = vmatprep.subr.bf16.mxu0 0
        %998 = vmatpush1.bf16.msra.mxu0 0
        %999 = vmatprep.subr.bf16.mxu0 0
        %1000 = vmatpush1.bf16.msra.mxu0 0
        %1001 = vmatprep.subr.bf16.mxu0 %v814
        %1002 = vmatpush1.bf16.msra.mxu0 %v811
        %1003 = vmatprep.subr.bf16.mxu0 %v623
        %1004 = vmatpush1.bf16.msra.mxu0 %v622
        %1005 = vmatprep.subr.bf16.mxu0 %v608
        %1006 = vmatpush1.bf16.msra.mxu0 %v607
        %1007 = vmatprep.subr.bf16.mxu0 %v593
        %1008 = vmatpush1.bf16.msra.mxu0 %v592
        %1009 = vmatprep.subr.bf16.mxu0 %v578
        %1010 = vmatpush1.bf16.msra.mxu0 %v577
        %1011 = vmatprep.subr.bf16.mxu0 0
        %1012 = vmatpush2.bf16.msra.mxu0 0
        %1013 = vmatprep.subr.bf16.mxu0 0
        %1014 = vmatpush2.bf16.msra.mxu0 0
        %1015 = vmatprep.subr.bf16.mxu0 0
        %1016 = vmatpush2.bf16.msra.mxu0 0
        %1017 = vmatprep.subr.bf16.mxu0 0
        %1018 = vmatpush2.bf16.msra.mxu0 0
        %1019 = vmatprep.subr.bf16.mxu0 0
        %1020 = vmatpush2.bf16.msra.mxu0 0
        %1021 = vmatprep.subr.bf16.mxu0 0
        %1022 = vmatpush2.bf16.msra.mxu0 0
        %1023 = vmatprep.subr.bf16.mxu0 0
        %1024 = vmatpush2.bf16.msra.mxu0 0
        %1025 = vmatprep.subr.bf16.mxu0 0
        %1026 = vmatpush2.bf16.msra.mxu0 0
        %1027 = vmatprep.mubr.bf16.mxu0 0
        %1028 = vmatmul.mubr.bf16.gmra.mxu0 %v783
        %v1029 = vpop.f32.mrf.mxu0
        %v1030 = vadd.f32 %v741, %v1029
        %v1031 = vpop.f32.mrf.mxu0
        %v1032 = vadd.f32 %v745, %v1031
        %v1033 = vpop.f32.mrf.mxu0
        %v1034 = vpop.f32.mrf.mxu0
        %1035 = vdwg.mxu0
        %1036 = vmatprep.subr.bf16.mxu0 0
        %1037 = vmatpush1.bf16.msra.mxu0 0
        %1038 = vmatprep.subr.bf16.mxu0 0
        %1039 = vmatpush1.bf16.msra.mxu0 0
        %1040 = vmatprep.subr.bf16.mxu0 0
        %1041 = vmatpush1.bf16.msra.mxu0 0
        %1042 = vmatprep.subr.bf16.mxu0 %v820
        %1043 = vmatpush1.bf16.msra.mxu0 %v817
        %1044 = vmatprep.subr.bf16.mxu0 %v625
        %1045 = vmatpush1.bf16.msra.mxu0 %v624
        %1046 = vmatprep.subr.bf16.mxu0 %v610
        %1047 = vmatpush1.bf16.msra.mxu0 %v609
        %1048 = vmatprep.subr.bf16.mxu0 %v595
        %1049 = vmatpush1.bf16.msra.mxu0 %v594
        %1050 = vmatprep.subr.bf16.mxu0 %v580
        %1051 = vmatpush1.bf16.msra.mxu0 %v579
        %1052 = vmatprep.subr.bf16.mxu0 0
        %1053 = vmatpush2.bf16.msra.mxu0 0
        %1054 = vmatprep.subr.bf16.mxu0 0
        %1055 = vmatpush2.bf16.msra.mxu0 0
        %1056 = vmatprep.subr.bf16.mxu0 0
        %1057 = vmatpush2.bf16.msra.mxu0 0
        %1058 = vmatprep.subr.bf16.mxu0 0
        %1059 = vmatpush2.bf16.msra.mxu0 0
        %1060 = vmatprep.subr.bf16.mxu0 0
        %1061 = vmatpush2.bf16.msra.mxu0 0
        %1062 = vmatprep.subr.bf16.mxu0 0
        %1063 = vmatpush2.bf16.msra.mxu0 0
        %1064 = vmatprep.subr.bf16.mxu0 0
        %1065 = vmatpush2.bf16.msra.mxu0 0
        %1066 = vmatprep.subr.bf16.mxu0 0
        %1067 = vmatpush2.bf16.msra.mxu0 0
        %1068 = vmatprep.mubr.bf16.mxu0 0
        %1069 = vmatmul.mubr.bf16.gmra.mxu0 %v783
        %v1070 = vpop.f32.mrf.mxu0
        %v1071 = vadd.f32 %v749, %v1070
        %v1072 = vpop.f32.mrf.mxu0
        %v1073 = vadd.f32 %v753, %v1072
        %v1074 = vpop.f32.mrf.mxu0
        %v1075 = vpop.f32.mrf.mxu0
        %1076 = vdwg.mxu0
        %1077 = vmatprep.subr.bf16.mxu0 0
        %1078 = vmatpush1.bf16.msra.mxu0 0
        %1079 = vmatprep.subr.bf16.mxu0 0
        %1080 = vmatpush1.bf16.msra.mxu0 0
        %1081 = vmatprep.subr.bf16.mxu0 0
        %1082 = vmatpush1.bf16.msra.mxu0 0
        %1083 = vmatprep.subr.bf16.mxu0 %v826
        %1084 = vmatpush1.bf16.msra.mxu0 %v823
        %1085 = vmatprep.subr.bf16.mxu0 %v627
        %1086 = vmatpush1.bf16.msra.mxu0 %v626
        %1087 = vmatprep.subr.bf16.mxu0 %v612
        %1088 = vmatpush1.bf16.msra.mxu0 %v611
        %1089 = vmatprep.subr.bf16.mxu0 %v597
        %1090 = vmatpush1.bf16.msra.mxu0 %v596
        %1091 = vmatprep.subr.bf16.mxu0 %v582
        %1092 = vmatpush1.bf16.msra.mxu0 %v581
        %1093 = vmatprep.subr.bf16.mxu0 0
        %1094 = vmatpush2.bf16.msra.mxu0 0
        %1095 = vmatprep.subr.bf16.mxu0 0
        %1096 = vmatpush2.bf16.msra.mxu0 0
        %1097 = vmatprep.subr.bf16.mxu0 0
        %1098 = vmatpush2.bf16.msra.mxu0 0
        %1099 = vmatprep.subr.bf16.mxu0 0
        %1100 = vmatpush2.bf16.msra.mxu0 0
        %1101 = vmatprep.subr.bf16.mxu0 0
        %1102 = vmatpush2.bf16.msra.mxu0 0
        %1103 = vmatprep.subr.bf16.mxu0 0
        %1104 = vmatpush2.bf16.msra.mxu0 0
        %1105 = vmatprep.subr.bf16.mxu0 0
        %1106 = vmatpush2.bf16.msra.mxu0 0
        %1107 = vmatprep.subr.bf16.mxu0 0
        %1108 = vmatpush2.bf16.msra.mxu0 0
        %1109 = vmatprep.mubr.bf16.mxu0 0
        %1110 = vmatmul.mubr.bf16.gmra.mxu0 %v783
        %v1111 = vpop.f32.mrf.mxu0
        %v1112 = vadd.f32 %v757, %v1111
        %v1113 = vpop.f32.mrf.mxu0
        %v1114 = vadd.f32 %v761, %v1113
        %v1115 = vpop.f32.mrf.mxu0
        %v1116 = vpop.f32.mrf.mxu0
        %1117 = vdwg.mxu0
        %1118 = vmatprep.subr.bf16.mxu0 0
        %1119 = vmatpush1.bf16.msra.mxu0 0
        %1120 = vmatprep.subr.bf16.mxu0 0
        %1121 = vmatpush1.bf16.msra.mxu0 0
        %1122 = vmatprep.subr.bf16.mxu0 0
        %1123 = vmatpush1.bf16.msra.mxu0 0
        %1124 = vmatprep.subr.bf16.mxu0 0
        %1125 = vmatpush1.bf16.msra.mxu0 %v829
        %1126 = vmatprep.subr.bf16.mxu0 0
        %1127 = vmatpush1.bf16.msra.mxu0 %v628
        %1128 = vmatprep.subr.bf16.mxu0 0
        %1129 = vmatpush1.bf16.msra.mxu0 %v613
        %1130 = vmatprep.subr.bf16.mxu0 0
        %1131 = vmatpush1.bf16.msra.mxu0 %v598
        %1132 = vmatprep.subr.bf16.mxu0 0
        %1133 = vmatpush1.bf16.msra.mxu0 %v583
        %1134 = vmatprep.subr.bf16.mxu0 0
        %1135 = vmatpush2.bf16.msra.mxu0 0
        %1136 = vmatprep.subr.bf16.mxu0 0
        %1137 = vmatpush2.bf16.msra.mxu0 0
        %1138 = vmatprep.subr.bf16.mxu0 0
        %1139 = vmatpush2.bf16.msra.mxu0 0
        %1140 = vmatprep.subr.bf16.mxu0 0
        %1141 = vmatpush2.bf16.msra.mxu0 0
        %1142 = vmatprep.subr.bf16.mxu0 0
        %1143 = vmatpush2.bf16.msra.mxu0 0
        %1144 = vmatprep.subr.bf16.mxu0 0
        %1145 = vmatpush2.bf16.msra.mxu0 0
        %1146 = vmatprep.subr.bf16.mxu0 0
        %1147 = vmatpush2.bf16.msra.mxu0 0
        %1148 = vmatprep.subr.bf16.mxu0 0
        %1149 = vmatpush2.bf16.msra.mxu0 0
        %1150 = vmatprep.mubr.bf16.mxu0 0
        %1151 = vmatmul.mubr.bf16.gmra.mxu0 %v783
        %v1152 = vpop.f32.mrf.mxu0
        %v1153 = vadd.f32 %v765, %v1152
        %v1154 = vpop.f32.mrf.mxu0
        %v1155 = vpop.f32.mrf.mxu0
        %v1156 = vpop.f32.mrf.mxu0
        %1157 = vdwg.mxu0
        %v1158 = vxor.u32 %v866, 2147483648
        %v1159 = vxor.u32 %v868, 2147483648
        %v1160 = vxor.u32 %v907, 2147483648
        %v1161 = vxor.u32 %v909, 2147483648
        %v1162 = vxor.u32 %v948, 2147483648
        %v1163 = vxor.u32 %v950, 2147483648
        %v1164 = vxor.u32 %v989, 2147483648
        %v1165 = vxor.u32 %v991, 2147483648
        %v1166 = vxor.u32 %v1030, 2147483648
        %v1167 = vxor.u32 %v1032, 2147483648
        %v1168 = vxor.u32 %v1071, 2147483648
        %v1169 = vxor.u32 %v1073, 2147483648
        %v1170 = vxor.u32 %v1112, 2147483648
        %v1171 = vxor.u32 %v1114, 2147483648
        %v1172 = vxor.u32 %v1153, 2147483648
        %v1173 = vmul.f32 %v1158, 1.442695
        %v1174 = vpow.pop %v1173
        %v1175 = vmul.f32 %v1159, 1.442695
        %v1176 = vpow.pop %v1175
        %v1177 = vmul.f32 %v1160, 1.442695
        %v1178 = vpow.pop %v1177
        %v1179 = vmul.f32 %v1161, 1.442695
        %v1180 = vpow.pop %v1179
        %v1181 = vmul.f32 %v1162, 1.442695
        %v1182 = vpow.pop %v1181
        %v1183 = vmul.f32 %v1163, 1.442695
        %v1184 = vpow.pop %v1183
        %v1185 = vmul.f32 %v1164, 1.442695
        %v1186 = vpow.pop %v1185
        %v1187 = vmul.f32 %v1165, 1.442695
        %v1188 = vpow.pop %v1187
        %v1189 = vmul.f32 %v1166, 1.442695
        %v1190 = vpow.pop %v1189
        %v1191 = vmul.f32 %v1167, 1.442695
        %v1192 = vpow.pop %v1191
        %v1193 = vmul.f32 %v1168, 1.442695
        %v1194 = vpow.pop %v1193
        %v1195 = vmul.f32 %v1169, 1.442695
        %v1196 = vpow.pop %v1195
        %v1197 = vmul.f32 %v1170, 1.442695
        %v1198 = vpow.pop %v1197
        %v1199 = vmul.f32 %v1171, 1.442695
        %v1200 = vpow.pop %v1199
        %v1201 = vmul.f32 %v1172, 1.442695
        %v1202 = vpow.pop %v1201
        %v1203 = vadd.f32 %v1174, 1.0
        %v1204 = vadd.f32 %v1176, 1.0
        %v1205 = vadd.f32 %v1178, 1.0
        %v1206 = vadd.f32 %v1180, 1.0
        %v1207 = vadd.f32 %v1182, 1.0
        %v1208 = vadd.f32 %v1184, 1.0
        %v1209 = vadd.f32 %v1186, 1.0
        %v1210 = vadd.f32 %v1188, 1.0
        %v1211 = vadd.f32 %v1190, 1.0
        %v1212 = vadd.f32 %v1192, 1.0
        %v1213 = vadd.f32 %v1194, 1.0
        %v1214 = vadd.f32 %v1196, 1.0
        %v1215 = vadd.f32 %v1198, 1.0
        %v1216 = vadd.f32 %v1200, 1.0
        %v1217 = vadd.f32 %v1202, 1.0
        %v1218 = vrcp.pop %v1203
        %v1219 = vmul.f32 1.0, %v1218
        %v1220 = vrcp.pop %v1204
        %v1221 = vmul.f32 1.0, %v1220
        %v1222 = vrcp.pop %v1205
        %v1223 = vmul.f32 1.0, %v1222
        %v1224 = vrcp.pop %v1206
        %v1225 = vmul.f32 1.0, %v1224
        %v1226 = vrcp.pop %v1207
        %v1227 = vmul.f32 1.0, %v1226
        %v1228 = vrcp.pop %v1208
        %v1229 = vmul.f32 1.0, %v1228
        %v1230 = vrcp.pop %v1209
        %v1231 = vmul.f32 1.0, %v1230
        %v1232 = vrcp.pop %v1210
        %v1233 = vmul.f32 1.0, %v1232
        %v1234 = vrcp.pop %v1211
        %v1235 = vmul.f32 1.0, %v1234
        %v1236 = vrcp.pop %v1212
        %v1237 = vmul.f32 1.0, %v1236
        %v1238 = vrcp.pop %v1213
        %v1239 = vmul.f32 1.0, %v1238
        %v1240 = vrcp.pop %v1214
        %v1241 = vmul.f32 1.0, %v1240
        %v1242 = vrcp.pop %v1215
        %v1243 = vmul.f32 1.0, %v1242
        %v1244 = vrcp.pop %v1216
        %v1245 = vmul.f32 1.0, %v1244
        %v1246 = vrcp.pop %v1217
        %v1247 = vmul.f32 1.0, %v1246
        %v1248 = vld [vmem:[%s242] sm:$0xff]
        %v1249 = vld [vmem:[%s242 + $0x8] sm:$0xff]
        %v1250 = vld [vmem:[%s242 + $0x10] sm:$0xff]
        %v1251 = vld [vmem:[%s242 + $0x18] sm:$0xff]
        %v1252 = vld [vmem:[%s242 + $0x20] sm:$0xff]
        %v1253 = vld [vmem:[%s242 + $0x28] sm:$0xff]
        %v1254 = vld [vmem:[%s242 + $0x30] sm:$0xff]
        %v1255 = vld [vmem:[%s242 + $0x38] sm:$0xf]
        %v1256 = vld [vmem:[%s242 + $0x3c] sm:$0xff]
        %v1257 = vld [vmem:[%s242 + $0x44] sm:$0xff]
        %v1258 = vld [vmem:[%s242 + $0x4c] sm:$0xff]
        %v1259 = vld [vmem:[%s242 + $0x54] sm:$0xff]
        %v1260 = vld [vmem:[%s242 + $0x5c] sm:$0xff]
        %v1261 = vld [vmem:[%s242 + $0x64] sm:$0xff]
        %v1262 = vld [vmem:[%s242 + $0x6c] sm:$0xff]
        %v1263 = vld [vmem:[%s242 + $0x74] sm:$0xf]
        %v1264 = vld [vmem:[%s242 + $0x78] sm:$0xff]
        %v1265 = vld [vmem:[%s242 + $0x80] sm:$0xff]
        %v1266 = vld [vmem:[%s242 + $0x88] sm:$0xff]
        %v1267 = vld [vmem:[%s242 + $0x90] sm:$0xff]
        %v1268 = vld [vmem:[%s242 + $0x98] sm:$0xff]
        %v1269 = vld [vmem:[%s242 + $0xa0] sm:$0xff]
        %v1270 = vld [vmem:[%s242 + $0xa8] sm:$0xff]
        %v1271 = vld [vmem:[%s242 + $0xb0] sm:$0xf]
        %v1272 = vld [vmem:[%s242 + $0xb4] sm:$0xff]
        %v1273 = vld [vmem:[%s242 + $0xbc] sm:$0xff]
        %v1274 = vld [vmem:[%s242 + $0xc4] sm:$0xff]
        %v1275 = vld [vmem:[%s242 + $0xcc] sm:$0xff]
        %v1276 = vld [vmem:[%s242 + $0xd4] sm:$0xff]
        %v1277 = vld [vmem:[%s242 + $0xdc] sm:$0xff]
        %v1278 = vld [vmem:[%s242 + $0xe4] sm:$0xff]
        %v1279 = vld [vmem:[%s242 + $0xec] sm:$0xf]
        %v1280 = vld [vmem:[%s242 + $0xf0] sm:$0xff]
        %v1281 = vld [vmem:[%s242 + $0xf8] sm:$0xff]
        %v1282 = vld [vmem:[%s242 + $0x100] sm:$0xff]
        %v1283 = vld [vmem:[%s242 + $0x108] sm:$0xff]
        %v1284 = vld [vmem:[%s242 + $0x110] sm:$0xff]
        %v1285 = vld [vmem:[%s242 + $0x118] sm:$0xff]
        %v1286 = vld [vmem:[%s242 + $0x120] sm:$0xff]
        %v1287 = vld [vmem:[%s242 + $0x128] sm:$0xf]
        %v1288 = vld [vmem:[%s242 + $0x12c] sm:$0xff]
        %v1289 = vld [vmem:[%s242 + $0x134] sm:$0xff]
        %v1290 = vld [vmem:[%s242 + $0x13c] sm:$0xff]
        %v1291 = vld [vmem:[%s242 + $0x144] sm:$0xff]
        %v1292 = vld [vmem:[%s242 + $0x14c] sm:$0xff]
        %v1293 = vld [vmem:[%s242 + $0x154] sm:$0xff]
        %v1294 = vld [vmem:[%s242 + $0x15c] sm:$0xff]
        %v1295 = vld [vmem:[%s242 + $0x164] sm:$0xf]
        %v1296 = vld [vmem:[%s242 + $0x168] sm:$0xff]
        %v1297 = vld [vmem:[%s242 + $0x170] sm:$0xff]
        %v1298 = vld [vmem:[%s242 + $0x178] sm:$0xff]
        %v1299 = vld [vmem:[%s242 + $0x180] sm:$0xff]
        %v1300 = vld [vmem:[%s242 + $0x188] sm:$0xff]
        %v1301 = vld [vmem:[%s242 + $0x190] sm:$0xff]
        %v1302 = vld [vmem:[%s242 + $0x198] sm:$0xff]
        %v1303 = vld [vmem:[%s242 + $0x1a0] sm:$0xf]
        %v1304 = vld [vmem:[%s242 + $0x1a4] sm:$0xff]
        %v1305 = vld [vmem:[%s242 + $0x1ac] sm:$0xff]
        %v1306 = vld [vmem:[%s242 + $0x1b4] sm:$0xff]
        %v1307 = vld [vmem:[%s242 + $0x1bc] sm:$0xff]
        %v1308 = vld [vmem:[%s242 + $0x1c4] sm:$0xff]
        %v1309 = vld [vmem:[%s242 + $0x1cc] sm:$0xff]
        %v1310 = vld [vmem:[%s242 + $0x1d4] sm:$0xff]
        %v1311 = vld [vmem:[%s242 + $0x1dc] sm:$0xf]
        %v1312 = vld [vmem:[%s242 + $0x1e0] sm:$0xff]
        %v1313 = vld [vmem:[%s242 + $0x1e8] sm:$0xff]
        %v1314 = vld [vmem:[%s242 + $0x1f0] sm:$0xff]
        %v1315 = vld [vmem:[%s242 + $0x1f8] sm:$0xff]
        %v1316 = vld [vmem:[%s242 + $0x200] sm:$0xff]
        %v1317 = vld [vmem:[%s242 + $0x208] sm:$0xff]
        %v1318 = vld [vmem:[%s242 + $0x210] sm:$0xff]
        %v1319 = vld [vmem:[%s242 + $0x218] sm:$0xf]
        %v1320 = vld [vmem:[%s242 + $0x21c] sm:$0xff]
        %v1321 = vld [vmem:[%s242 + $0x224] sm:$0xff]
        %v1322 = vld [vmem:[%s242 + $0x22c] sm:$0xff]
        %v1323 = vld [vmem:[%s242 + $0x234] sm:$0xff]
        %v1324 = vld [vmem:[%s242 + $0x23c] sm:$0xff]
        %v1325 = vld [vmem:[%s242 + $0x244] sm:$0xff]
        %v1326 = vld [vmem:[%s242 + $0x24c] sm:$0xff]
        %v1327 = vld [vmem:[%s242 + $0x254] sm:$0xf]
        %v1328 = vld [vmem:[%s242 + $0x258] sm:$0xff]
        %v1329 = vld [vmem:[%s242 + $0x260] sm:$0xff]
        %v1330 = vld [vmem:[%s242 + $0x268] sm:$0xff]
        %v1331 = vld [vmem:[%s242 + $0x270] sm:$0xff]
        %v1332 = vld [vmem:[%s242 + $0x278] sm:$0xff]
        %v1333 = vld [vmem:[%s242 + $0x280] sm:$0xff]
        %v1334 = vld [vmem:[%s242 + $0x288] sm:$0xff]
        %v1335 = vld [vmem:[%s242 + $0x290] sm:$0xf]
        %v1336 = vld [vmem:[%s242 + $0x294] sm:$0xff]
        %v1337 = vld [vmem:[%s242 + $0x29c] sm:$0xff]
        %v1338 = vld [vmem:[%s242 + $0x2a4] sm:$0xff]
        %v1339 = vld [vmem:[%s242 + $0x2ac] sm:$0xff]
        %v1340 = vld [vmem:[%s242 + $0x2b4] sm:$0xff]
        %v1341 = vld [vmem:[%s242 + $0x2bc] sm:$0xff]
        %v1342 = vld [vmem:[%s242 + $0x2c4] sm:$0xff]
        %v1343 = vld [vmem:[%s242 + $0x2cc] sm:$0xf]
        %v1344 = vld [vmem:[%s242 + $0x2d0] sm:$0xff]
        %v1345 = vld [vmem:[%s242 + $0x2d8] sm:$0xff]
        %v1346 = vld [vmem:[%s242 + $0x2e0] sm:$0xff]
        %v1347 = vld [vmem:[%s242 + $0x2e8] sm:$0xff]
        %v1348 = vld [vmem:[%s242 + $0x2f0] sm:$0xff]
        %v1349 = vld [vmem:[%s242 + $0x2f8] sm:$0xff]
        %v1350 = vld [vmem:[%s242 + $0x300] sm:$0xff]
        %v1351 = vld [vmem:[%s242 + $0x308] sm:$0xf]
        %v1352 = vld [vmem:[%s242 + $0x30c] sm:$0xff]
        %v1353 = vld [vmem:[%s242 + $0x314] sm:$0xff]
        %v1354 = vld [vmem:[%s242 + $0x31c] sm:$0xff]
        %v1355 = vld [vmem:[%s242 + $0x324] sm:$0xff]
        %v1356 = vld [vmem:[%s242 + $0x32c] sm:$0xff]
        %v1357 = vld [vmem:[%s242 + $0x334] sm:$0xff]
        %v1358 = vld [vmem:[%s242 + $0x33c] sm:$0xff]
        %v1359 = vld [vmem:[%s242 + $0x344] sm:$0xf]
        %v1360 = vld [vmem:[%s242 + $0x348] sm:$0xff]
        %v1361 = vld [vmem:[%s242 + $0x350] sm:$0xff]
        %v1362 = vld [vmem:[%s242 + $0x358] sm:$0xff]
        %v1363 = vld [vmem:[%s242 + $0x360] sm:$0xff]
        %v1364 = vld [vmem:[%s242 + $0x368] sm:$0xff]
        %v1365 = vld [vmem:[%s242 + $0x370] sm:$0xff]
        %v1366 = vld [vmem:[%s242 + $0x378] sm:$0xff]
        %v1367 = vld [vmem:[%s242 + $0x380] sm:$0xf]
        %v1368 = vld [vmem:[%s242 + $0x384] sm:$0xff]
        %v1369 = vld [vmem:[%s242 + $0x38c] sm:$0xff]
        %v1370 = vld [vmem:[%s242 + $0x394] sm:$0xff]
        %v1371 = vld [vmem:[%s242 + $0x39c] sm:$0xff]
        %v1372 = vld [vmem:[%s242 + $0x3a4] sm:$0xff]
        %v1373 = vld [vmem:[%s242 + $0x3ac] sm:$0xff]
        %v1374 = vld [vmem:[%s242 + $0x3b4] sm:$0xff]
        %v1375 = vld [vmem:[%s242 + $0x3bc] sm:$0xf]
        %v1376 = vld [vmem:[%s242 + $0x3c0] sm:$0xff]
        %v1377 = vld [vmem:[%s242 + $0x3c8] sm:$0xff]
        %v1378 = vld [vmem:[%s242 + $0x3d0] sm:$0xff]
        %v1379 = vld [vmem:[%s242 + $0x3d8] sm:$0xff]
        %v1380 = vld [vmem:[%s242 + $0x3e0] sm:$0xff]
        %v1381 = vld [vmem:[%s242 + $0x3e8] sm:$0xff]
        %v1382 = vld [vmem:[%s242 + $0x3f0] sm:$0xff]
        %v1383 = vld [vmem:[%s242 + $0x3f8] sm:$0xf]
        %v1384 = vld [vmem:[%s242 + $0x3fc] sm:$0xff]
        %v1385 = vld [vmem:[%s242 + $0x404] sm:$0xff]
        %v1386 = vld [vmem:[%s242 + $0x40c] sm:$0xff]
        %v1387 = vld [vmem:[%s242 + $0x414] sm:$0xff]
        %v1388 = vld [vmem:[%s242 + $0x41c] sm:$0xff]
        %v1389 = vld [vmem:[%s242 + $0x424] sm:$0xff]
        %v1390 = vld [vmem:[%s242 + $0x42c] sm:$0xff]
        %v1391 = vld [vmem:[%s242 + $0x434] sm:$0xf]
        %v1392 = vld [vmem:[%s242 + $0x438] sm:$0xff]
        %v1393 = vld [vmem:[%s242 + $0x440] sm:$0xff]
        %v1394 = vld [vmem:[%s242 + $0x448] sm:$0xff]
        %v1395 = vld [vmem:[%s242 + $0x450] sm:$0xff]
        %v1396 = vld [vmem:[%s242 + $0x458] sm:$0xff]
        %v1397 = vld [vmem:[%s242 + $0x460] sm:$0xff]
        %v1398 = vld [vmem:[%s242 + $0x468] sm:$0xff]
        %v1399 = vld [vmem:[%s242 + $0x470] sm:$0xf]
        %v1400 = vld [vmem:[%s242 + $0x474] sm:$0xff]
        %v1401 = vld [vmem:[%s242 + $0x47c] sm:$0xff]
        %v1402 = vld [vmem:[%s242 + $0x484] sm:$0xff]
        %v1403 = vld [vmem:[%s242 + $0x48c] sm:$0xff]
        %v1404 = vld [vmem:[%s242 + $0x494] sm:$0xff]
        %v1405 = vld [vmem:[%s242 + $0x49c] sm:$0xff]
        %v1406 = vld [vmem:[%s242 + $0x4a4] sm:$0xff]
        %v1407 = vld [vmem:[%s242 + $0x4ac] sm:$0xf]
        %v1408 = vunpack.c.l.bf16 %v1248
        %v1409 = vunpack.c.h.bf16 %v1248
        %v1410 = vunpack.c.l.bf16 %v1249
        %v1411 = vunpack.c.h.bf16 %v1249
        %v1412 = vunpack.c.l.bf16 %v1250
        %v1413 = vunpack.c.h.bf16 %v1250
        %v1414 = vunpack.c.l.bf16 %v1251
        %v1415 = vunpack.c.h.bf16 %v1251
        %v1416 = vunpack.c.l.bf16 %v1252
        %v1417 = vunpack.c.h.bf16 %v1252
        %v1418 = vunpack.c.l.bf16 %v1253
        %v1419 = vunpack.c.h.bf16 %v1253
        %v1420 = vunpack.c.l.bf16 %v1254
        %v1421 = vunpack.c.h.bf16 %v1254
        %v1422 = vunpack.c.l.bf16 %v1255
        %v1423 = vunpack.c.l.bf16 %v1256
        %v1424 = vunpack.c.h.bf16 %v1256
        %v1425 = vunpack.c.l.bf16 %v1257
        %v1426 = vunpack.c.h.bf16 %v1257
        %v1427 = vunpack.c.l.bf16 %v1258
        %v1428 = vunpack.c.h.bf16 %v1258
        %v1429 = vunpack.c.l.bf16 %v1259
        %v1430 = vunpack.c.h.bf16 %v1259
        %v1431 = vunpack.c.l.bf16 %v1260
        %v1432 = vunpack.c.h.bf16 %v1260
        %v1433 = vunpack.c.l.bf16 %v1261
        %v1434 = vunpack.c.h.bf16 %v1261
        %v1435 = vunpack.c.l.bf16 %v1262
        %v1436 = vunpack.c.h.bf16 %v1262
        %v1437 = vunpack.c.l.bf16 %v1263
        %v1438 = vunpack.c.l.bf16 %v1264
        %v1439 = vunpack.c.h.bf16 %v1264
        %v1440 = vunpack.c.l.bf16 %v1265
        %v1441 = vunpack.c.h.bf16 %v1265
        %v1442 = vunpack.c.l.bf16 %v1266
        %v1443 = vunpack.c.h.bf16 %v1266
        %v1444 = vunpack.c.l.bf16 %v1267
        %v1445 = vunpack.c.h.bf16 %v1267
        %v1446 = vunpack.c.l.bf16 %v1268
        %v1447 = vunpack.c.h.bf16 %v1268
        %v1448 = vunpack.c.l.bf16 %v1269
        %v1449 = vunpack.c.h.bf16 %v1269
        %v1450 = vunpack.c.l.bf16 %v1270
        %v1451 = vunpack.c.h.bf16 %v1270
        %v1452 = vunpack.c.l.bf16 %v1271
        %v1453 = vunpack.c.l.bf16 %v1272
        %v1454 = vunpack.c.h.bf16 %v1272
        %v1455 = vunpack.c.l.bf16 %v1273
        %v1456 = vunpack.c.h.bf16 %v1273
        %v1457 = vunpack.c.l.bf16 %v1274
        %v1458 = vunpack.c.h.bf16 %v1274
        %v1459 = vunpack.c.l.bf16 %v1275
        %v1460 = vunpack.c.h.bf16 %v1275
        %v1461 = vunpack.c.l.bf16 %v1276
        %v1462 = vunpack.c.h.bf16 %v1276
        %v1463 = vunpack.c.l.bf16 %v1277
        %v1464 = vunpack.c.h.bf16 %v1277
        %v1465 = vunpack.c.l.bf16 %v1278
        %v1466 = vunpack.c.h.bf16 %v1278
        %v1467 = vunpack.c.l.bf16 %v1279
        %v1468 = vunpack.c.l.bf16 %v1280
        %v1469 = vunpack.c.h.bf16 %v1280
        %v1470 = vunpack.c.l.bf16 %v1281
        %v1471 = vunpack.c.h.bf16 %v1281
        %v1472 = vunpack.c.l.bf16 %v1282
        %v1473 = vunpack.c.h.bf16 %v1282
        %v1474 = vunpack.c.l.bf16 %v1283
        %v1475 = vunpack.c.h.bf16 %v1283
        %v1476 = vunpack.c.l.bf16 %v1284
        %v1477 = vunpack.c.h.bf16 %v1284
        %v1478 = vunpack.c.l.bf16 %v1285
        %v1479 = vunpack.c.h.bf16 %v1285
        %v1480 = vunpack.c.l.bf16 %v1286
        %v1481 = vunpack.c.h.bf16 %v1286
        %v1482 = vunpack.c.l.bf16 %v1287
        %v1483 = vunpack.c.l.bf16 %v1288
        %v1484 = vunpack.c.h.bf16 %v1288
        %v1485 = vunpack.c.l.bf16 %v1289
        %v1486 = vunpack.c.h.bf16 %v1289
        %v1487 = vunpack.c.l.bf16 %v1290
        %v1488 = vunpack.c.h.bf16 %v1290
        %v1489 = vunpack.c.l.bf16 %v1291
        %v1490 = vunpack.c.h.bf16 %v1291
        %v1491 = vunpack.c.l.bf16 %v1292
        %v1492 = vunpack.c.h.bf16 %v1292
        %v1493 = vunpack.c.l.bf16 %v1293
        %v1494 = vunpack.c.h.bf16 %v1293
        %v1495 = vunpack.c.l.bf16 %v1294
        %v1496 = vunpack.c.h.bf16 %v1294
        %v1497 = vunpack.c.l.bf16 %v1295
        %v1498 = vunpack.c.l.bf16 %v1296
        %v1499 = vunpack.c.h.bf16 %v1296
        %v1500 = vunpack.c.l.bf16 %v1297
        %v1501 = vunpack.c.h.bf16 %v1297
        %v1502 = vunpack.c.l.bf16 %v1298
        %v1503 = vunpack.c.h.bf16 %v1298
        %v1504 = vunpack.c.l.bf16 %v1299
        %v1505 = vunpack.c.h.bf16 %v1299
        %v1506 = vunpack.c.l.bf16 %v1300
        %v1507 = vunpack.c.h.bf16 %v1300
        %v1508 = vunpack.c.l.bf16 %v1301
        %v1509 = vunpack.c.h.bf16 %v1301
        %v1510 = vunpack.c.l.bf16 %v1302
        %v1511 = vunpack.c.h.bf16 %v1302
        %v1512 = vunpack.c.l.bf16 %v1303
        %v1513 = vunpack.c.l.bf16 %v1304
        %v1514 = vunpack.c.h.bf16 %v1304
        %v1515 = vunpack.c.l.bf16 %v1305
        %v1516 = vunpack.c.h.bf16 %v1305
        %v1517 = vunpack.c.l.bf16 %v1306
        %v1518 = vunpack.c.h.bf16 %v1306
        %v1519 = vunpack.c.l.bf16 %v1307
        %v1520 = vunpack.c.h.bf16 %v1307
        %v1521 = vunpack.c.l.bf16 %v1308
        %v1522 = vunpack.c.h.bf16 %v1308
        %v1523 = vunpack.c.l.bf16 %v1309
        %v1524 = vunpack.c.h.bf16 %v1309
        %v1525 = vunpack.c.l.bf16 %v1310
        %v1526 = vunpack.c.h.bf16 %v1310
        %v1527 = vunpack.c.l.bf16 %v1311
        %v1528 = vunpack.c.l.bf16 %v1312
        %v1529 = vunpack.c.h.bf16 %v1312
        %v1530 = vunpack.c.l.bf16 %v1313
        %v1531 = vunpack.c.h.bf16 %v1313
        %v1532 = vunpack.c.l.bf16 %v1314
        %v1533 = vunpack.c.h.bf16 %v1314
        %v1534 = vunpack.c.l.bf16 %v1315
        %v1535 = vunpack.c.h.bf16 %v1315
        %v1536 = vunpack.c.l.bf16 %v1316
        %v1537 = vunpack.c.h.bf16 %v1316
        %v1538 = vunpack.c.l.bf16 %v1317
        %v1539 = vunpack.c.h.bf16 %v1317
        %v1540 = vunpack.c.l.bf16 %v1318
        %v1541 = vunpack.c.h.bf16 %v1318
        %v1542 = vunpack.c.l.bf16 %v1319
        %v1543 = vunpack.c.l.bf16 %v1320
        %v1544 = vunpack.c.h.bf16 %v1320
        %v1545 = vunpack.c.l.bf16 %v1321
        %v1546 = vunpack.c.h.bf16 %v1321
        %v1547 = vunpack.c.l.bf16 %v1322
        %v1548 = vunpack.c.h.bf16 %v1322
        %v1549 = vunpack.c.l.bf16 %v1323
        %v1550 = vunpack.c.h.bf16 %v1323
        %v1551 = vunpack.c.l.bf16 %v1324
        %v1552 = vunpack.c.h.bf16 %v1324
        %v1553 = vunpack.c.l.bf16 %v1325
        %v1554 = vunpack.c.h.bf16 %v1325
        %v1555 = vunpack.c.l.bf16 %v1326
        %v1556 = vunpack.c.h.bf16 %v1326
        %v1557 = vunpack.c.l.bf16 %v1327
        %v1558 = vunpack.c.l.bf16 %v1328
        %v1559 = vunpack.c.h.bf16 %v1328
        %v1560 = vunpack.c.l.bf16 %v1329
        %v1561 = vunpack.c.h.bf16 %v1329
        %v1562 = vunpack.c.l.bf16 %v1330
        %v1563 = vunpack.c.h.bf16 %v1330
        %v1564 = vunpack.c.l.bf16 %v1331
        %v1565 = vunpack.c.h.bf16 %v1331
        %v1566 = vunpack.c.l.bf16 %v1332
        %v1567 = vunpack.c.h.bf16 %v1332
        %v1568 = vunpack.c.l.bf16 %v1333
        %v1569 = vunpack.c.h.bf16 %v1333
        %v1570 = vunpack.c.l.bf16 %v1334
        %v1571 = vunpack.c.h.bf16 %v1334
        %v1572 = vunpack.c.l.bf16 %v1335
        %v1573 = vunpack.c.l.bf16 %v1336
        %v1574 = vunpack.c.h.bf16 %v1336
        %v1575 = vunpack.c.l.bf16 %v1337
        %v1576 = vunpack.c.h.bf16 %v1337
        %v1577 = vunpack.c.l.bf16 %v1338
        %v1578 = vunpack.c.h.bf16 %v1338
        %v1579 = vunpack.c.l.bf16 %v1339
        %v1580 = vunpack.c.h.bf16 %v1339
        %v1581 = vunpack.c.l.bf16 %v1340
        %v1582 = vunpack.c.h.bf16 %v1340
        %v1583 = vunpack.c.l.bf16 %v1341
        %v1584 = vunpack.c.h.bf16 %v1341
        %v1585 = vunpack.c.l.bf16 %v1342
        %v1586 = vunpack.c.h.bf16 %v1342
        %v1587 = vunpack.c.l.bf16 %v1343
        %v1588 = vunpack.c.l.bf16 %v1344
        %v1589 = vunpack.c.h.bf16 %v1344
        %v1590 = vunpack.c.l.bf16 %v1345
        %v1591 = vunpack.c.h.bf16 %v1345
        %v1592 = vunpack.c.l.bf16 %v1346
        %v1593 = vunpack.c.h.bf16 %v1346
        %v1594 = vunpack.c.l.bf16 %v1347
        %v1595 = vunpack.c.h.bf16 %v1347
        %v1596 = vunpack.c.l.bf16 %v1348
        %v1597 = vunpack.c.h.bf16 %v1348
        %v1598 = vunpack.c.l.bf16 %v1349
        %v1599 = vunpack.c.h.bf16 %v1349
        %v1600 = vunpack.c.l.bf16 %v1350
        %v1601 = vunpack.c.h.bf16 %v1350
        %v1602 = vunpack.c.l.bf16 %v1351
        %v1603 = vunpack.c.l.bf16 %v1352
        %v1604 = vunpack.c.h.bf16 %v1352
        %v1605 = vunpack.c.l.bf16 %v1353
        %v1606 = vunpack.c.h.bf16 %v1353
        %v1607 = vunpack.c.l.bf16 %v1354
        %v1608 = vunpack.c.h.bf16 %v1354
        %v1609 = vunpack.c.l.bf16 %v1355
        %v1610 = vunpack.c.h.bf16 %v1355
        %v1611 = vunpack.c.l.bf16 %v1356
        %v1612 = vunpack.c.h.bf16 %v1356
        %v1613 = vunpack.c.l.bf16 %v1357
        %v1614 = vunpack.c.h.bf16 %v1357
        %v1615 = vunpack.c.l.bf16 %v1358
        %v1616 = vunpack.c.h.bf16 %v1358
        %v1617 = vunpack.c.l.bf16 %v1359
        %v1618 = vunpack.c.l.bf16 %v1360
        %v1619 = vunpack.c.h.bf16 %v1360
        %v1620 = vunpack.c.l.bf16 %v1361
        %v1621 = vunpack.c.h.bf16 %v1361
        %v1622 = vunpack.c.l.bf16 %v1362
        %v1623 = vunpack.c.h.bf16 %v1362
        %v1624 = vunpack.c.l.bf16 %v1363
        %v1625 = vunpack.c.h.bf16 %v1363
        %v1626 = vunpack.c.l.bf16 %v1364
        %v1627 = vunpack.c.h.bf16 %v1364
        %v1628 = vunpack.c.l.bf16 %v1365
        %v1629 = vunpack.c.h.bf16 %v1365
        %v1630 = vunpack.c.l.bf16 %v1366
        %v1631 = vunpack.c.h.bf16 %v1366
        %v1632 = vunpack.c.l.bf16 %v1367
        %v1633 = vunpack.c.l.bf16 %v1368
        %v1634 = vunpack.c.h.bf16 %v1368
        %v1635 = vunpack.c.l.bf16 %v1369
        %v1636 = vunpack.c.h.bf16 %v1369
        %v1637 = vunpack.c.l.bf16 %v1370
        %v1638 = vunpack.c.h.bf16 %v1370
        %v1639 = vunpack.c.l.bf16 %v1371
        %v1640 = vunpack.c.h.bf16 %v1371
        %v1641 = vunpack.c.l.bf16 %v1372
        %v1642 = vunpack.c.h.bf16 %v1372
        %v1643 = vunpack.c.l.bf16 %v1373
        %v1644 = vunpack.c.h.bf16 %v1373
        %v1645 = vunpack.c.l.bf16 %v1374
        %v1646 = vunpack.c.h.bf16 %v1374
        %v1647 = vunpack.c.l.bf16 %v1375
        %v1648 = vunpack.c.l.bf16 %v1376
        %v1649 = vunpack.c.h.bf16 %v1376
        %v1650 = vunpack.c.l.bf16 %v1377
        %v1651 = vunpack.c.h.bf16 %v1377
        %v1652 = vunpack.c.l.bf16 %v1378
        %v1653 = vunpack.c.h.bf16 %v1378
        %v1654 = vunpack.c.l.bf16 %v1379
        %v1655 = vunpack.c.h.bf16 %v1379
        %v1656 = vunpack.c.l.bf16 %v1380
        %v1657 = vunpack.c.h.bf16 %v1380
        %v1658 = vunpack.c.l.bf16 %v1381
        %v1659 = vunpack.c.h.bf16 %v1381
        %v1660 = vunpack.c.l.bf16 %v1382
        %v1661 = vunpack.c.h.bf16 %v1382
        %v1662 = vunpack.c.l.bf16 %v1383
        %v1663 = vunpack.c.l.bf16 %v1384
        %v1664 = vunpack.c.h.bf16 %v1384
        %v1665 = vunpack.c.l.bf16 %v1385
        %v1666 = vunpack.c.h.bf16 %v1385
        %v1667 = vunpack.c.l.bf16 %v1386
        %v1668 = vunpack.c.h.bf16 %v1386
        %v1669 = vunpack.c.l.bf16 %v1387
        %v1670 = vunpack.c.h.bf16 %v1387
        %v1671 = vunpack.c.l.bf16 %v1388
        %v1672 = vunpack.c.h.bf16 %v1388
        %v1673 = vunpack.c.l.bf16 %v1389
        %v1674 = vunpack.c.h.bf16 %v1389
        %v1675 = vunpack.c.l.bf16 %v1390
        %v1676 = vunpack.c.h.bf16 %v1390
        %v1677 = vunpack.c.l.bf16 %v1391
        %v1678 = vunpack.c.l.bf16 %v1392
        %v1679 = vunpack.c.h.bf16 %v1392
        %v1680 = vunpack.c.l.bf16 %v1393
        %v1681 = vunpack.c.h.bf16 %v1393
        %v1682 = vunpack.c.l.bf16 %v1394
        %v1683 = vunpack.c.h.bf16 %v1394
        %v1684 = vunpack.c.l.bf16 %v1395
        %v1685 = vunpack.c.h.bf16 %v1395
        %v1686 = vunpack.c.l.bf16 %v1396
        %v1687 = vunpack.c.h.bf16 %v1396
        %v1688 = vunpack.c.l.bf16 %v1397
        %v1689 = vunpack.c.h.bf16 %v1397
        %v1690 = vunpack.c.l.bf16 %v1398
        %v1691 = vunpack.c.h.bf16 %v1398
        %v1692 = vunpack.c.l.bf16 %v1399
        %v1693 = vunpack.c.l.bf16 %v1400
        %v1694 = vunpack.c.h.bf16 %v1400
        %v1695 = vunpack.c.l.bf16 %v1401
        %v1696 = vunpack.c.h.bf16 %v1401
        %v1697 = vunpack.c.l.bf16 %v1402
        %v1698 = vunpack.c.h.bf16 %v1402
        %v1699 = vunpack.c.l.bf16 %v1403
        %v1700 = vunpack.c.h.bf16 %v1403
        %v1701 = vunpack.c.l.bf16 %v1404
        %v1702 = vunpack.c.h.bf16 %v1404
        %v1703 = vunpack.c.l.bf16 %v1405
        %v1704 = vunpack.c.h.bf16 %v1405
        %v1705 = vunpack.c.l.bf16 %v1406
        %v1706 = vunpack.c.h.bf16 %v1406
        %v1707 = vunpack.c.l.bf16 %v1407
        %v1708 = vlaneseq
        %v1709 = vshrl.u32 %v1708, 7
        %v1710 = vsub.s32 0, %v1709
        %v1711 = vrot.slane %v1219, %v1710
        %v1712 = vlaneseq
        %v1713 = vshrl.u32 %v1712, 7
        %v1714 = vsub.s32 0, %v1713
        %v1715 = vrot.slane %v1221, %v1714
        %v1716 = vlaneseq
        %v1717 = vshrl.u32 %v1716, 7
        %v1718 = vsub.s32 0, %v1717
        %v1719 = vrot.slane %v1223, %v1718
        %v1720 = vlaneseq
        %v1721 = vshrl.u32 %v1720, 7
        %v1722 = vsub.s32 0, %v1721
        %v1723 = vrot.slane %v1225, %v1722
        %v1724 = vlaneseq
        %v1725 = vshrl.u32 %v1724, 7
        %v1726 = vsub.s32 0, %v1725
        %v1727 = vrot.slane %v1227, %v1726
        %v1728 = vlaneseq
        %v1729 = vshrl.u32 %v1728, 7
        %v1730 = vsub.s32 0, %v1729
        %v1731 = vrot.slane %v1229, %v1730
        %v1732 = vlaneseq
        %v1733 = vshrl.u32 %v1732, 7
        %v1734 = vsub.s32 0, %v1733
        %v1735 = vrot.slane %v1231, %v1734
        %v1736 = vlaneseq
        %v1737 = vshrl.u32 %v1736, 7
        %v1738 = vsub.s32 0, %v1737
        %v1739 = vrot.slane %v1233, %v1738
        %v1740 = vlaneseq
        %v1741 = vshrl.u32 %v1740, 7
        %v1742 = vsub.s32 0, %v1741
        %v1743 = vrot.slane %v1235, %v1742
        %v1744 = vlaneseq
        %v1745 = vshrl.u32 %v1744, 7
        %v1746 = vsub.s32 0, %v1745
        %v1747 = vrot.slane %v1237, %v1746
        %v1748 = vlaneseq
        %v1749 = vshrl.u32 %v1748, 7
        %v1750 = vsub.s32 0, %v1749
        %v1751 = vrot.slane %v1239, %v1750
        %v1752 = vlaneseq
        %v1753 = vshrl.u32 %v1752, 7
        %v1754 = vsub.s32 0, %v1753
        %v1755 = vrot.slane %v1241, %v1754
        %v1756 = vlaneseq
        %v1757 = vshrl.u32 %v1756, 7
        %v1758 = vsub.s32 0, %v1757
        %v1759 = vrot.slane %v1243, %v1758
        %v1760 = vlaneseq
        %v1761 = vshrl.u32 %v1760, 7
        %v1762 = vsub.s32 0, %v1761
        %v1763 = vrot.slane %v1245, %v1762
        %v1764 = vlaneseq
        %v1765 = vshrl.u32 %v1764, 7
        %v1766 = vsub.s32 0, %v1765
        %v1767 = vrot.slane %v1247, %v1766
        %v1768 = vmul.f32 %v1408, %v1711
        %v1769 = vmul.f32 %v1409, %v1715
        %v1770 = vmul.f32 %v1410, %v1719
        %v1771 = vmul.f32 %v1411, %v1723
        %v1772 = vmul.f32 %v1412, %v1727
        %v1773 = vmul.f32 %v1413, %v1731
        %v1774 = vmul.f32 %v1414, %v1735
        %v1775 = vmul.f32 %v1415, %v1739
        %v1776 = vmul.f32 %v1416, %v1743
        %v1777 = vmul.f32 %v1417, %v1747
        %v1778 = vmul.f32 %v1418, %v1751
        %v1779 = vmul.f32 %v1419, %v1755
        %v1780 = vmul.f32 %v1420, %v1759
        %v1781 = vmul.f32 %v1421, %v1763
        %v1782 = vmul.f32 %v1422, %v1767
        %v1783 = vmul.f32 %v1423, %v1711
        %v1784 = vmul.f32 %v1424, %v1715
        %v1785 = vmul.f32 %v1425, %v1719
        %v1786 = vmul.f32 %v1426, %v1723
        %v1787 = vmul.f32 %v1427, %v1727
        %v1788 = vmul.f32 %v1428, %v1731
        %v1789 = vmul.f32 %v1429, %v1735
        %v1790 = vmul.f32 %v1430, %v1739
        %v1791 = vmul.f32 %v1431, %v1743
        %v1792 = vmul.f32 %v1432, %v1747
        %v1793 = vmul.f32 %v1433, %v1751
        %v1794 = vmul.f32 %v1434, %v1755
        %v1795 = vmul.f32 %v1435, %v1759
        %v1796 = vmul.f32 %v1436, %v1763
        %v1797 = vmul.f32 %v1437, %v1767
        %v1798 = vmul.f32 %v1438, %v1711
        %v1799 = vmul.f32 %v1439, %v1715
        %v1800 = vmul.f32 %v1440, %v1719
        %v1801 = vmul.f32 %v1441, %v1723
        %v1802 = vmul.f32 %v1442, %v1727
        %v1803 = vmul.f32 %v1443, %v1731
        %v1804 = vmul.f32 %v1444, %v1735
        %v1805 = vmul.f32 %v1445, %v1739
        %v1806 = vmul.f32 %v1446, %v1743
        %v1807 = vmul.f32 %v1447, %v1747
        %v1808 = vmul.f32 %v1448, %v1751
        %v1809 = vmul.f32 %v1449, %v1755
        %v1810 = vmul.f32 %v1450, %v1759
        %v1811 = vmul.f32 %v1451, %v1763
        %v1812 = vmul.f32 %v1452, %v1767
        %v1813 = vmul.f32 %v1453, %v1711
        %v1814 = vmul.f32 %v1454, %v1715
        %v1815 = vmul.f32 %v1455, %v1719
        %v1816 = vmul.f32 %v1456, %v1723
        %v1817 = vmul.f32 %v1457, %v1727
        %v1818 = vmul.f32 %v1458, %v1731
        %v1819 = vmul.f32 %v1459, %v1735
        %v1820 = vmul.f32 %v1460, %v1739
        %v1821 = vmul.f32 %v1461, %v1743
        %v1822 = vmul.f32 %v1462, %v1747
        %v1823 = vmul.f32 %v1463, %v1751
        %v1824 = vmul.f32 %v1464, %v1755
        %v1825 = vmul.f32 %v1465, %v1759
        %v1826 = vmul.f32 %v1466, %v1763
        %v1827 = vmul.f32 %v1467, %v1767
        %v1828 = vmul.f32 %v1468, %v1711
        %v1829 = vmul.f32 %v1469, %v1715
        %v1830 = vmul.f32 %v1470, %v1719
        %v1831 = vmul.f32 %v1471, %v1723
        %v1832 = vmul.f32 %v1472, %v1727
        %v1833 = vmul.f32 %v1473, %v1731
        %v1834 = vmul.f32 %v1474, %v1735
        %v1835 = vmul.f32 %v1475, %v1739
        %v1836 = vmul.f32 %v1476, %v1743
        %v1837 = vmul.f32 %v1477, %v1747
        %v1838 = vmul.f32 %v1478, %v1751
        %v1839 = vmul.f32 %v1479, %v1755
        %v1840 = vmul.f32 %v1480, %v1759
        %v1841 = vmul.f32 %v1481, %v1763
        %v1842 = vmul.f32 %v1482, %v1767
        %v1843 = vmul.f32 %v1483, %v1711
        %v1844 = vmul.f32 %v1484, %v1715
        %v1845 = vmul.f32 %v1485, %v1719
        %v1846 = vmul.f32 %v1486, %v1723
        %v1847 = vmul.f32 %v1487, %v1727
        %v1848 = vmul.f32 %v1488, %v1731
        %v1849 = vmul.f32 %v1489, %v1735
        %v1850 = vmul.f32 %v1490, %v1739
        %v1851 = vmul.f32 %v1491, %v1743
        %v1852 = vmul.f32 %v1492, %v1747
        %v1853 = vmul.f32 %v1493, %v1751
        %v1854 = vmul.f32 %v1494, %v1755
        %v1855 = vmul.f32 %v1495, %v1759
        %v1856 = vmul.f32 %v1496, %v1763
        %v1857 = vmul.f32 %v1497, %v1767
        %v1858 = vmul.f32 %v1498, %v1711
        %v1859 = vmul.f32 %v1499, %v1715
        %v1860 = vmul.f32 %v1500, %v1719
        %v1861 = vmul.f32 %v1501, %v1723
        %v1862 = vmul.f32 %v1502, %v1727
        %v1863 = vmul.f32 %v1503, %v1731
        %v1864 = vmul.f32 %v1504, %v1735
        %v1865 = vmul.f32 %v1505, %v1739
        %v1866 = vmul.f32 %v1506, %v1743
        %v1867 = vmul.f32 %v1507, %v1747
        %v1868 = vmul.f32 %v1508, %v1751
        %v1869 = vmul.f32 %v1509, %v1755
        %v1870 = vmul.f32 %v1510, %v1759
        %v1871 = vmul.f32 %v1511, %v1763
        %v1872 = vmul.f32 %v1512, %v1767
        %v1873 = vmul.f32 %v1513, %v1711
        %v1874 = vmul.f32 %v1514, %v1715
        %v1875 = vmul.f32 %v1515, %v1719
        %v1876 = vmul.f32 %v1516, %v1723
        %v1877 = vmul.f32 %v1517, %v1727
        %v1878 = vmul.f32 %v1518, %v1731
        %v1879 = vmul.f32 %v1519, %v1735
        %v1880 = vmul.f32 %v1520, %v1739
        %v1881 = vmul.f32 %v1521, %v1743
        %v1882 = vmul.f32 %v1522, %v1747
        %v1883 = vmul.f32 %v1523, %v1751
        %v1884 = vmul.f32 %v1524, %v1755
        %v1885 = vmul.f32 %v1525, %v1759
        %v1886 = vmul.f32 %v1526, %v1763
        %v1887 = vmul.f32 %v1527, %v1767
        %v1888 = vmul.f32 %v1528, %v1711
        %v1889 = vmul.f32 %v1529, %v1715
        %v1890 = vmul.f32 %v1530, %v1719
        %v1891 = vmul.f32 %v1531, %v1723
        %v1892 = vmul.f32 %v1532, %v1727
        %v1893 = vmul.f32 %v1533, %v1731
        %v1894 = vmul.f32 %v1534, %v1735
        %v1895 = vmul.f32 %v1535, %v1739
        %v1896 = vmul.f32 %v1536, %v1743
        %v1897 = vmul.f32 %v1537, %v1747
        %v1898 = vmul.f32 %v1538, %v1751
        %v1899 = vmul.f32 %v1539, %v1755
        %v1900 = vmul.f32 %v1540, %v1759
        %v1901 = vmul.f32 %v1541, %v1763
        %v1902 = vmul.f32 %v1542, %v1767
        %v1903 = vmul.f32 %v1543, %v1711
        %v1904 = vmul.f32 %v1544, %v1715
        %v1905 = vmul.f32 %v1545, %v1719
        %v1906 = vmul.f32 %v1546, %v1723
        %v1907 = vmul.f32 %v1547, %v1727
        %v1908 = vmul.f32 %v1548, %v1731
        %v1909 = vmul.f32 %v1549, %v1735
        %v1910 = vmul.f32 %v1550, %v1739
        %v1911 = vmul.f32 %v1551, %v1743
        %v1912 = vmul.f32 %v1552, %v1747
        %v1913 = vmul.f32 %v1553, %v1751
        %v1914 = vmul.f32 %v1554, %v1755
        %v1915 = vmul.f32 %v1555, %v1759
        %v1916 = vmul.f32 %v1556, %v1763
        %v1917 = vmul.f32 %v1557, %v1767
        %v1918 = vmul.f32 %v1558, %v1711
        %v1919 = vmul.f32 %v1559, %v1715
        %v1920 = vmul.f32 %v1560, %v1719
        %v1921 = vmul.f32 %v1561, %v1723
        %v1922 = vmul.f32 %v1562, %v1727
        %v1923 = vmul.f32 %v1563, %v1731
        %v1924 = vmul.f32 %v1564, %v1735
        %v1925 = vmul.f32 %v1565, %v1739
        %v1926 = vmul.f32 %v1566, %v1743
        %v1927 = vmul.f32 %v1567, %v1747
        %v1928 = vmul.f32 %v1568, %v1751
        %v1929 = vmul.f32 %v1569, %v1755
        %v1930 = vmul.f32 %v1570, %v1759
        %v1931 = vmul.f32 %v1571, %v1763
        %v1932 = vmul.f32 %v1572, %v1767
        %v1933 = vmul.f32 %v1573, %v1711
        %v1934 = vmul.f32 %v1574, %v1715
        %v1935 = vmul.f32 %v1575, %v1719
        %v1936 = vmul.f32 %v1576, %v1723
        %v1937 = vmul.f32 %v1577, %v1727
        %v1938 = vmul.f32 %v1578, %v1731
        %v1939 = vmul.f32 %v1579, %v1735
        %v1940 = vmul.f32 %v1580, %v1739
        %v1941 = vmul.f32 %v1581, %v1743
        %v1942 = vmul.f32 %v1582, %v1747
        %v1943 = vmul.f32 %v1583, %v1751
        %v1944 = vmul.f32 %v1584, %v1755
        %v1945 = vmul.f32 %v1585, %v1759
        %v1946 = vmul.f32 %v1586, %v1763
        %v1947 = vmul.f32 %v1587, %v1767
        %v1948 = vmul.f32 %v1588, %v1711
        %v1949 = vmul.f32 %v1589, %v1715
        %v1950 = vmul.f32 %v1590, %v1719
        %v1951 = vmul.f32 %v1591, %v1723
        %v1952 = vmul.f32 %v1592, %v1727
        %v1953 = vmul.f32 %v1593, %v1731
        %v1954 = vmul.f32 %v1594, %v1735
        %v1955 = vmul.f32 %v1595, %v1739
        %v1956 = vmul.f32 %v1596, %v1743
        %v1957 = vmul.f32 %v1597, %v1747
        %v1958 = vmul.f32 %v1598, %v1751
        %v1959 = vmul.f32 %v1599, %v1755
        %v1960 = vmul.f32 %v1600, %v1759
        %v1961 = vmul.f32 %v1601, %v1763
        %v1962 = vmul.f32 %v1602, %v1767
        %v1963 = vmul.f32 %v1603, %v1711
        %v1964 = vmul.f32 %v1604, %v1715
        %v1965 = vmul.f32 %v1605, %v1719
        %v1966 = vmul.f32 %v1606, %v1723
        %v1967 = vmul.f32 %v1607, %v1727
        %v1968 = vmul.f32 %v1608, %v1731
        %v1969 = vmul.f32 %v1609, %v1735
        %v1970 = vmul.f32 %v1610, %v1739
        %v1971 = vmul.f32 %v1611, %v1743
        %v1972 = vmul.f32 %v1612, %v1747
        %v1973 = vmul.f32 %v1613, %v1751
        %v1974 = vmul.f32 %v1614, %v1755
        %v1975 = vmul.f32 %v1615, %v1759
        %v1976 = vmul.f32 %v1616, %v1763
        %v1977 = vmul.f32 %v1617, %v1767
        %v1978 = vmul.f32 %v1618, %v1711
        %v1979 = vmul.f32 %v1619, %v1715
        %v1980 = vmul.f32 %v1620, %v1719
        %v1981 = vmul.f32 %v1621, %v1723
        %v1982 = vmul.f32 %v1622, %v1727
        %v1983 = vmul.f32 %v1623, %v1731
        %v1984 = vmul.f32 %v1624, %v1735
        %v1985 = vmul.f32 %v1625, %v1739
        %v1986 = vmul.f32 %v1626, %v1743
        %v1987 = vmul.f32 %v1627, %v1747
        %v1988 = vmul.f32 %v1628, %v1751
        %v1989 = vmul.f32 %v1629, %v1755
        %v1990 = vmul.f32 %v1630, %v1759
        %v1991 = vmul.f32 %v1631, %v1763
        %v1992 = vmul.f32 %v1632, %v1767
        %v1993 = vmul.f32 %v1633, %v1711
        %v1994 = vmul.f32 %v1634, %v1715
        %v1995 = vmul.f32 %v1635, %v1719
        %v1996 = vmul.f32 %v1636, %v1723
        %v1997 = vmul.f32 %v1637, %v1727
        %v1998 = vmul.f32 %v1638, %v1731
        %v1999 = vmul.f32 %v1639, %v1735
        %v2000 = vmul.f32 %v1640, %v1739
        %v2001 = vmul.f32 %v1641, %v1743
        %v2002 = vmul.f32 %v1642, %v1747
        %v2003 = vmul.f32 %v1643, %v1751
        %v2004 = vmul.f32 %v1644, %v1755
        %v2005 = vmul.f32 %v1645, %v1759
        %v2006 = vmul.f32 %v1646, %v1763
        %v2007 = vmul.f32 %v1647, %v1767
        %v2008 = vmul.f32 %v1648, %v1711
        %v2009 = vmul.f32 %v1649, %v1715
        %v2010 = vmul.f32 %v1650, %v1719
        %v2011 = vmul.f32 %v1651, %v1723
        %v2012 = vmul.f32 %v1652, %v1727
        %v2013 = vmul.f32 %v1653, %v1731
        %v2014 = vmul.f32 %v1654, %v1735
        %v2015 = vmul.f32 %v1655, %v1739
        %v2016 = vmul.f32 %v1656, %v1743
        %v2017 = vmul.f32 %v1657, %v1747
        %v2018 = vmul.f32 %v1658, %v1751
        %v2019 = vmul.f32 %v1659, %v1755
        %v2020 = vmul.f32 %v1660, %v1759
        %v2021 = vmul.f32 %v1661, %v1763
        %v2022 = vmul.f32 %v1662, %v1767
        %v2023 = vmul.f32 %v1663, %v1711
        %v2024 = vmul.f32 %v1664, %v1715
        %v2025 = vmul.f32 %v1665, %v1719
        %v2026 = vmul.f32 %v1666, %v1723
        %v2027 = vmul.f32 %v1667, %v1727
        %v2028 = vmul.f32 %v1668, %v1731
        %v2029 = vmul.f32 %v1669, %v1735
        %v2030 = vmul.f32 %v1670, %v1739
        %v2031 = vmul.f32 %v1671, %v1743
        %v2032 = vmul.f32 %v1672, %v1747
        %v2033 = vmul.f32 %v1673, %v1751
        %v2034 = vmul.f32 %v1674, %v1755
        %v2035 = vmul.f32 %v1675, %v1759
        %v2036 = vmul.f32 %v1676, %v1763
        %v2037 = vmul.f32 %v1677, %v1767
        %v2038 = vmul.f32 %v1678, %v1711
        %v2039 = vmul.f32 %v1679, %v1715
        %v2040 = vmul.f32 %v1680, %v1719
        %v2041 = vmul.f32 %v1681, %v1723
        %v2042 = vmul.f32 %v1682, %v1727
        %v2043 = vmul.f32 %v1683, %v1731
        %v2044 = vmul.f32 %v1684, %v1735
        %v2045 = vmul.f32 %v1685, %v1739
        %v2046 = vmul.f32 %v1686, %v1743
        %v2047 = vmul.f32 %v1687, %v1747
        %v2048 = vmul.f32 %v1688, %v1751
        %v2049 = vmul.f32 %v1689, %v1755
        %v2050 = vmul.f32 %v1690, %v1759
        %v2051 = vmul.f32 %v1691, %v1763
        %v2052 = vmul.f32 %v1692, %v1767
        %v2053 = vmul.f32 %v1693, %v1711
        %v2054 = vmul.f32 %v1694, %v1715
        %v2055 = vmul.f32 %v1695, %v1719
        %v2056 = vmul.f32 %v1696, %v1723
        %v2057 = vmul.f32 %v1697, %v1727
        %v2058 = vmul.f32 %v1698, %v1731
        %v2059 = vmul.f32 %v1699, %v1735
        %v2060 = vmul.f32 %v1700, %v1739
        %v2061 = vmul.f32 %v1701, %v1743
        %v2062 = vmul.f32 %v1702, %v1747
        %v2063 = vmul.f32 %v1703, %v1751
        %v2064 = vmul.f32 %v1704, %v1755
        %v2065 = vmul.f32 %v1705, %v1759
        %v2066 = vmul.f32 %v1706, %v1763
        %v2067 = vmul.f32 %v1707, %v1767
        %v2068 = vpack.c.bf16 %v1783, %v1768
        %v2069 = vpack.c.bf16 %v1784, %v1769
        %v2070 = vpack.c.bf16 %v1785, %v1770
        %v2071 = vpack.c.bf16 %v1786, %v1771
        %v2072 = vpack.c.bf16 %v1787, %v1772
        %v2073 = vpack.c.bf16 %v1788, %v1773
        %v2074 = vpack.c.bf16 %v1789, %v1774
        %v2075 = vpack.c.bf16 %v1790, %v1775
        %v2076 = vpack.c.bf16 %v1791, %v1776
        %v2077 = vpack.c.bf16 %v1792, %v1777
        %v2078 = vpack.c.bf16 %v1793, %v1778
        %v2079 = vpack.c.bf16 %v1794, %v1779
        %v2080 = vpack.c.bf16 %v1795, %v1780
        %v2081 = vpack.c.bf16 %v1796, %v1781
        %v2082 = vpack.c.bf16 %v1797, %v1782
        %v2083 = vpack.c.bf16 %v1813, %v1798
        %v2084 = vpack.c.bf16 %v1814, %v1799
        %v2085 = vpack.c.bf16 %v1815, %v1800
        %v2086 = vpack.c.bf16 %v1816, %v1801
        %v2087 = vpack.c.bf16 %v1817, %v1802
        %v2088 = vpack.c.bf16 %v1818, %v1803
        %v2089 = vpack.c.bf16 %v1819, %v1804
        %v2090 = vpack.c.bf16 %v1820, %v1805
        %v2091 = vpack.c.bf16 %v1821, %v1806
        %v2092 = vpack.c.bf16 %v1822, %v1807
        %v2093 = vpack.c.bf16 %v1823, %v1808
        %v2094 = vpack.c.bf16 %v1824, %v1809
        %v2095 = vpack.c.bf16 %v1825, %v1810
        %v2096 = vpack.c.bf16 %v1826, %v1811
        %v2097 = vpack.c.bf16 %v1827, %v1812
        %v2098 = vpack.c.bf16 %v1843, %v1828
        %v2099 = vpack.c.bf16 %v1844, %v1829
        %v2100 = vpack.c.bf16 %v1845, %v1830
        %v2101 = vpack.c.bf16 %v1846, %v1831
        %v2102 = vpack.c.bf16 %v1847, %v1832
        %v2103 = vpack.c.bf16 %v1848, %v1833
        %v2104 = vpack.c.bf16 %v1849, %v1834
        %v2105 = vpack.c.bf16 %v1850, %v1835
        %v2106 = vpack.c.bf16 %v1851, %v1836
        %v2107 = vpack.c.bf16 %v1852, %v1837
        %v2108 = vpack.c.bf16 %v1853, %v1838
        %v2109 = vpack.c.bf16 %v1854, %v1839
        %v2110 = vpack.c.bf16 %v1855, %v1840
        %v2111 = vpack.c.bf16 %v1856, %v1841
        %v2112 = vpack.c.bf16 %v1857, %v1842
        %v2113 = vpack.c.bf16 %v1873, %v1858
        %v2114 = vpack.c.bf16 %v1874, %v1859
        %v2115 = vpack.c.bf16 %v1875, %v1860
        %v2116 = vpack.c.bf16 %v1876, %v1861
        %v2117 = vpack.c.bf16 %v1877, %v1862
        %v2118 = vpack.c.bf16 %v1878, %v1863
        %v2119 = vpack.c.bf16 %v1879, %v1864
        %v2120 = vpack.c.bf16 %v1880, %v1865
        %v2121 = vpack.c.bf16 %v1881, %v1866
        %v2122 = vpack.c.bf16 %v1882, %v1867
        %v2123 = vpack.c.bf16 %v1883, %v1868
        %v2124 = vpack.c.bf16 %v1884, %v1869
        %v2125 = vpack.c.bf16 %v1885, %v1870
        %v2126 = vpack.c.bf16 %v1886, %v1871
        %v2127 = vpack.c.bf16 %v1887, %v1872
        %v2128 = vpack.c.bf16 %v1903, %v1888
        %v2129 = vpack.c.bf16 %v1904, %v1889
        %v2130 = vpack.c.bf16 %v1905, %v1890
        %v2131 = vpack.c.bf16 %v1906, %v1891
        %v2132 = vpack.c.bf16 %v1907, %v1892
        %v2133 = vpack.c.bf16 %v1908, %v1893
        %v2134 = vpack.c.bf16 %v1909, %v1894
        %v2135 = vpack.c.bf16 %v1910, %v1895
        %v2136 = vpack.c.bf16 %v1911, %v1896
        %v2137 = vpack.c.bf16 %v1912, %v1897
        %v2138 = vpack.c.bf16 %v1913, %v1898
        %v2139 = vpack.c.bf16 %v1914, %v1899
        %v2140 = vpack.c.bf16 %v1915, %v1900
        %v2141 = vpack.c.bf16 %v1916, %v1901
        %v2142 = vpack.c.bf16 %v1917, %v1902
        %v2143 = vpack.c.bf16 %v1933, %v1918
        %v2144 = vpack.c.bf16 %v1934, %v1919
        %v2145 = vpack.c.bf16 %v1935, %v1920
        %v2146 = vpack.c.bf16 %v1936, %v1921
        %v2147 = vpack.c.bf16 %v1937, %v1922
        %v2148 = vpack.c.bf16 %v1938, %v1923
        %v2149 = vpack.c.bf16 %v1939, %v1924
        %v2150 = vpack.c.bf16 %v1940, %v1925
        %v2151 = vpack.c.bf16 %v1941, %v1926
        %v2152 = vpack.c.bf16 %v1942, %v1927
        %v2153 = vpack.c.bf16 %v1943, %v1928
        %v2154 = vpack.c.bf16 %v1944, %v1929
        %v2155 = vpack.c.bf16 %v1945, %v1930
        %v2156 = vpack.c.bf16 %v1946, %v1931
        %v2157 = vpack.c.bf16 %v1947, %v1932
        %v2158 = vpack.c.bf16 %v1963, %v1948
        %v2159 = vpack.c.bf16 %v1964, %v1949
        %v2160 = vpack.c.bf16 %v1965, %v1950
        %v2161 = vpack.c.bf16 %v1966, %v1951
        %v2162 = vpack.c.bf16 %v1967, %v1952
        %v2163 = vpack.c.bf16 %v1968, %v1953
        %v2164 = vpack.c.bf16 %v1969, %v1954
        %v2165 = vpack.c.bf16 %v1970, %v1955
        %v2166 = vpack.c.bf16 %v1971, %v1956
        %v2167 = vpack.c.bf16 %v1972, %v1957
        %v2168 = vpack.c.bf16 %v1973, %v1958
        %v2169 = vpack.c.bf16 %v1974, %v1959
        %v2170 = vpack.c.bf16 %v1975, %v1960
        %v2171 = vpack.c.bf16 %v1976, %v1961
        %v2172 = vpack.c.bf16 %v1977, %v1962
        %v2173 = vpack.c.bf16 %v1993, %v1978
        %v2174 = vpack.c.bf16 %v1994, %v1979
        %v2175 = vpack.c.bf16 %v1995, %v1980
        %v2176 = vpack.c.bf16 %v1996, %v1981
        %v2177 = vpack.c.bf16 %v1997, %v1982
        %v2178 = vpack.c.bf16 %v1998, %v1983
        %v2179 = vpack.c.bf16 %v1999, %v1984
        %v2180 = vpack.c.bf16 %v2000, %v1985
        %v2181 = vpack.c.bf16 %v2001, %v1986
        %v2182 = vpack.c.bf16 %v2002, %v1987
        %v2183 = vpack.c.bf16 %v2003, %v1988
        %v2184 = vpack.c.bf16 %v2004, %v1989
        %v2185 = vpack.c.bf16 %v2005, %v1990
        %v2186 = vpack.c.bf16 %v2006, %v1991
        %v2187 = vpack.c.bf16 %v2007, %v1992
        %v2188 = vpack.c.bf16 %v2023, %v2008
        %v2189 = vpack.c.bf16 %v2024, %v2009
        %v2190 = vpack.c.bf16 %v2025, %v2010
        %v2191 = vpack.c.bf16 %v2026, %v2011
        %v2192 = vpack.c.bf16 %v2027, %v2012
        %v2193 = vpack.c.bf16 %v2028, %v2013
        %v2194 = vpack.c.bf16 %v2029, %v2014
        %v2195 = vpack.c.bf16 %v2030, %v2015
        %v2196 = vpack.c.bf16 %v2031, %v2016
        %v2197 = vpack.c.bf16 %v2032, %v2017
        %v2198 = vpack.c.bf16 %v2033, %v2018
        %v2199 = vpack.c.bf16 %v2034, %v2019
        %v2200 = vpack.c.bf16 %v2035, %v2020
        %v2201 = vpack.c.bf16 %v2036, %v2021
        %v2202 = vpack.c.bf16 %v2037, %v2022
        %v2203 = vpack.c.bf16 %v2053, %v2038
        %v2204 = vpack.c.bf16 %v2054, %v2039
        %v2205 = vpack.c.bf16 %v2055, %v2040
        %v2206 = vpack.c.bf16 %v2056, %v2041
        %v2207 = vpack.c.bf16 %v2057, %v2042
        %v2208 = vpack.c.bf16 %v2058, %v2043
        %v2209 = vpack.c.bf16 %v2059, %v2044
        %v2210 = vpack.c.bf16 %v2060, %v2045
        %v2211 = vpack.c.bf16 %v2061, %v2046
        %v2212 = vpack.c.bf16 %v2062, %v2047
        %v2213 = vpack.c.bf16 %v2063, %v2048
        %v2214 = vpack.c.bf16 %v2064, %v2049
        %v2215 = vpack.c.bf16 %v2065, %v2050
        %v2216 = vpack.c.bf16 %v2066, %v2051
        %v2217 = vpack.c.bf16 %v2067, %v2052
        %v2218 = vld [vmem:[%s3] sm:$0xff]
        %v2219 = vld [vmem:[%s3 + $0x8] sm:$0xff]
        %v2220 = vld [vmem:[%s3 + $0x10] sm:$0xff]
        %v2221 = vld [vmem:[%s3 + $0x18] sm:$0xff]
        %v2222 = vld [vmem:[%s3 + $0x20] sm:$0xff]
        %v2223 = vld [vmem:[%s3 + $0x28] sm:$0xff]
        %v2224 = vld [vmem:[%s3 + $0x30] sm:$0xff]
        %v2225 = vld [vmem:[%s3 + $0x38] sm:$0xff]
        %v2226 = vld [vmem:[%s3 + $0x40] sm:$0xff]
        %v2227 = vld [vmem:[%s3 + $0x48] sm:$0xff]
        %v2228 = vld [vmem:[%s3 + $0x50] sm:$0xff]
        %v2229 = vld [vmem:[%s3 + $0x58] sm:$0xff]
        %v2230 = vld [vmem:[%s3 + $0x60] sm:$0xff]
        %v2231 = vld [vmem:[%s3 + $0x68] sm:$0xff]
        %v2232 = vld [vmem:[%s3 + $0x70] sm:$0xff]
        %v2233 = vld [vmem:[%s3 + $0x78] sm:$0xff]
        %v2234 = vld [vmem:[%s3 + $0x80] sm:$0xff]
        %v2235 = vld [vmem:[%s3 + $0x88] sm:$0xff]
        %v2236 = vld [vmem:[%s3 + $0x90] sm:$0xff]
        %v2237 = vld [vmem:[%s3 + $0x98] sm:$0xff]
        %v2238 = vld [vmem:[%s3 + $0xa0] sm:$0xff]
        %v2239 = vld [vmem:[%s3 + $0xa8] sm:$0xff]
        %v2240 = vld [vmem:[%s3 + $0xb0] sm:$0xff]
        %v2241 = vld [vmem:[%s3 + $0xb8] sm:$0xff]
        %v2242 = vld [vmem:[%s3 + $0xc0] sm:$0xff]
        %v2243 = vld [vmem:[%s3 + $0xc8] sm:$0xff]
        %v2244 = vld [vmem:[%s3 + $0xd0] sm:$0xff]
        %v2245 = vld [vmem:[%s3 + $0xd8] sm:$0xff]
        %v2246 = vld [vmem:[%s3 + $0xe0] sm:$0xff]
        %v2247 = vld [vmem:[%s3 + $0xe8] sm:$0xff]
        %v2248 = vld [vmem:[%s3 + $0xf0] sm:$0xff]
        %v2249 = vld [vmem:[%s3 + $0xf8] sm:$0xff]
        %v2250 = vld [vmem:[%s3 + $0x100] sm:$0xff]
        %v2251 = vld [vmem:[%s3 + $0x108] sm:$0xff]
        %v2252 = vld [vmem:[%s3 + $0x110] sm:$0xff]
        %v2253 = vld [vmem:[%s3 + $0x118] sm:$0xff]
        %v2254 = vld [vmem:[%s3 + $0x120] sm:$0xff]
        %v2255 = vld [vmem:[%s3 + $0x128] sm:$0xff]
        %v2256 = vld [vmem:[%s3 + $0x130] sm:$0xff]
        %v2257 = vld [vmem:[%s3 + $0x138] sm:$0xff]
        %v2258 = vld [vmem:[%s3 + $0x140] sm:$0xff]
        %v2259 = vld [vmem:[%s3 + $0x148] sm:$0xff]
        %v2260 = vld [vmem:[%s3 + $0x150] sm:$0xff]
        %v2261 = vld [vmem:[%s3 + $0x158] sm:$0xff]
        %v2262 = vld [vmem:[%s3 + $0x160] sm:$0xff]
        %v2263 = vld [vmem:[%s3 + $0x168] sm:$0xff]
        %v2264 = vld [vmem:[%s3 + $0x170] sm:$0xff]
        %v2265 = vld [vmem:[%s3 + $0x178] sm:$0xff]
        %v2266 = vld [vmem:[%s3 + $0x180] sm:$0xff]
        %v2267 = vld [vmem:[%s3 + $0x188] sm:$0xff]
        %v2268 = vld [vmem:[%s3 + $0x190] sm:$0xff]
        %v2269 = vld [vmem:[%s3 + $0x198] sm:$0xff]
        %v2270 = vld [vmem:[%s3 + $0x1a0] sm:$0xff]
        %v2271 = vld [vmem:[%s3 + $0x1a8] sm:$0xff]
        %v2272 = vld [vmem:[%s3 + $0x1b0] sm:$0xff]
        %v2273 = vld [vmem:[%s3 + $0x1b8] sm:$0xff]
        %v2274 = vld [vmem:[%s3 + $0x1c0] sm:$0xff]
        %v2275 = vld [vmem:[%s3 + $0x1c8] sm:$0xff]
        %v2276 = vld [vmem:[%s3 + $0x1d0] sm:$0xff]
        %v2277 = vld [vmem:[%s3 + $0x1d8] sm:$0xff]
        %v2278 = vld [vmem:[%s3 + $0x1e0] sm:$0xff]
        %v2279 = vld [vmem:[%s3 + $0x1e8] sm:$0xff]
        %v2280 = vld [vmem:[%s3 + $0x1f0] sm:$0xff]
        %v2281 = vld [vmem:[%s3 + $0x1f8] sm:$0xff]
        %v2282 = vld [vmem:[%s3 + $0x200] sm:$0xff]
        %v2283 = vld [vmem:[%s3 + $0x208] sm:$0xff]
        %v2284 = vld [vmem:[%s3 + $0x210] sm:$0xff]
        %v2285 = vld [vmem:[%s3 + $0x218] sm:$0xff]
        %v2286 = vld [vmem:[%s3 + $0x220] sm:$0xff]
        %v2287 = vld [vmem:[%s3 + $0x228] sm:$0xff]
        %v2288 = vld [vmem:[%s3 + $0x230] sm:$0xff]
        %v2289 = vld [vmem:[%s3 + $0x238] sm:$0xff]
        %v2290 = vld [vmem:[%s3 + $0x240] sm:$0xff]
        %v2291 = vld [vmem:[%s3 + $0x248] sm:$0xff]
        %v2292 = vld [vmem:[%s3 + $0x250] sm:$0xff]
        %v2293 = vld [vmem:[%s3 + $0x258] sm:$0xff]
        %v2294 = vld [vmem:[%s3 + $0x260] sm:$0xff]
        %v2295 = vld [vmem:[%s3 + $0x268] sm:$0xff]
        %v2296 = vld [vmem:[%s3 + $0x270] sm:$0xff]
        %v2297 = vld [vmem:[%s3 + $0x278] sm:$0xff]
        %v2298 = vld [vmem:[%s3 + $0x280] sm:$0xff]
        %v2299 = vld [vmem:[%s3 + $0x288] sm:$0xff]
        %v2300 = vld [vmem:[%s3 + $0x290] sm:$0xff]
        %v2301 = vld [vmem:[%s3 + $0x298] sm:$0xff]
        %v2302 = vld [vmem:[%s3 + $0x2a0] sm:$0xff]
        %v2303 = vld [vmem:[%s3 + $0x2a8] sm:$0xff]
        %v2304 = vld [vmem:[%s3 + $0x2b0] sm:$0xff]
        %v2305 = vld [vmem:[%s3 + $0x2b8] sm:$0xff]
        %v2306 = vld [vmem:[%s3 + $0x2c0] sm:$0xff]
        %v2307 = vld [vmem:[%s3 + $0x2c8] sm:$0xff]
        %v2308 = vld [vmem:[%s3 + $0x2d0] sm:$0xff]
        %v2309 = vld [vmem:[%s3 + $0x2d8] sm:$0xff]
        %v2310 = vld [vmem:[%s3 + $0x2e0] sm:$0xff]
        %v2311 = vld [vmem:[%s3 + $0x2e8] sm:$0xff]
        %v2312 = vld [vmem:[%s3 + $0x2f0] sm:$0xff]
        %v2313 = vld [vmem:[%s3 + $0x2f8] sm:$0xff]
        %v2314 = vld [vmem:[%s3 + $0x300] sm:$0xff]
        %v2315 = vld [vmem:[%s3 + $0x308] sm:$0xff]
        %v2316 = vld [vmem:[%s3 + $0x310] sm:$0xff]
        %v2317 = vld [vmem:[%s3 + $0x318] sm:$0xff]
        %v2318 = vld [vmem:[%s3 + $0x320] sm:$0xff]
        %v2319 = vld [vmem:[%s3 + $0x328] sm:$0xff]
        %v2320 = vld [vmem:[%s3 + $0x330] sm:$0xff]
        %v2321 = vld [vmem:[%s3 + $0x338] sm:$0xff]
        %v2322 = vld [vmem:[%s3 + $0x340] sm:$0xff]
        %v2323 = vld [vmem:[%s3 + $0x348] sm:$0xff]
        %v2324 = vld [vmem:[%s3 + $0x350] sm:$0xff]
        %v2325 = vld [vmem:[%s3 + $0x358] sm:$0xff]
        %v2326 = vld [vmem:[%s3 + $0x360] sm:$0xff]
        %v2327 = vld [vmem:[%s3 + $0x368] sm:$0xff]
        %v2328 = vld [vmem:[%s3 + $0x370] sm:$0xff]
        %v2329 = vld [vmem:[%s3 + $0x378] sm:$0xff]
        %v2330 = vld [vmem:[%s3 + $0x380] sm:$0xff]
        %v2331 = vld [vmem:[%s3 + $0x388] sm:$0xff]
        %v2332 = vld [vmem:[%s3 + $0x390] sm:$0xff]
        %v2333 = vld [vmem:[%s3 + $0x398] sm:$0xff]
        %v2334 = vld [vmem:[%s3 + $0x3a0] sm:$0xff]
        %v2335 = vld [vmem:[%s3 + $0x3a8] sm:$0xff]
        %v2336 = vld [vmem:[%s3 + $0x3b0] sm:$0xff]
        %v2337 = vld [vmem:[%s3 + $0x3b8] sm:$0xff]
        %v2338 = vld [vmem:[%s3 + $0x3c0] sm:$0xff]
        %v2339 = vld [vmem:[%s3 + $0x3c8] sm:$0xff]
        %v2340 = vld [vmem:[%s3 + $0x3d0] sm:$0xff]
        %v2341 = vld [vmem:[%s3 + $0x3d8] sm:$0xff]
        %v2342 = vld [vmem:[%s3 + $0x3e0] sm:$0xff]
        %v2343 = vld [vmem:[%s3 + $0x3e8] sm:$0xff]
        %v2344 = vld [vmem:[%s3 + $0x3f0] sm:$0xff]
        %v2345 = vld [vmem:[%s3 + $0x3f8] sm:$0xff]
        %v2346 = vld [vmem:[%s3 + $0x400] sm:$0xff]
        %v2347 = vld [vmem:[%s3 + $0x408] sm:$0xff]
        %v2348 = vld [vmem:[%s3 + $0x410] sm:$0xff]
        %v2349 = vld [vmem:[%s3 + $0x418] sm:$0xff]
        %v2350 = vld [vmem:[%s3 + $0x420] sm:$0xff]
        %v2351 = vld [vmem:[%s3 + $0x428] sm:$0xff]
        %v2352 = vld [vmem:[%s3 + $0x430] sm:$0xff]
        %v2353 = vld [vmem:[%s3 + $0x438] sm:$0xff]
        %v2354 = vld [vmem:[%s3 + $0x440] sm:$0xff]
        %v2355 = vld [vmem:[%s3 + $0x448] sm:$0xff]
        %v2356 = vld [vmem:[%s3 + $0x450] sm:$0xff]
        %v2357 = vld [vmem:[%s3 + $0x458] sm:$0xff]
        %v2358 = vld [vmem:[%s3 + $0x460] sm:$0xff]
        %v2359 = vld [vmem:[%s3 + $0x468] sm:$0xff]
        %v2360 = vld [vmem:[%s3 + $0x470] sm:$0xff]
        %v2361 = vld [vmem:[%s3 + $0x478] sm:$0xff]
        %v2362 = vld [vmem:[%s3 + $0x480] sm:$0xff]
        %v2363 = vld [vmem:[%s3 + $0x488] sm:$0xff]
        %v2364 = vld [vmem:[%s3 + $0x490] sm:$0xff]
        %v2365 = vld [vmem:[%s3 + $0x498] sm:$0xff]
        %v2366 = vld [vmem:[%s3 + $0x4a0] sm:$0xff]
        %v2367 = vld [vmem:[%s3 + $0x4a8] sm:$0xff]
        %v2368 = vld [vmem:[%s3 + $0x4b0] sm:$0xff]
        %v2369 = vld [vmem:[%s3 + $0x4b8] sm:$0xff]
        %v2370 = vld [vmem:[%s3 + $0x4c0] sm:$0xff]
        %v2371 = vld [vmem:[%s3 + $0x4c8] sm:$0xff]
        %v2372 = vld [vmem:[%s3 + $0x4d0] sm:$0xff]
        %v2373 = vld [vmem:[%s3 + $0x4d8] sm:$0xff]
        %v2374 = vld [vmem:[%s3 + $0x4e0] sm:$0xff]
        %v2375 = vld [vmem:[%s3 + $0x4e8] sm:$0xff]
        %v2376 = vld [vmem:[%s3 + $0x4f0] sm:$0xff]
        %v2377 = vld [vmem:[%s3 + $0x4f8] sm:$0xff]
        %v2378 = vld [vmem:[%s3 + $0x500] sm:$0xff]
        %v2379 = vld [vmem:[%s3 + $0x508] sm:$0xff]
        %v2380 = vld [vmem:[%s3 + $0x510] sm:$0xff]
        %v2381 = vld [vmem:[%s3 + $0x518] sm:$0xff]
        %v2382 = vld [vmem:[%s3 + $0x520] sm:$0xff]
        %v2383 = vld [vmem:[%s3 + $0x528] sm:$0xff]
        %v2384 = vld [vmem:[%s3 + $0x530] sm:$0xff]
        %v2385 = vld [vmem:[%s3 + $0x538] sm:$0xff]
        %v2386 = vld [vmem:[%s3 + $0x540] sm:$0xff]
        %v2387 = vld [vmem:[%s3 + $0x548] sm:$0xff]
        %v2388 = vld [vmem:[%s3 + $0x550] sm:$0xff]
        %v2389 = vld [vmem:[%s3 + $0x558] sm:$0xff]
        %v2390 = vld [vmem:[%s3 + $0x560] sm:$0xff]
        %v2391 = vld [vmem:[%s3 + $0x568] sm:$0xff]
        %v2392 = vld [vmem:[%s3 + $0x570] sm:$0xff]
        %v2393 = vld [vmem:[%s3 + $0x578] sm:$0xff]
        %v2394 = vld [vmem:[%s3 + $0x580] sm:$0xff]
        %v2395 = vld [vmem:[%s3 + $0x588] sm:$0xff]
        %v2396 = vld [vmem:[%s3 + $0x590] sm:$0xff]
        %v2397 = vld [vmem:[%s3 + $0x598] sm:$0xff]
        %v2398 = vld [vmem:[%s3 + $0x5a0] sm:$0xff]
        %v2399 = vld [vmem:[%s3 + $0x5a8] sm:$0xff]
        %v2400 = vld [vmem:[%s3 + $0x5b0] sm:$0xff]
        %v2401 = vld [vmem:[%s3 + $0x5b8] sm:$0xff]
        %v2402 = vld [vmem:[%s3 + $0x5c0] sm:$0xff]
        %v2403 = vld [vmem:[%s3 + $0x5c8] sm:$0xff]
        %v2404 = vld [vmem:[%s3 + $0x5d0] sm:$0xff]
        %v2405 = vld [vmem:[%s3 + $0x5d8] sm:$0xff]
        %v2406 = vld [vmem:[%s3 + $0x5e0] sm:$0xff]
        %v2407 = vld [vmem:[%s3 + $0x5e8] sm:$0xff]
        %v2408 = vld [vmem:[%s3 + $0x5f0] sm:$0xff]
        %v2409 = vld [vmem:[%s3 + $0x5f8] sm:$0xff]
        %v2410 = vld [vmem:[%s3 + $0x600] sm:$0xff]
        %v2411 = vld [vmem:[%s3 + $0x608] sm:$0xff]
        %v2412 = vld [vmem:[%s3 + $0x610] sm:$0xff]
        %v2413 = vld [vmem:[%s3 + $0x618] sm:$0xff]
        %v2414 = vld [vmem:[%s3 + $0x620] sm:$0xff]
        %v2415 = vld [vmem:[%s3 + $0x628] sm:$0xff]
        %v2416 = vld [vmem:[%s3 + $0x630] sm:$0xff]
        %v2417 = vld [vmem:[%s3 + $0x638] sm:$0xff]
        %v2418 = vld [vmem:[%s3 + $0x640] sm:$0xff]
        %v2419 = vld [vmem:[%s3 + $0x648] sm:$0xff]
        %v2420 = vld [vmem:[%s3 + $0x650] sm:$0xff]
        %v2421 = vld [vmem:[%s3 + $0x658] sm:$0xff]
        %v2422 = vld [vmem:[%s3 + $0x660] sm:$0xff]
        %v2423 = vld [vmem:[%s3 + $0x668] sm:$0xff]
        %v2424 = vld [vmem:[%s3 + $0x670] sm:$0xff]
        %v2425 = vld [vmem:[%s3 + $0x678] sm:$0xff]
        %v2426 = vld [vmem:[%s3 + $0x680] sm:$0xff]
        %v2427 = vld [vmem:[%s3 + $0x688] sm:$0xff]
        %v2428 = vld [vmem:[%s3 + $0x690] sm:$0xff]
        %v2429 = vld [vmem:[%s3 + $0x698] sm:$0xff]
        %v2430 = vld [vmem:[%s3 + $0x6a0] sm:$0xff]
        %v2431 = vld [vmem:[%s3 + $0x6a8] sm:$0xff]
        %v2432 = vld [vmem:[%s3 + $0x6b0] sm:$0xff]
        %v2433 = vld [vmem:[%s3 + $0x6b8] sm:$0xff]
        %v2434 = vld [vmem:[%s3 + $0x6c0] sm:$0xff]
        %v2435 = vld [vmem:[%s3 + $0x6c8] sm:$0xff]
        %v2436 = vld [vmem:[%s3 + $0x6d0] sm:$0xff]
        %v2437 = vld [vmem:[%s3 + $0x6d8] sm:$0xff]
        %v2438 = vld [vmem:[%s3 + $0x6e0] sm:$0xff]
        %v2439 = vld [vmem:[%s3 + $0x6e8] sm:$0xff]
        %v2440 = vld [vmem:[%s3 + $0x6f0] sm:$0xff]
        %v2441 = vld [vmem:[%s3 + $0x6f8] sm:$0xff]
        %v2442 = vld [vmem:[%s3 + $0x700] sm:$0xff]
        %v2443 = vld [vmem:[%s3 + $0x708] sm:$0xff]
        %v2444 = vld [vmem:[%s3 + $0x710] sm:$0xff]
        %v2445 = vld [vmem:[%s3 + $0x718] sm:$0xff]
        %v2446 = vpack.c.bf16 %v2219, %v2218
        %v2447 = vpack.c.bf16 %v2221, %v2220
        %v2448 = vpack.c.bf16 %v2223, %v2222
        %v2449 = vpack.c.bf16 %v2225, %v2224
        %v2450 = vpack.c.bf16 %v2227, %v2226
        %v2451 = vpack.c.bf16 %v2229, %v2228
        %v2452 = vpack.c.bf16 %v2231, %v2230
        %v2453 = vpack.c.bf16 %v2233, %v2232
        %v2454 = vpack.c.bf16 %v2235, %v2234
        %v2455 = vpack.c.bf16 %v2237, %v2236
        %v2456 = vpack.c.bf16 %v2239, %v2238
        %v2457 = vpack.c.bf16 %v2241, %v2240
        %v2458 = vpack.c.bf16 %v2243, %v2242
        %v2459 = vpack.c.bf16 %v2245, %v2244
        %v2460 = vpack.c.bf16 %v2247, %v2246
        %v2461 = vpack.c.bf16 %v2249, %v2248
        %v2462 = vpack.c.bf16 %v2251, %v2250
        %v2463 = vpack.c.bf16 %v2253, %v2252
        %v2464 = vpack.c.bf16 %v2255, %v2254
        %v2465 = vpack.c.bf16 %v2257, %v2256
        %v2466 = vpack.c.bf16 %v2259, %v2258
        %v2467 = vpack.c.bf16 %v2261, %v2260
        %v2468 = vpack.c.bf16 %v2263, %v2262
        %v2469 = vpack.c.bf16 %v2265, %v2264
        %v2470 = vpack.c.bf16 %v2267, %v2266
        %v2471 = vpack.c.bf16 %v2269, %v2268
        %v2472 = vpack.c.bf16 %v2271, %v2270
        %v2473 = vpack.c.bf16 %v2273, %v2272
        %v2474 = vpack.c.bf16 %v2275, %v2274
        %v2475 = vpack.c.bf16 %v2277, %v2276
        %v2476 = vpack.c.bf16 %v2279, %v2278
        %v2477 = vpack.c.bf16 %v2281, %v2280
        %v2478 = vpack.c.bf16 %v2283, %v2282
        %v2479 = vpack.c.bf16 %v2285, %v2284
        %v2480 = vpack.c.bf16 %v2287, %v2286
        %v2481 = vpack.c.bf16 %v2289, %v2288
        %v2482 = vpack.c.bf16 %v2291, %v2290
        %v2483 = vpack.c.bf16 %v2293, %v2292
        %v2484 = vpack.c.bf16 %v2295, %v2294
        %v2485 = vpack.c.bf16 %v2297, %v2296
        %v2486 = vpack.c.bf16 %v2299, %v2298
        %v2487 = vpack.c.bf16 %v2301, %v2300
        %v2488 = vpack.c.bf16 %v2303, %v2302
        %v2489 = vpack.c.bf16 %v2305, %v2304
        %v2490 = vpack.c.bf16 %v2307, %v2306
        %v2491 = vpack.c.bf16 %v2309, %v2308
        %v2492 = vpack.c.bf16 %v2311, %v2310
        %v2493 = vpack.c.bf16 %v2313, %v2312
        %v2494 = vpack.c.bf16 %v2315, %v2314
        %v2495 = vpack.c.bf16 %v2317, %v2316
        %v2496 = vpack.c.bf16 %v2319, %v2318
        %v2497 = vpack.c.bf16 %v2321, %v2320
        %v2498 = vpack.c.bf16 %v2323, %v2322
        %v2499 = vpack.c.bf16 %v2325, %v2324
        %v2500 = vpack.c.bf16 %v2327, %v2326
        %v2501 = vpack.c.bf16 %v2329, %v2328
        %v2502 = vpack.c.bf16 %v2331, %v2330
        %v2503 = vpack.c.bf16 %v2333, %v2332
        %v2504 = vpack.c.bf16 %v2335, %v2334
        %v2505 = vpack.c.bf16 %v2337, %v2336
        %v2506 = vpack.c.bf16 %v2339, %v2338
        %v2507 = vpack.c.bf16 %v2341, %v2340
        %v2508 = vpack.c.bf16 %v2343, %v2342
        %v2509 = vpack.c.bf16 %v2345, %v2344
        %v2510 = vpack.c.bf16 %v2347, %v2346
        %v2511 = vpack.c.bf16 %v2349, %v2348
        %v2512 = vpack.c.bf16 %v2351, %v2350
        %v2513 = vpack.c.bf16 %v2353, %v2352
        %v2514 = vpack.c.bf16 %v2355, %v2354
        %v2515 = vpack.c.bf16 %v2357, %v2356
        %v2516 = vpack.c.bf16 %v2359, %v2358
        %v2517 = vpack.c.bf16 %v2361, %v2360
        %v2518 = vpack.c.bf16 %v2363, %v2362
        %v2519 = vpack.c.bf16 %v2365, %v2364
        %v2520 = vpack.c.bf16 %v2367, %v2366
        %v2521 = vpack.c.bf16 %v2369, %v2368
        %v2522 = vpack.c.bf16 %v2371, %v2370
        %v2523 = vpack.c.bf16 %v2373, %v2372
        %v2524 = vpack.c.bf16 %v2375, %v2374
        %v2525 = vpack.c.bf16 %v2377, %v2376
        %v2526 = vpack.c.bf16 %v2379, %v2378
        %v2527 = vpack.c.bf16 %v2381, %v2380
        %v2528 = vpack.c.bf16 %v2383, %v2382
        %v2529 = vpack.c.bf16 %v2385, %v2384
        %v2530 = vpack.c.bf16 %v2387, %v2386
        %v2531 = vpack.c.bf16 %v2389, %v2388
        %v2532 = vpack.c.bf16 %v2391, %v2390
        %v2533 = vpack.c.bf16 %v2393, %v2392
        %v2534 = vpack.c.bf16 %v2395, %v2394
        %v2535 = vpack.c.bf16 %v2397, %v2396
        %v2536 = vpack.c.bf16 %v2399, %v2398
        %v2537 = vpack.c.bf16 %v2401, %v2400
        %v2538 = vpack.c.bf16 %v2403, %v2402
        %v2539 = vpack.c.bf16 %v2405, %v2404
        %v2540 = vpack.c.bf16 %v2407, %v2406
        %v2541 = vpack.c.bf16 %v2409, %v2408
        %v2542 = vpack.c.bf16 %v2411, %v2410
        %v2543 = vpack.c.bf16 %v2413, %v2412
        %v2544 = vpack.c.bf16 %v2415, %v2414
        %v2545 = vpack.c.bf16 %v2417, %v2416
        %v2546 = vpack.c.bf16 %v2419, %v2418
        %v2547 = vpack.c.bf16 %v2421, %v2420
        %v2548 = vpack.c.bf16 %v2423, %v2422
        %v2549 = vpack.c.bf16 %v2425, %v2424
        %v2550 = vpack.c.bf16 %v2427, %v2426
        %v2551 = vpack.c.bf16 %v2429, %v2428
        %v2552 = vpack.c.bf16 %v2431, %v2430
        %v2553 = vpack.c.bf16 %v2433, %v2432
        %v2554 = vpack.c.bf16 %v2435, %v2434
        %v2555 = vpack.c.bf16 %v2437, %v2436
        %v2556 = vpack.c.bf16 %v2439, %v2438
        %v2557 = vpack.c.bf16 %v2441, %v2440
        %v2558 = vpack.c.bf16 %v2443, %v2442
        %v2559 = vpack.c.bf16 %v2445, %v2444
        %vm2560 = vcmask 261120
        %v2562 = vsel %vm2560, %v2082, 0
        %v2565 = vsel %vm2560, %v2097, 0
        %v2568 = vsel %vm2560, %v2112, 0
        %v2571 = vsel %vm2560, %v2127, 0
        %v2574 = vsel %vm2560, %v2142, 0
        %v2577 = vsel %vm2560, %v2157, 0
        %v2580 = vsel %vm2560, %v2172, 0
        %v2583 = vsel %vm2560, %v2187, 0
        %v2586 = vsel %vm2560, %v2202, 0
        %v2589 = vsel %vm2560, %v2217, 0
        %2591 = vmatprep.subr.bf16.mxu0 0
        %2592 = vmatpush1.bf16.msra.mxu0 %v2453
        %2593 = vmatprep.subr.bf16.mxu0 0
        %2594 = vmatpush1.bf16.msra.mxu0 %v2452
        %2595 = vmatprep.subr.bf16.mxu0 0
        %2596 = vmatpush1.bf16.msra.mxu0 %v2451
        %2597 = vmatprep.subr.bf16.mxu0 0
        %2598 = vmatpush1.bf16.msra.mxu0 %v2450
        %2599 = vmatprep.subr.bf16.mxu0 0
        %2600 = vmatpush1.bf16.msra.mxu0 %v2449
        %2601 = vmatprep.subr.bf16.mxu0 0
        %2602 = vmatpush1.bf16.msra.mxu0 %v2448
        %2603 = vmatprep.subr.bf16.mxu0 0
        %2604 = vmatpush1.bf16.msra.mxu0 %v2447
        %2605 = vmatprep.subr.bf16.mxu0 0
        %2606 = vmatpush1.bf16.msra.mxu0 %v2446
        %2607 = vmatprep.subr.bf16.mxu0 0
        %2608 = vmatpush2.bf16.msra.mxu0 %v2461
        %2609 = vmatprep.subr.bf16.mxu0 0
        %2610 = vmatpush2.bf16.msra.mxu0 %v2460
        %2611 = vmatprep.subr.bf16.mxu0 0
        %2612 = vmatpush2.bf16.msra.mxu0 %v2459
        %2613 = vmatprep.subr.bf16.mxu0 0
        %2614 = vmatpush2.bf16.msra.mxu0 %v2458
        %2615 = vmatprep.subr.bf16.mxu0 0
        %2616 = vmatpush2.bf16.msra.mxu0 %v2457
        %2617 = vmatprep.subr.bf16.mxu0 0
        %2618 = vmatpush2.bf16.msra.mxu0 %v2456
        %2619 = vmatprep.subr.bf16.mxu0 0
        %2620 = vmatpush2.bf16.msra.mxu0 %v2455
        %2621 = vmatprep.subr.bf16.mxu0 0
        %2622 = vmatpush2.bf16.msra.mxu0 %v2454
        %2623 = vmatprep.mubr.bf16.mxu0 %v2069
        %2624 = vmatmul.mubr.bf16.gmra.mxu0 %v2068
        %v2625 = vpop.f32.mrf.mxu0
        %v2626 = vadd.f32 0.0, %v2625
        %v2627 = vpop.f32.mrf.mxu0
        %v2628 = vpop.f32.mrf.mxu0
        %v2629 = vadd.f32 0.0, %v2628
        %v2630 = vpop.f32.mrf.mxu0
        %2631 = vmatprep.mubr.bf16.mxu0 %v2084
        %2632 = vmatmul.mubr.bf16.gmra.mxu0 %v2083
        %v2633 = vpop.f32.mrf.mxu0
        %v2634 = vadd.f32 0.0, %v2633
        %v2635 = vpop.f32.mrf.mxu0
        %v2636 = vpop.f32.mrf.mxu0
        %v2637 = vadd.f32 0.0, %v2636
        %v2638 = vpop.f32.mrf.mxu0
        %2639 = vmatprep.mubr.bf16.mxu0 %v2099
        %2640 = vmatmul.mubr.bf16.gmra.mxu0 %v2098
        %v2641 = vpop.f32.mrf.mxu0
        %v2642 = vadd.f32 0.0, %v2641
        %v2643 = vpop.f32.mrf.mxu0
        %v2644 = vpop.f32.mrf.mxu0
        %v2645 = vadd.f32 0.0, %v2644
        %v2646 = vpop.f32.mrf.mxu0
        %2647 = vmatprep.mubr.bf16.mxu0 %v2114
        %2648 = vmatmul.mubr.bf16.gmra.mxu0 %v2113
        %v2649 = vpop.f32.mrf.mxu0
        %v2650 = vadd.f32 0.0, %v2649
        %v2651 = vpop.f32.mrf.mxu0
        %v2652 = vpop.f32.mrf.mxu0
        %v2653 = vadd.f32 0.0, %v2652
        %v2654 = vpop.f32.mrf.mxu0
        %2655 = vmatprep.mubr.bf16.mxu0 %v2129
        %2656 = vmatmul.mubr.bf16.gmra.mxu0 %v2128
        %v2657 = vpop.f32.mrf.mxu0
        %v2658 = vadd.f32 0.0, %v2657
        %v2659 = vpop.f32.mrf.mxu0
        %v2660 = vpop.f32.mrf.mxu0
        %v2661 = vadd.f32 0.0, %v2660
        %v2662 = vpop.f32.mrf.mxu0
        %2663 = vmatprep.mubr.bf16.mxu0 %v2144
        %2664 = vmatmul.mubr.bf16.gmra.mxu0 %v2143
        %v2665 = vpop.f32.mrf.mxu0
        %v2666 = vadd.f32 0.0, %v2665
        %v2667 = vpop.f32.mrf.mxu0
        %v2668 = vpop.f32.mrf.mxu0
        %v2669 = vadd.f32 0.0, %v2668
        %v2670 = vpop.f32.mrf.mxu0
        %2671 = vmatprep.mubr.bf16.mxu0 %v2159
        %2672 = vmatmul.mubr.bf16.gmra.mxu0 %v2158
        %v2673 = vpop.f32.mrf.mxu0
        %v2674 = vadd.f32 0.0, %v2673
        %v2675 = vpop.f32.mrf.mxu0
        %v2676 = vpop.f32.mrf.mxu0
        %v2677 = vadd.f32 0.0, %v2676
        %v2678 = vpop.f32.mrf.mxu0
        %2679 = vmatprep.mubr.bf16.mxu0 %v2174
        %2680 = vmatmul.mubr.bf16.gmra.mxu0 %v2173
        %v2681 = vpop.f32.mrf.mxu0
        %v2682 = vadd.f32 0.0, %v2681
        %v2683 = vpop.f32.mrf.mxu0
        %v2684 = vpop.f32.mrf.mxu0
        %v2685 = vadd.f32 0.0, %v2684
        %v2686 = vpop.f32.mrf.mxu0
        %2687 = vmatprep.mubr.bf16.mxu0 %v2189
        %2688 = vmatmul.mubr.bf16.gmra.mxu0 %v2188
        %v2689 = vpop.f32.mrf.mxu0
        %v2690 = vadd.f32 0.0, %v2689
        %v2691 = vpop.f32.mrf.mxu0
        %v2692 = vpop.f32.mrf.mxu0
        %v2693 = vadd.f32 0.0, %v2692
        %v2694 = vpop.f32.mrf.mxu0
        %2695 = vmatprep.mubr.bf16.mxu0 %v2204
        %2696 = vmatmul.mubr.bf16.gmra.mxu0 %v2203
        %v2697 = vpop.f32.mrf.mxu0
        %v2698 = vadd.f32 0.0, %v2697
        %v2699 = vpop.f32.mrf.mxu0
        %v2700 = vpop.f32.mrf.mxu0
        %v2701 = vadd.f32 0.0, %v2700
        %v2702 = vpop.f32.mrf.mxu0
        %2703 = vdwg.mxu0
        %2704 = vmatprep.subr.bf16.mxu0 0
        %2705 = vmatpush1.bf16.msra.mxu0 %v2469
        %2706 = vmatprep.subr.bf16.mxu0 0
        %2707 = vmatpush1.bf16.msra.mxu0 %v2468
        %2708 = vmatprep.subr.bf16.mxu0 0
        %2709 = vmatpush1.bf16.msra.mxu0 %v2467
        %2710 = vmatprep.subr.bf16.mxu0 0
        %2711 = vmatpush1.bf16.msra.mxu0 %v2466
        %2712 = vmatprep.subr.bf16.mxu0 0
        %2713 = vmatpush1.bf16.msra.mxu0 %v2465
        %2714 = vmatprep.subr.bf16.mxu0 0
        %2715 = vmatpush1.bf16.msra.mxu0 %v2464
        %2716 = vmatprep.subr.bf16.mxu0 0
        %2717 = vmatpush1.bf16.msra.mxu0 %v2463
        %2718 = vmatprep.subr.bf16.mxu0 0
        %2719 = vmatpush1.bf16.msra.mxu0 %v2462
        %2720 = vmatprep.subr.bf16.mxu0 0
        %2721 = vmatpush2.bf16.msra.mxu0 %v2477
        %2722 = vmatprep.subr.bf16.mxu0 0
        %2723 = vmatpush2.bf16.msra.mxu0 %v2476
        %2724 = vmatprep.subr.bf16.mxu0 0
        %2725 = vmatpush2.bf16.msra.mxu0 %v2475
        %2726 = vmatprep.subr.bf16.mxu0 0
        %2727 = vmatpush2.bf16.msra.mxu0 %v2474
        %2728 = vmatprep.subr.bf16.mxu0 0
        %2729 = vmatpush2.bf16.msra.mxu0 %v2473
        %2730 = vmatprep.subr.bf16.mxu0 0
        %2731 = vmatpush2.bf16.msra.mxu0 %v2472
        %2732 = vmatprep.subr.bf16.mxu0 0
        %2733 = vmatpush2.bf16.msra.mxu0 %v2471
        %2734 = vmatprep.subr.bf16.mxu0 0
        %2735 = vmatpush2.bf16.msra.mxu0 %v2470
        %2736 = vmatprep.mubr.bf16.mxu0 %v2071
        %2737 = vmatmul.mubr.bf16.gmra.mxu0 %v2070
        %v2738 = vpop.f32.mrf.mxu0
        %v2739 = vadd.f32 %v2626, %v2738
        %v2740 = vpop.f32.mrf.mxu0
        %v2741 = vpop.f32.mrf.mxu0
        %v2742 = vadd.f32 %v2629, %v2741
        %v2743 = vpop.f32.mrf.mxu0
        %2744 = vmatprep.mubr.bf16.mxu0 %v2086
        %2745 = vmatmul.mubr.bf16.gmra.mxu0 %v2085
        %v2746 = vpop.f32.mrf.mxu0
        %v2747 = vadd.f32 %v2634, %v2746
        %v2748 = vpop.f32.mrf.mxu0
        %v2749 = vpop.f32.mrf.mxu0
        %v2750 = vadd.f32 %v2637, %v2749
        %v2751 = vpop.f32.mrf.mxu0
        %2752 = vmatprep.mubr.bf16.mxu0 %v2101
        %2753 = vmatmul.mubr.bf16.gmra.mxu0 %v2100
        %v2754 = vpop.f32.mrf.mxu0
        %v2755 = vadd.f32 %v2642, %v2754
        %v2756 = vpop.f32.mrf.mxu0
        %v2757 = vpop.f32.mrf.mxu0
        %v2758 = vadd.f32 %v2645, %v2757
        %v2759 = vpop.f32.mrf.mxu0
        %2760 = vmatprep.mubr.bf16.mxu0 %v2116
        %2761 = vmatmul.mubr.bf16.gmra.mxu0 %v2115
        %v2762 = vpop.f32.mrf.mxu0
        %v2763 = vadd.f32 %v2650, %v2762
        %v2764 = vpop.f32.mrf.mxu0
        %v2765 = vpop.f32.mrf.mxu0
        %v2766 = vadd.f32 %v2653, %v2765
        %v2767 = vpop.f32.mrf.mxu0
        %2768 = vmatprep.mubr.bf16.mxu0 %v2131
        %2769 = vmatmul.mubr.bf16.gmra.mxu0 %v2130
        %v2770 = vpop.f32.mrf.mxu0
        %v2771 = vadd.f32 %v2658, %v2770
        %v2772 = vpop.f32.mrf.mxu0
        %v2773 = vpop.f32.mrf.mxu0
        %v2774 = vadd.f32 %v2661, %v2773
        %v2775 = vpop.f32.mrf.mxu0
        %2776 = vmatprep.mubr.bf16.mxu0 %v2146
        %2777 = vmatmul.mubr.bf16.gmra.mxu0 %v2145
        %v2778 = vpop.f32.mrf.mxu0
        %v2779 = vadd.f32 %v2666, %v2778
        %v2780 = vpop.f32.mrf.mxu0
        %v2781 = vpop.f32.mrf.mxu0
        %v2782 = vadd.f32 %v2669, %v2781
        %v2783 = vpop.f32.mrf.mxu0
        %2784 = vmatprep.mubr.bf16.mxu0 %v2161
        %2785 = vmatmul.mubr.bf16.gmra.mxu0 %v2160
        %v2786 = vpop.f32.mrf.mxu0
        %v2787 = vadd.f32 %v2674, %v2786
        %v2788 = vpop.f32.mrf.mxu0
        %v2789 = vpop.f32.mrf.mxu0
        %v2790 = vadd.f32 %v2677, %v2789
        %v2791 = vpop.f32.mrf.mxu0
        %2792 = vmatprep.mubr.bf16.mxu0 %v2176
        %2793 = vmatmul.mubr.bf16.gmra.mxu0 %v2175
        %v2794 = vpop.f32.mrf.mxu0
        %v2795 = vadd.f32 %v2682, %v2794
        %v2796 = vpop.f32.mrf.mxu0
        %v2797 = vpop.f32.mrf.mxu0
        %v2798 = vadd.f32 %v2685, %v2797
        %v2799 = vpop.f32.mrf.mxu0
        %2800 = vmatprep.mubr.bf16.mxu0 %v2191
        %2801 = vmatmul.mubr.bf16.gmra.mxu0 %v2190
        %v2802 = vpop.f32.mrf.mxu0
        %v2803 = vadd.f32 %v2690, %v2802
        %v2804 = vpop.f32.mrf.mxu0
        %v2805 = vpop.f32.mrf.mxu0
        %v2806 = vadd.f32 %v2693, %v2805
        %v2807 = vpop.f32.mrf.mxu0
        %2808 = vmatprep.mubr.bf16.mxu0 %v2206
        %2809 = vmatmul.mubr.bf16.gmra.mxu0 %v2205
        %v2810 = vpop.f32.mrf.mxu0
        %v2811 = vadd.f32 %v2698, %v2810
        %v2812 = vpop.f32.mrf.mxu0
        %v2813 = vpop.f32.mrf.mxu0
        %v2814 = vadd.f32 %v2701, %v2813
        %v2815 = vpop.f32.mrf.mxu0
        %2816 = vdwg.mxu0
        %2817 = vmatprep.subr.bf16.mxu0 0
        %2818 = vmatpush1.bf16.msra.mxu0 %v2485
        %2819 = vmatprep.subr.bf16.mxu0 0
        %2820 = vmatpush1.bf16.msra.mxu0 %v2484
        %2821 = vmatprep.subr.bf16.mxu0 0
        %2822 = vmatpush1.bf16.msra.mxu0 %v2483
        %2823 = vmatprep.subr.bf16.mxu0 0
        %2824 = vmatpush1.bf16.msra.mxu0 %v2482
        %2825 = vmatprep.subr.bf16.mxu0 0
        %2826 = vmatpush1.bf16.msra.mxu0 %v2481
        %2827 = vmatprep.subr.bf16.mxu0 0
        %2828 = vmatpush1.bf16.msra.mxu0 %v2480
        %2829 = vmatprep.subr.bf16.mxu0 0
        %2830 = vmatpush1.bf16.msra.mxu0 %v2479
        %2831 = vmatprep.subr.bf16.mxu0 0
        %2832 = vmatpush1.bf16.msra.mxu0 %v2478
        %2833 = vmatprep.subr.bf16.mxu0 0
        %2834 = vmatpush2.bf16.msra.mxu0 %v2493
        %2835 = vmatprep.subr.bf16.mxu0 0
        %2836 = vmatpush2.bf16.msra.mxu0 %v2492
        %2837 = vmatprep.subr.bf16.mxu0 0
        %2838 = vmatpush2.bf16.msra.mxu0 %v2491
        %2839 = vmatprep.subr.bf16.mxu0 0
        %2840 = vmatpush2.bf16.msra.mxu0 %v2490
        %2841 = vmatprep.subr.bf16.mxu0 0
        %2842 = vmatpush2.bf16.msra.mxu0 %v2489
        %2843 = vmatprep.subr.bf16.mxu0 0
        %2844 = vmatpush2.bf16.msra.mxu0 %v2488
        %2845 = vmatprep.subr.bf16.mxu0 0
        %2846 = vmatpush2.bf16.msra.mxu0 %v2487
        %2847 = vmatprep.subr.bf16.mxu0 0
        %2848 = vmatpush2.bf16.msra.mxu0 %v2486
        %2849 = vmatprep.mubr.bf16.mxu0 %v2073
        %2850 = vmatmul.mubr.bf16.gmra.mxu0 %v2072
        %v2851 = vpop.f32.mrf.mxu0
        %v2852 = vadd.f32 %v2739, %v2851
        %v2853 = vpop.f32.mrf.mxu0
        %v2854 = vpop.f32.mrf.mxu0
        %v2855 = vadd.f32 %v2742, %v2854
        %v2856 = vpop.f32.mrf.mxu0
        %2857 = vmatprep.mubr.bf16.mxu0 %v2088
        %2858 = vmatmul.mubr.bf16.gmra.mxu0 %v2087
        %v2859 = vpop.f32.mrf.mxu0
        %v2860 = vadd.f32 %v2747, %v2859
        %v2861 = vpop.f32.mrf.mxu0
        %v2862 = vpop.f32.mrf.mxu0
        %v2863 = vadd.f32 %v2750, %v2862
        %v2864 = vpop.f32.mrf.mxu0
        %2865 = vmatprep.mubr.bf16.mxu0 %v2103
        %2866 = vmatmul.mubr.bf16.gmra.mxu0 %v2102
        %v2867 = vpop.f32.mrf.mxu0
        %v2868 = vadd.f32 %v2755, %v2867
        %v2869 = vpop.f32.mrf.mxu0
        %v2870 = vpop.f32.mrf.mxu0
        %v2871 = vadd.f32 %v2758, %v2870
        %v2872 = vpop.f32.mrf.mxu0
        %2873 = vmatprep.mubr.bf16.mxu0 %v2118
        %2874 = vmatmul.mubr.bf16.gmra.mxu0 %v2117
        %v2875 = vpop.f32.mrf.mxu0
        %v2876 = vadd.f32 %v2763, %v2875
        %v2877 = vpop.f32.mrf.mxu0
        %v2878 = vpop.f32.mrf.mxu0
        %v2879 = vadd.f32 %v2766, %v2878
        %v2880 = vpop.f32.mrf.mxu0
        %2881 = vmatprep.mubr.bf16.mxu0 %v2133
        %2882 = vmatmul.mubr.bf16.gmra.mxu0 %v2132
        %v2883 = vpop.f32.mrf.mxu0
        %v2884 = vadd.f32 %v2771, %v2883
        %v2885 = vpop.f32.mrf.mxu0
        %v2886 = vpop.f32.mrf.mxu0
        %v2887 = vadd.f32 %v2774, %v2886
        %v2888 = vpop.f32.mrf.mxu0
        %2889 = vmatprep.mubr.bf16.mxu0 %v2148
        %2890 = vmatmul.mubr.bf16.gmra.mxu0 %v2147
        %v2891 = vpop.f32.mrf.mxu0
        %v2892 = vadd.f32 %v2779, %v2891
        %v2893 = vpop.f32.mrf.mxu0
        %v2894 = vpop.f32.mrf.mxu0
        %v2895 = vadd.f32 %v2782, %v2894
        %v2896 = vpop.f32.mrf.mxu0
        %2897 = vmatprep.mubr.bf16.mxu0 %v2163
        %2898 = vmatmul.mubr.bf16.gmra.mxu0 %v2162
        %v2899 = vpop.f32.mrf.mxu0
        %v2900 = vadd.f32 %v2787, %v2899
        %v2901 = vpop.f32.mrf.mxu0
        %v2902 = vpop.f32.mrf.mxu0
        %v2903 = vadd.f32 %v2790, %v2902
        %v2904 = vpop.f32.mrf.mxu0
        %2905 = vmatprep.mubr.bf16.mxu0 %v2178
        %2906 = vmatmul.mubr.bf16.gmra.mxu0 %v2177
        %v2907 = vpop.f32.mrf.mxu0
        %v2908 = vadd.f32 %v2795, %v2907
        %v2909 = vpop.f32.mrf.mxu0
        %v2910 = vpop.f32.mrf.mxu0
        %v2911 = vadd.f32 %v2798, %v2910
        %v2912 = vpop.f32.mrf.mxu0
        %2913 = vmatprep.mubr.bf16.mxu0 %v2193
        %2914 = vmatmul.mubr.bf16.gmra.mxu0 %v2192
        %v2915 = vpop.f32.mrf.mxu0
        %v2916 = vadd.f32 %v2803, %v2915
        %v2917 = vpop.f32.mrf.mxu0
        %v2918 = vpop.f32.mrf.mxu0
        %v2919 = vadd.f32 %v2806, %v2918
        %v2920 = vpop.f32.mrf.mxu0
        %2921 = vmatprep.mubr.bf16.mxu0 %v2208
        %2922 = vmatmul.mubr.bf16.gmra.mxu0 %v2207
        %v2923 = vpop.f32.mrf.mxu0
        %v2924 = vadd.f32 %v2811, %v2923
        %v2925 = vpop.f32.mrf.mxu0
        %v2926 = vpop.f32.mrf.mxu0
        %v2927 = vadd.f32 %v2814, %v2926
        %v2928 = vpop.f32.mrf.mxu0
        %2929 = vdwg.mxu0
        %2930 = vmatprep.subr.bf16.mxu0 0
        %2931 = vmatpush1.bf16.msra.mxu0 %v2501
        %2932 = vmatprep.subr.bf16.mxu0 0
        %2933 = vmatpush1.bf16.msra.mxu0 %v2500
        %2934 = vmatprep.subr.bf16.mxu0 0
        %2935 = vmatpush1.bf16.msra.mxu0 %v2499
        %2936 = vmatprep.subr.bf16.mxu0 0
        %2937 = vmatpush1.bf16.msra.mxu0 %v2498
        %2938 = vmatprep.subr.bf16.mxu0 0
        %2939 = vmatpush1.bf16.msra.mxu0 %v2497
        %2940 = vmatprep.subr.bf16.mxu0 0
        %2941 = vmatpush1.bf16.msra.mxu0 %v2496
        %2942 = vmatprep.subr.bf16.mxu0 0
        %2943 = vmatpush1.bf16.msra.mxu0 %v2495
        %2944 = vmatprep.subr.bf16.mxu0 0
        %2945 = vmatpush1.bf16.msra.mxu0 %v2494
        %2946 = vmatprep.subr.bf16.mxu0 0
        %2947 = vmatpush2.bf16.msra.mxu0 %v2509
        %2948 = vmatprep.subr.bf16.mxu0 0
        %2949 = vmatpush2.bf16.msra.mxu0 %v2508
        %2950 = vmatprep.subr.bf16.mxu0 0
        %2951 = vmatpush2.bf16.msra.mxu0 %v2507
        %2952 = vmatprep.subr.bf16.mxu0 0
        %2953 = vmatpush2.bf16.msra.mxu0 %v2506
        %2954 = vmatprep.subr.bf16.mxu0 0
        %2955 = vmatpush2.bf16.msra.mxu0 %v2505
        %2956 = vmatprep.subr.bf16.mxu0 0
        %2957 = vmatpush2.bf16.msra.mxu0 %v2504
        %2958 = vmatprep.subr.bf16.mxu0 0
        %2959 = vmatpush2.bf16.msra.mxu0 %v2503
        %2960 = vmatprep.subr.bf16.mxu0 0
        %2961 = vmatpush2.bf16.msra.mxu0 %v2502
        %2962 = vmatprep.mubr.bf16.mxu0 %v2075
        %2963 = vmatmul.mubr.bf16.gmra.mxu0 %v2074
        %v2964 = vpop.f32.mrf.mxu0
        %v2965 = vadd.f32 %v2852, %v2964
        %v2966 = vpop.f32.mrf.mxu0
        %v2967 = vpop.f32.mrf.mxu0
        %v2968 = vadd.f32 %v2855, %v2967
        %v2969 = vpop.f32.mrf.mxu0
        %2970 = vmatprep.mubr.bf16.mxu0 %v2090
        %2971 = vmatmul.mubr.bf16.gmra.mxu0 %v2089
        %v2972 = vpop.f32.mrf.mxu0
        %v2973 = vadd.f32 %v2860, %v2972
        %v2974 = vpop.f32.mrf.mxu0
        %v2975 = vpop.f32.mrf.mxu0
        %v2976 = vadd.f32 %v2863, %v2975
        %v2977 = vpop.f32.mrf.mxu0
        %2978 = vmatprep.mubr.bf16.mxu0 %v2105
        %2979 = vmatmul.mubr.bf16.gmra.mxu0 %v2104
        %v2980 = vpop.f32.mrf.mxu0
        %v2981 = vadd.f32 %v2868, %v2980
        %v2982 = vpop.f32.mrf.mxu0
        %v2983 = vpop.f32.mrf.mxu0
        %v2984 = vadd.f32 %v2871, %v2983
        %v2985 = vpop.f32.mrf.mxu0
        %2986 = vmatprep.mubr.bf16.mxu0 %v2120
        %2987 = vmatmul.mubr.bf16.gmra.mxu0 %v2119
        %v2988 = vpop.f32.mrf.mxu0
        %v2989 = vadd.f32 %v2876, %v2988
        %v2990 = vpop.f32.mrf.mxu0
        %v2991 = vpop.f32.mrf.mxu0
        %v2992 = vadd.f32 %v2879, %v2991
        %v2993 = vpop.f32.mrf.mxu0
        %2994 = vmatprep.mubr.bf16.mxu0 %v2135
        %2995 = vmatmul.mubr.bf16.gmra.mxu0 %v2134
        %v2996 = vpop.f32.mrf.mxu0
        %v2997 = vadd.f32 %v2884, %v2996
        %v2998 = vpop.f32.mrf.mxu0
        %v2999 = vpop.f32.mrf.mxu0
        %v3000 = vadd.f32 %v2887, %v2999
        %v3001 = vpop.f32.mrf.mxu0
        %3002 = vmatprep.mubr.bf16.mxu0 %v2150
        %3003 = vmatmul.mubr.bf16.gmra.mxu0 %v2149
        %v3004 = vpop.f32.mrf.mxu0
        %v3005 = vadd.f32 %v2892, %v3004
        %v3006 = vpop.f32.mrf.mxu0
        %v3007 = vpop.f32.mrf.mxu0
        %v3008 = vadd.f32 %v2895, %v3007
        %v3009 = vpop.f32.mrf.mxu0
        %3010 = vmatprep.mubr.bf16.mxu0 %v2165
        %3011 = vmatmul.mubr.bf16.gmra.mxu0 %v2164
        %v3012 = vpop.f32.mrf.mxu0
        %v3013 = vadd.f32 %v2900, %v3012
        %v3014 = vpop.f32.mrf.mxu0
        %v3015 = vpop.f32.mrf.mxu0
        %v3016 = vadd.f32 %v2903, %v3015
        %v3017 = vpop.f32.mrf.mxu0
        %3018 = vmatprep.mubr.bf16.mxu0 %v2180
        %3019 = vmatmul.mubr.bf16.gmra.mxu0 %v2179
        %v3020 = vpop.f32.mrf.mxu0
        %v3021 = vadd.f32 %v2908, %v3020
        %v3022 = vpop.f32.mrf.mxu0
        %v3023 = vpop.f32.mrf.mxu0
        %v3024 = vadd.f32 %v2911, %v3023
        %v3025 = vpop.f32.mrf.mxu0
        %3026 = vmatprep.mubr.bf16.mxu0 %v2195
        %3027 = vmatmul.mubr.bf16.gmra.mxu0 %v2194
        %v3028 = vpop.f32.mrf.mxu0
        %v3029 = vadd.f32 %v2916, %v3028
        %v3030 = vpop.f32.mrf.mxu0
        %v3031 = vpop.f32.mrf.mxu0
        %v3032 = vadd.f32 %v2919, %v3031
        %v3033 = vpop.f32.mrf.mxu0
        %3034 = vmatprep.mubr.bf16.mxu0 %v2210
        %3035 = vmatmul.mubr.bf16.gmra.mxu0 %v2209
        %v3036 = vpop.f32.mrf.mxu0
        %v3037 = vadd.f32 %v2924, %v3036
        %v3038 = vpop.f32.mrf.mxu0
        %v3039 = vpop.f32.mrf.mxu0
        %v3040 = vadd.f32 %v2927, %v3039
        %v3041 = vpop.f32.mrf.mxu0
        %3042 = vdwg.mxu0
        %3043 = vmatprep.subr.bf16.mxu0 0
        %3044 = vmatpush1.bf16.msra.mxu0 %v2517
        %3045 = vmatprep.subr.bf16.mxu0 0
        %3046 = vmatpush1.bf16.msra.mxu0 %v2516
        %3047 = vmatprep.subr.bf16.mxu0 0
        %3048 = vmatpush1.bf16.msra.mxu0 %v2515
        %3049 = vmatprep.subr.bf16.mxu0 0
        %3050 = vmatpush1.bf16.msra.mxu0 %v2514
        %3051 = vmatprep.subr.bf16.mxu0 0
        %3052 = vmatpush1.bf16.msra.mxu0 %v2513
        %3053 = vmatprep.subr.bf16.mxu0 0
        %3054 = vmatpush1.bf16.msra.mxu0 %v2512
        %3055 = vmatprep.subr.bf16.mxu0 0
        %3056 = vmatpush1.bf16.msra.mxu0 %v2511
        %3057 = vmatprep.subr.bf16.mxu0 0
        %3058 = vmatpush1.bf16.msra.mxu0 %v2510
        %3059 = vmatprep.subr.bf16.mxu0 0
        %3060 = vmatpush2.bf16.msra.mxu0 %v2525
        %3061 = vmatprep.subr.bf16.mxu0 0
        %3062 = vmatpush2.bf16.msra.mxu0 %v2524
        %3063 = vmatprep.subr.bf16.mxu0 0
        %3064 = vmatpush2.bf16.msra.mxu0 %v2523
        %3065 = vmatprep.subr.bf16.mxu0 0
        %3066 = vmatpush2.bf16.msra.mxu0 %v2522
        %3067 = vmatprep.subr.bf16.mxu0 0
        %3068 = vmatpush2.bf16.msra.mxu0 %v2521
        %3069 = vmatprep.subr.bf16.mxu0 0
        %3070 = vmatpush2.bf16.msra.mxu0 %v2520
        %3071 = vmatprep.subr.bf16.mxu0 0
        %3072 = vmatpush2.bf16.msra.mxu0 %v2519
        %3073 = vmatprep.subr.bf16.mxu0 0
        %3074 = vmatpush2.bf16.msra.mxu0 %v2518
        %3075 = vmatprep.mubr.bf16.mxu0 %v2077
        %3076 = vmatmul.mubr.bf16.gmra.mxu0 %v2076
        %v3077 = vpop.f32.mrf.mxu0
        %v3078 = vadd.f32 %v2965, %v3077
        %v3079 = vpop.f32.mrf.mxu0
        %v3080 = vpop.f32.mrf.mxu0
        %v3081 = vadd.f32 %v2968, %v3080
        %v3082 = vpop.f32.mrf.mxu0
        %3083 = vmatprep.mubr.bf16.mxu0 %v2092
        %3084 = vmatmul.mubr.bf16.gmra.mxu0 %v2091
        %v3085 = vpop.f32.mrf.mxu0
        %v3086 = vadd.f32 %v2973, %v3085
        %v3087 = vpop.f32.mrf.mxu0
        %v3088 = vpop.f32.mrf.mxu0
        %v3089 = vadd.f32 %v2976, %v3088
        %v3090 = vpop.f32.mrf.mxu0
        %3091 = vmatprep.mubr.bf16.mxu0 %v2107
        %3092 = vmatmul.mubr.bf16.gmra.mxu0 %v2106
        %v3093 = vpop.f32.mrf.mxu0
        %v3094 = vadd.f32 %v2981, %v3093
        %v3095 = vpop.f32.mrf.mxu0
        %v3096 = vpop.f32.mrf.mxu0
        %v3097 = vadd.f32 %v2984, %v3096
        %v3098 = vpop.f32.mrf.mxu0
        %3099 = vmatprep.mubr.bf16.mxu0 %v2122
        %3100 = vmatmul.mubr.bf16.gmra.mxu0 %v2121
        %v3101 = vpop.f32.mrf.mxu0
        %v3102 = vadd.f32 %v2989, %v3101
        %v3103 = vpop.f32.mrf.mxu0
        %v3104 = vpop.f32.mrf.mxu0
        %v3105 = vadd.f32 %v2992, %v3104
        %v3106 = vpop.f32.mrf.mxu0
        %3107 = vmatprep.mubr.bf16.mxu0 %v2137
        %3108 = vmatmul.mubr.bf16.gmra.mxu0 %v2136
        %v3109 = vpop.f32.mrf.mxu0
        %v3110 = vadd.f32 %v2997, %v3109
        %v3111 = vpop.f32.mrf.mxu0
        %v3112 = vpop.f32.mrf.mxu0
        %v3113 = vadd.f32 %v3000, %v3112
        %v3114 = vpop.f32.mrf.mxu0
        %3115 = vmatprep.mubr.bf16.mxu0 %v2152
        %3116 = vmatmul.mubr.bf16.gmra.mxu0 %v2151
        %v3117 = vpop.f32.mrf.mxu0
        %v3118 = vadd.f32 %v3005, %v3117
        %v3119 = vpop.f32.mrf.mxu0
        %v3120 = vpop.f32.mrf.mxu0
        %v3121 = vadd.f32 %v3008, %v3120
        %v3122 = vpop.f32.mrf.mxu0
        %3123 = vmatprep.mubr.bf16.mxu0 %v2167
        %3124 = vmatmul.mubr.bf16.gmra.mxu0 %v2166
        %v3125 = vpop.f32.mrf.mxu0
        %v3126 = vadd.f32 %v3013, %v3125
        %v3127 = vpop.f32.mrf.mxu0
        %v3128 = vpop.f32.mrf.mxu0
        %v3129 = vadd.f32 %v3016, %v3128
        %v3130 = vpop.f32.mrf.mxu0
        %3131 = vmatprep.mubr.bf16.mxu0 %v2182
        %3132 = vmatmul.mubr.bf16.gmra.mxu0 %v2181
        %v3133 = vpop.f32.mrf.mxu0
        %v3134 = vadd.f32 %v3021, %v3133
        %v3135 = vpop.f32.mrf.mxu0
        %v3136 = vpop.f32.mrf.mxu0
        %v3137 = vadd.f32 %v3024, %v3136
        %v3138 = vpop.f32.mrf.mxu0
        %3139 = vmatprep.mubr.bf16.mxu0 %v2197
        %3140 = vmatmul.mubr.bf16.gmra.mxu0 %v2196
        %v3141 = vpop.f32.mrf.mxu0
        %v3142 = vadd.f32 %v3029, %v3141
        %v3143 = vpop.f32.mrf.mxu0
        %v3144 = vpop.f32.mrf.mxu0
        %v3145 = vadd.f32 %v3032, %v3144
        %v3146 = vpop.f32.mrf.mxu0
        %3147 = vmatprep.mubr.bf16.mxu0 %v2212
        %3148 = vmatmul.mubr.bf16.gmra.mxu0 %v2211
        %v3149 = vpop.f32.mrf.mxu0
        %v3150 = vadd.f32 %v3037, %v3149
        %v3151 = vpop.f32.mrf.mxu0
        %v3152 = vpop.f32.mrf.mxu0
        %v3153 = vadd.f32 %v3040, %v3152
        %v3154 = vpop.f32.mrf.mxu0
        %3155 = vdwg.mxu0
        %3156 = vmatprep.subr.bf16.mxu0 0
        %3157 = vmatpush1.bf16.msra.mxu0 %v2533
        %3158 = vmatprep.subr.bf16.mxu0 0
        %3159 = vmatpush1.bf16.msra.mxu0 %v2532
        %3160 = vmatprep.subr.bf16.mxu0 0
        %3161 = vmatpush1.bf16.msra.mxu0 %v2531
        %3162 = vmatprep.subr.bf16.mxu0 0
        %3163 = vmatpush1.bf16.msra.mxu0 %v2530
        %3164 = vmatprep.subr.bf16.mxu0 0
        %3165 = vmatpush1.bf16.msra.mxu0 %v2529
        %3166 = vmatprep.subr.bf16.mxu0 0
        %3167 = vmatpush1.bf16.msra.mxu0 %v2528
        %3168 = vmatprep.subr.bf16.mxu0 0
        %3169 = vmatpush1.bf16.msra.mxu0 %v2527
        %3170 = vmatprep.subr.bf16.mxu0 0
        %3171 = vmatpush1.bf16.msra.mxu0 %v2526
        %3172 = vmatprep.subr.bf16.mxu0 0
        %3173 = vmatpush2.bf16.msra.mxu0 %v2541
        %3174 = vmatprep.subr.bf16.mxu0 0
        %3175 = vmatpush2.bf16.msra.mxu0 %v2540
        %3176 = vmatprep.subr.bf16.mxu0 0
        %3177 = vmatpush2.bf16.msra.mxu0 %v2539
        %3178 = vmatprep.subr.bf16.mxu0 0
        %3179 = vmatpush2.bf16.msra.mxu0 %v2538
        %3180 = vmatprep.subr.bf16.mxu0 0
        %3181 = vmatpush2.bf16.msra.mxu0 %v2537
        %3182 = vmatprep.subr.bf16.mxu0 0
        %3183 = vmatpush2.bf16.msra.mxu0 %v2536
        %3184 = vmatprep.subr.bf16.mxu0 0
        %3185 = vmatpush2.bf16.msra.mxu0 %v2535
        %3186 = vmatprep.subr.bf16.mxu0 0
        %3187 = vmatpush2.bf16.msra.mxu0 %v2534
        %3188 = vmatprep.mubr.bf16.mxu0 %v2079
        %3189 = vmatmul.mubr.bf16.gmra.mxu0 %v2078
        %v3190 = vpop.f32.mrf.mxu0
        %v3191 = vadd.f32 %v3078, %v3190
        %v3192 = vpop.f32.mrf.mxu0
        %v3193 = vpop.f32.mrf.mxu0
        %v3194 = vadd.f32 %v3081, %v3193
        %v3195 = vpop.f32.mrf.mxu0
        %3196 = vmatprep.mubr.bf16.mxu0 %v2094
        %3197 = vmatmul.mubr.bf16.gmra.mxu0 %v2093
        %v3198 = vpop.f32.mrf.mxu0
        %v3199 = vadd.f32 %v3086, %v3198
        %v3200 = vpop.f32.mrf.mxu0
        %v3201 = vpop.f32.mrf.mxu0
        %v3202 = vadd.f32 %v3089, %v3201
        %v3203 = vpop.f32.mrf.mxu0
        %3204 = vmatprep.mubr.bf16.mxu0 %v2109
        %3205 = vmatmul.mubr.bf16.gmra.mxu0 %v2108
        %v3206 = vpop.f32.mrf.mxu0
        %v3207 = vadd.f32 %v3094, %v3206
        %v3208 = vpop.f32.mrf.mxu0
        %v3209 = vpop.f32.mrf.mxu0
        %v3210 = vadd.f32 %v3097, %v3209
        %v3211 = vpop.f32.mrf.mxu0
        %3212 = vmatprep.mubr.bf16.mxu0 %v2124
        %3213 = vmatmul.mubr.bf16.gmra.mxu0 %v2123
        %v3214 = vpop.f32.mrf.mxu0
        %v3215 = vadd.f32 %v3102, %v3214
        %v3216 = vpop.f32.mrf.mxu0
        %v3217 = vpop.f32.mrf.mxu0
        %v3218 = vadd.f32 %v3105, %v3217
        %v3219 = vpop.f32.mrf.mxu0
        %3220 = vmatprep.mubr.bf16.mxu0 %v2139
        %3221 = vmatmul.mubr.bf16.gmra.mxu0 %v2138
        %v3222 = vpop.f32.mrf.mxu0
        %v3223 = vadd.f32 %v3110, %v3222
        %v3224 = vpop.f32.mrf.mxu0
        %v3225 = vpop.f32.mrf.mxu0
        %v3226 = vadd.f32 %v3113, %v3225
        %v3227 = vpop.f32.mrf.mxu0
        %3228 = vmatprep.mubr.bf16.mxu0 %v2154
        %3229 = vmatmul.mubr.bf16.gmra.mxu0 %v2153
        %v3230 = vpop.f32.mrf.mxu0
        %v3231 = vadd.f32 %v3118, %v3230
        %v3232 = vpop.f32.mrf.mxu0
        %v3233 = vpop.f32.mrf.mxu0
        %v3234 = vadd.f32 %v3121, %v3233
        %v3235 = vpop.f32.mrf.mxu0
        %3236 = vmatprep.mubr.bf16.mxu0 %v2169
        %3237 = vmatmul.mubr.bf16.gmra.mxu0 %v2168
        %v3238 = vpop.f32.mrf.mxu0
        %v3239 = vadd.f32 %v3126, %v3238
        %v3240 = vpop.f32.mrf.mxu0
        %v3241 = vpop.f32.mrf.mxu0
        %v3242 = vadd.f32 %v3129, %v3241
        %v3243 = vpop.f32.mrf.mxu0
        %3244 = vmatprep.mubr.bf16.mxu0 %v2184
        %3245 = vmatmul.mubr.bf16.gmra.mxu0 %v2183
        %v3246 = vpop.f32.mrf.mxu0
        %v3247 = vadd.f32 %v3134, %v3246
        %v3248 = vpop.f32.mrf.mxu0
        %v3249 = vpop.f32.mrf.mxu0
        %v3250 = vadd.f32 %v3137, %v3249
        %v3251 = vpop.f32.mrf.mxu0
        %3252 = vmatprep.mubr.bf16.mxu0 %v2199
        %3253 = vmatmul.mubr.bf16.gmra.mxu0 %v2198
        %v3254 = vpop.f32.mrf.mxu0
        %v3255 = vadd.f32 %v3142, %v3254
        %v3256 = vpop.f32.mrf.mxu0
        %v3257 = vpop.f32.mrf.mxu0
        %v3258 = vadd.f32 %v3145, %v3257
        %v3259 = vpop.f32.mrf.mxu0
        %3260 = vmatprep.mubr.bf16.mxu0 %v2214
        %3261 = vmatmul.mubr.bf16.gmra.mxu0 %v2213
        %v3262 = vpop.f32.mrf.mxu0
        %v3263 = vadd.f32 %v3150, %v3262
        %v3264 = vpop.f32.mrf.mxu0
        %v3265 = vpop.f32.mrf.mxu0
        %v3266 = vadd.f32 %v3153, %v3265
        %v3267 = vpop.f32.mrf.mxu0
        %3268 = vdwg.mxu0
        %3269 = vmatprep.subr.bf16.mxu0 0
        %3270 = vmatpush1.bf16.msra.mxu0 %v2549
        %3271 = vmatprep.subr.bf16.mxu0 0
        %3272 = vmatpush1.bf16.msra.mxu0 %v2548
        %3273 = vmatprep.subr.bf16.mxu0 0
        %3274 = vmatpush1.bf16.msra.mxu0 %v2547
        %3275 = vmatprep.subr.bf16.mxu0 0
        %3276 = vmatpush1.bf16.msra.mxu0 %v2546
        %3277 = vmatprep.subr.bf16.mxu0 0
        %3278 = vmatpush1.bf16.msra.mxu0 %v2545
        %3279 = vmatprep.subr.bf16.mxu0 0
        %3280 = vmatpush1.bf16.msra.mxu0 %v2544
        %3281 = vmatprep.subr.bf16.mxu0 0
        %3282 = vmatpush1.bf16.msra.mxu0 %v2543
        %3283 = vmatprep.subr.bf16.mxu0 0
        %3284 = vmatpush1.bf16.msra.mxu0 %v2542
        %3285 = vmatprep.subr.bf16.mxu0 0
        %3286 = vmatpush2.bf16.msra.mxu0 %v2557
        %3287 = vmatprep.subr.bf16.mxu0 0
        %3288 = vmatpush2.bf16.msra.mxu0 %v2556
        %3289 = vmatprep.subr.bf16.mxu0 0
        %3290 = vmatpush2.bf16.msra.mxu0 %v2555
        %3291 = vmatprep.subr.bf16.mxu0 0
        %3292 = vmatpush2.bf16.msra.mxu0 %v2554
        %3293 = vmatprep.subr.bf16.mxu0 0
        %3294 = vmatpush2.bf16.msra.mxu0 %v2553
        %3295 = vmatprep.subr.bf16.mxu0 0
        %3296 = vmatpush2.bf16.msra.mxu0 %v2552
        %3297 = vmatprep.subr.bf16.mxu0 0
        %3298 = vmatpush2.bf16.msra.mxu0 %v2551
        %3299 = vmatprep.subr.bf16.mxu0 0
        %3300 = vmatpush2.bf16.msra.mxu0 %v2550
        %3301 = vmatprep.mubr.bf16.mxu0 %v2081
        %3302 = vmatmul.mubr.bf16.gmra.mxu0 %v2080
        %v3303 = vpop.f32.mrf.mxu0
        %v3304 = vadd.f32 %v3191, %v3303
        %v3305 = vpop.f32.mrf.mxu0
        %v3306 = vpop.f32.mrf.mxu0
        %v3307 = vadd.f32 %v3194, %v3306
        %v3308 = vpop.f32.mrf.mxu0
        %3309 = vmatprep.mubr.bf16.mxu0 %v2096
        %3310 = vmatmul.mubr.bf16.gmra.mxu0 %v2095
        %v3311 = vpop.f32.mrf.mxu0
        %v3312 = vadd.f32 %v3199, %v3311
        %v3313 = vpop.f32.mrf.mxu0
        %v3314 = vpop.f32.mrf.mxu0
        %v3315 = vadd.f32 %v3202, %v3314
        %v3316 = vpop.f32.mrf.mxu0
        %3317 = vmatprep.mubr.bf16.mxu0 %v2111
        %3318 = vmatmul.mubr.bf16.gmra.mxu0 %v2110
        %v3319 = vpop.f32.mrf.mxu0
        %v3320 = vadd.f32 %v3207, %v3319
        %v3321 = vpop.f32.mrf.mxu0
        %v3322 = vpop.f32.mrf.mxu0
        %v3323 = vadd.f32 %v3210, %v3322
        %v3324 = vpop.f32.mrf.mxu0
        %3325 = vmatprep.mubr.bf16.mxu0 %v2126
        %3326 = vmatmul.mubr.bf16.gmra.mxu0 %v2125
        %v3327 = vpop.f32.mrf.mxu0
        %v3328 = vadd.f32 %v3215, %v3327
        %v3329 = vpop.f32.mrf.mxu0
        %v3330 = vpop.f32.mrf.mxu0
        %v3331 = vadd.f32 %v3218, %v3330
        %v3332 = vpop.f32.mrf.mxu0
        %3333 = vmatprep.mubr.bf16.mxu0 %v2141
        %3334 = vmatmul.mubr.bf16.gmra.mxu0 %v2140
        %v3335 = vpop.f32.mrf.mxu0
        %v3336 = vadd.f32 %v3223, %v3335
        %v3337 = vpop.f32.mrf.mxu0
        %v3338 = vpop.f32.mrf.mxu0
        %v3339 = vadd.f32 %v3226, %v3338
        %v3340 = vpop.f32.mrf.mxu0
        %3341 = vmatprep.mubr.bf16.mxu0 %v2156
        %3342 = vmatmul.mubr.bf16.gmra.mxu0 %v2155
        %v3343 = vpop.f32.mrf.mxu0
        %v3344 = vadd.f32 %v3231, %v3343
        %v3345 = vpop.f32.mrf.mxu0
        %v3346 = vpop.f32.mrf.mxu0
        %v3347 = vadd.f32 %v3234, %v3346
        %v3348 = vpop.f32.mrf.mxu0
        %3349 = vmatprep.mubr.bf16.mxu0 %v2171
        %3350 = vmatmul.mubr.bf16.gmra.mxu0 %v2170
        %v3351 = vpop.f32.mrf.mxu0
        %v3352 = vadd.f32 %v3239, %v3351
        %v3353 = vpop.f32.mrf.mxu0
        %v3354 = vpop.f32.mrf.mxu0
        %v3355 = vadd.f32 %v3242, %v3354
        %v3356 = vpop.f32.mrf.mxu0
        %3357 = vmatprep.mubr.bf16.mxu0 %v2186
        %3358 = vmatmul.mubr.bf16.gmra.mxu0 %v2185
        %v3359 = vpop.f32.mrf.mxu0
        %v3360 = vadd.f32 %v3247, %v3359
        %v3361 = vpop.f32.mrf.mxu0
        %v3362 = vpop.f32.mrf.mxu0
        %v3363 = vadd.f32 %v3250, %v3362
        %v3364 = vpop.f32.mrf.mxu0
        %3365 = vmatprep.mubr.bf16.mxu0 %v2201
        %3366 = vmatmul.mubr.bf16.gmra.mxu0 %v2200
        %v3367 = vpop.f32.mrf.mxu0
        %v3368 = vadd.f32 %v3255, %v3367
        %v3369 = vpop.f32.mrf.mxu0
        %v3370 = vpop.f32.mrf.mxu0
        %v3371 = vadd.f32 %v3258, %v3370
        %v3372 = vpop.f32.mrf.mxu0
        %3373 = vmatprep.mubr.bf16.mxu0 %v2216
        %3374 = vmatmul.mubr.bf16.gmra.mxu0 %v2215
        %v3375 = vpop.f32.mrf.mxu0
        %v3376 = vadd.f32 %v3263, %v3375
        %v3377 = vpop.f32.mrf.mxu0
        %v3378 = vpop.f32.mrf.mxu0
        %v3379 = vadd.f32 %v3266, %v3378
        %v3380 = vpop.f32.mrf.mxu0
        %3381 = vdwg.mxu0
        %3382 = vmatprep.subr.bf16.mxu0 0
        %3383 = vmatpush1.bf16.msra.mxu0 0
        %3384 = vmatprep.subr.bf16.mxu0 0
        %3385 = vmatpush1.bf16.msra.mxu0 0
        %3386 = vmatprep.subr.bf16.mxu0 0
        %3387 = vmatpush1.bf16.msra.mxu0 0
        %3388 = vmatprep.subr.bf16.mxu0 0
        %3389 = vmatpush1.bf16.msra.mxu0 0
        %3390 = vmatprep.subr.bf16.mxu0 0
        %3391 = vmatpush1.bf16.msra.mxu0 0
        %3392 = vmatprep.subr.bf16.mxu0 0
        %3393 = vmatpush1.bf16.msra.mxu0 0
        %3394 = vmatprep.subr.bf16.mxu0 0
        %3395 = vmatpush1.bf16.msra.mxu0 %v2559
        %3396 = vmatprep.subr.bf16.mxu0 0
        %3397 = vmatpush1.bf16.msra.mxu0 %v2558
        %3398 = vmatprep.subr.bf16.mxu0 0
        %3399 = vmatpush2.bf16.msra.mxu0 0
        %3400 = vmatprep.subr.bf16.mxu0 0
        %3401 = vmatpush2.bf16.msra.mxu0 0
        %3402 = vmatprep.subr.bf16.mxu0 0
        %3403 = vmatpush2.bf16.msra.mxu0 0
        %3404 = vmatprep.subr.bf16.mxu0 0
        %3405 = vmatpush2.bf16.msra.mxu0 0
        %3406 = vmatprep.subr.bf16.mxu0 0
        %3407 = vmatpush2.bf16.msra.mxu0 0
        %3408 = vmatprep.subr.bf16.mxu0 0
        %3409 = vmatpush2.bf16.msra.mxu0 0
        %3410 = vmatprep.subr.bf16.mxu0 0
        %3411 = vmatpush2.bf16.msra.mxu0 0
        %3412 = vmatprep.subr.bf16.mxu0 0
        %3413 = vmatpush2.bf16.msra.mxu0 0
        %3414 = vmatprep.mubr.bf16.mxu0 0
        %3415 = vmatmul.mubr.bf16.gmra.mxu0 %v2562
        %v3416 = vpop.f32.mrf.mxu0
        %v3417 = vadd.f32 %v3304, %v3416
        %v3418 = vpop.f32.mrf.mxu0
        %v3419 = vpop.f32.mrf.mxu0
        %v3420 = vadd.f32 %v3307, %v3419
        %v3421 = vpop.f32.mrf.mxu0
        %3422 = vmatprep.mubr.bf16.mxu0 0
        %3423 = vmatmul.mubr.bf16.gmra.mxu0 %v2565
        %v3424 = vpop.f32.mrf.mxu0
        %v3425 = vadd.f32 %v3312, %v3424
        %v3426 = vpop.f32.mrf.mxu0
        %v3427 = vpop.f32.mrf.mxu0
        %v3428 = vadd.f32 %v3315, %v3427
        %v3429 = vpop.f32.mrf.mxu0
        %3430 = vmatprep.mubr.bf16.mxu0 0
        %3431 = vmatmul.mubr.bf16.gmra.mxu0 %v2568
        %v3432 = vpop.f32.mrf.mxu0
        %v3433 = vadd.f32 %v3320, %v3432
        %v3434 = vpop.f32.mrf.mxu0
        %v3435 = vpop.f32.mrf.mxu0
        %v3436 = vadd.f32 %v3323, %v3435
        %v3437 = vpop.f32.mrf.mxu0
        %3438 = vmatprep.mubr.bf16.mxu0 0
        %3439 = vmatmul.mubr.bf16.gmra.mxu0 %v2571
        %v3440 = vpop.f32.mrf.mxu0
        %v3441 = vadd.f32 %v3328, %v3440
        %v3442 = vpop.f32.mrf.mxu0
        %v3443 = vpop.f32.mrf.mxu0
        %v3444 = vadd.f32 %v3331, %v3443
        %v3445 = vpop.f32.mrf.mxu0
        %3446 = vmatprep.mubr.bf16.mxu0 0
        %3447 = vmatmul.mubr.bf16.gmra.mxu0 %v2574
        %v3448 = vpop.f32.mrf.mxu0
        %v3449 = vadd.f32 %v3336, %v3448
        %v3450 = vpop.f32.mrf.mxu0
        %v3451 = vpop.f32.mrf.mxu0
        %v3452 = vadd.f32 %v3339, %v3451
        %v3453 = vpop.f32.mrf.mxu0
        %3454 = vmatprep.mubr.bf16.mxu0 0
        %3455 = vmatmul.mubr.bf16.gmra.mxu0 %v2577
        %v3456 = vpop.f32.mrf.mxu0
        %v3457 = vadd.f32 %v3344, %v3456
        %v3458 = vpop.f32.mrf.mxu0
        %v3459 = vpop.f32.mrf.mxu0
        %v3460 = vadd.f32 %v3347, %v3459
        %v3461 = vpop.f32.mrf.mxu0
        %3462 = vmatprep.mubr.bf16.mxu0 0
        %3463 = vmatmul.mubr.bf16.gmra.mxu0 %v2580
        %v3464 = vpop.f32.mrf.mxu0
        %v3465 = vadd.f32 %v3352, %v3464
        %v3466 = vpop.f32.mrf.mxu0
        %v3467 = vpop.f32.mrf.mxu0
        %v3468 = vadd.f32 %v3355, %v3467
        %v3469 = vpop.f32.mrf.mxu0
        %3470 = vmatprep.mubr.bf16.mxu0 0
        %3471 = vmatmul.mubr.bf16.gmra.mxu0 %v2583
        %v3472 = vpop.f32.mrf.mxu0
        %v3473 = vadd.f32 %v3360, %v3472
        %v3474 = vpop.f32.mrf.mxu0
        %v3475 = vpop.f32.mrf.mxu0
        %v3476 = vadd.f32 %v3363, %v3475
        %v3477 = vpop.f32.mrf.mxu0
        %3478 = vmatprep.mubr.bf16.mxu0 0
        %3479 = vmatmul.mubr.bf16.gmra.mxu0 %v2586
        %v3480 = vpop.f32.mrf.mxu0
        %v3481 = vadd.f32 %v3368, %v3480
        %v3482 = vpop.f32.mrf.mxu0
        %v3483 = vpop.f32.mrf.mxu0
        %v3484 = vadd.f32 %v3371, %v3483
        %v3485 = vpop.f32.mrf.mxu0
        %3486 = vmatprep.mubr.bf16.mxu0 0
        %3487 = vmatmul.mubr.bf16.gmra.mxu0 %v2589
        %v3488 = vpop.f32.mrf.mxu0
        %v3489 = vadd.f32 %v3376, %v3488
        %v3490 = vpop.f32.mrf.mxu0
        %v3491 = vpop.f32.mrf.mxu0
        %v3492 = vadd.f32 %v3379, %v3491
        %v3493 = vpop.f32.mrf.mxu0
        %3494 = vdwg.mxu0
        %vm3495 = vcmask 400384
        %3496 = vst.msk [vmem:[%s231] sm:$0xff] %vm3495, %v3417
        %3497 = vst.msk [vmem:[%s231 + $0x8] sm:$0xff] %vm3495, %v3420
        %3498 = vst.msk [vmem:[%s231 + $0x10] sm:$0xff] %vm3495, %v3425
        %3499 = vst.msk [vmem:[%s231 + $0x18] sm:$0xff] %vm3495, %v3428
        %3500 = vst.msk [vmem:[%s231 + $0x20] sm:$0xff] %vm3495, %v3433
        %3501 = vst.msk [vmem:[%s231 + $0x28] sm:$0xff] %vm3495, %v3436
        %3502 = vst.msk [vmem:[%s231 + $0x30] sm:$0xff] %vm3495, %v3441
        %3503 = vst.msk [vmem:[%s231 + $0x38] sm:$0xff] %vm3495, %v3444
        %3504 = vst.msk [vmem:[%s231 + $0x40] sm:$0xff] %vm3495, %v3449
        %3505 = vst.msk [vmem:[%s231 + $0x48] sm:$0xff] %vm3495, %v3452
        %3506 = vst.msk [vmem:[%s231 + $0x50] sm:$0xff] %vm3495, %v3457
        %3507 = vst.msk [vmem:[%s231 + $0x58] sm:$0xff] %vm3495, %v3460
        %3508 = vst.msk [vmem:[%s231 + $0x60] sm:$0xff] %vm3495, %v3465
        %3509 = vst.msk [vmem:[%s231 + $0x68] sm:$0xff] %vm3495, %v3468
        %3510 = vst.msk [vmem:[%s231 + $0x70] sm:$0xff] %vm3495, %v3473
        %3511 = vst.msk [vmem:[%s231 + $0x78] sm:$0xff] %vm3495, %v3476
        %3512 = vst.msk [vmem:[%s231 + $0x80] sm:$0xff] %vm3495, %v3481
        %3513 = vst.msk [vmem:[%s231 + $0x88] sm:$0xff] %vm3495, %v3484
        %3514 = vst.msk [vmem:[%s231 + $0x90] sm:$0xff] %vm3495, %v3489
        %3515 = vst.msk [vmem:[%s231 + $0x98] sm:$0xff] %vm3495, %v3492
        %s3516 = sand.u32 %s134, 1
        %s3517 = sand.u32 %s134, 1
        %s3518 = smul.addr %s3517, 160
        %s3519 = scalar_lea.vmem [#allocation2], %s3518
        // Predicated region
        $region41: #{se_block.1} parent=39 // pred_check
          %p3520 = pneg %p144
        $region42: #{se_block.1} parent=39 // pred_check_branch
          %3522 = sbr.rel (%p3520) target = $region44
        $region43: #{se_block.1} parent=39 // pred_region
          %s3523 = smul.u32 20, %s16
          %s3524 = ssub.s32 38, %s3523
          %p3525 = scmp.lt.s32.totalorder %s3524, 20
          %s3526 = scalar_select %p3525, %s3524, 20
          %s3527 = smul.u32 128, %s3526
          %p3528 = scmp.ne.s32.totalorder 0, %s3527
          %s3529 = smul.addr %s3523, 8
          %s3530 = scalar_lea.vmem %s5, %s3529
          // Predicated region
          $region45: #{se_block.1} parent=43 // pred_check
            %p3531 = pneg %p3528
          $region46: #{se_block.1} parent=43 // pred_check_branch
            %3533 = sbr.rel (%p3531) target = $region48
          $region47: #{se_block.1} parent=43 // pred_region
            // Predicated region
            $region49: #{se_block.1} parent=47 // pred_check
              _
            $region50: #{se_block.1} parent=47 // pred_check_branch
              %3535 = sbr.rel (0) target = $region52
            $region51: #{se_block.1} parent=47 // pred_region
              // Predicated region
              $region71: #{se_block.1} parent=51 // pred_check
                _
              $region72: #{se_block.1} parent=51 // pred_check_branch
                %3624 = sbr.rel (0) target = $region74
              $region73: #{se_block.1} parent=51 // pred_region
                %s3625 = sdiv.u32.pop %s3526, 20
                %s3626 = srem.u32.pop %s3526, 20
                // While loop
                $region75: #{se_block.1} parent=73 // loop_pre_header
                  _
                $region76: #{se_block.1} parent=73 // loop_header
                  %s3628 = sphi 0, %s3630
                  %p3629 = scmp.ge.s32.totalorder %s3628, %s3625
                  %s3633 = sphi 0, %s3678
                  %s3634 = sphi %s3519, %s3681
                  %s3635 = sphi %s3530, %s3682
                $region77: #{se_block.1} parent=73 // loop_header_branch
                  %3632 = sbr.rel (%p3629) target = $region81
                $region78: #{se_block.1} parent=73 // loop_body
                  %v3636 = vld [vmem:[%s3634] sm:$0xff]
                  %3637 = vst [vmem:[%s3635] sm:$0xff] %v3636
                  %v3638 = vld [vmem:[%s3634 + $0x8] sm:$0xff]
                  %3639 = vst [vmem:[%s3635 + $0x8] sm:$0xff] %v3638
                  %v3640 = vld [vmem:[%s3634 + $0x10] sm:$0xff]
                  %3641 = vst [vmem:[%s3635 + $0x10] sm:$0xff] %v3640
                  %v3642 = vld [vmem:[%s3634 + $0x18] sm:$0xff]
                  %3643 = vst [vmem:[%s3635 + $0x18] sm:$0xff] %v3642
                  %v3644 = vld [vmem:[%s3634 + $0x20] sm:$0xff]
                  %3645 = vst [vmem:[%s3635 + $0x20] sm:$0xff] %v3644
                  %v3646 = vld [vmem:[%s3634 + $0x28] sm:$0xff]
                  %3647 = vst [vmem:[%s3635 + $0x28] sm:$0xff] %v3646
                  %v3648 = vld [vmem:[%s3634 + $0x30] sm:$0xff]
                  %3649 = vst [vmem:[%s3635 + $0x30] sm:$0xff] %v3648
                  %v3650 = vld [vmem:[%s3634 + $0x38] sm:$0xff]
                  %3651 = vst [vmem:[%s3635 + $0x38] sm:$0xff] %v3650
                  %v3652 = vld [vmem:[%s3634 + $0x40] sm:$0xff]
                  %3653 = vst [vmem:[%s3635 + $0x40] sm:$0xff] %v3652
                  %v3654 = vld [vmem:[%s3634 + $0x48] sm:$0xff]
                  %3655 = vst [vmem:[%s3635 + $0x48] sm:$0xff] %v3654
                  %v3656 = vld [vmem:[%s3634 + $0x50] sm:$0xff]
                  %3657 = vst [vmem:[%s3635 + $0x50] sm:$0xff] %v3656
                  %v3658 = vld [vmem:[%s3634 + $0x58] sm:$0xff]
                  %3659 = vst [vmem:[%s3635 + $0x58] sm:$0xff] %v3658
                  %v3660 = vld [vmem:[%s3634 + $0x60] sm:$0xff]
                  %3661 = vst [vmem:[%s3635 + $0x60] sm:$0xff] %v3660
                  %v3662 = vld [vmem:[%s3634 + $0x68] sm:$0xff]
                  %3663 = vst [vmem:[%s3635 + $0x68] sm:$0xff] %v3662
                  %v3664 = vld [vmem:[%s3634 + $0x70] sm:$0xff]
                  %3665 = vst [vmem:[%s3635 + $0x70] sm:$0xff] %v3664
                  %v3666 = vld [vmem:[%s3634 + $0x78] sm:$0xff]
                  %3667 = vst [vmem:[%s3635 + $0x78] sm:$0xff] %v3666
                  %v3668 = vld [vmem:[%s3634 + $0x80] sm:$0xff]
                  %3669 = vst [vmem:[%s3635 + $0x80] sm:$0xff] %v3668
                  %v3670 = vld [vmem:[%s3634 + $0x88] sm:$0xff]
                  %3671 = vst [vmem:[%s3635 + $0x88] sm:$0xff] %v3670
                  %v3672 = vld [vmem:[%s3634 + $0x90] sm:$0xff]
                  %3673 = vst [vmem:[%s3635 + $0x90] sm:$0xff] %v3672
                  %v3674 = vld [vmem:[%s3634 + $0x98] sm:$0xff]
                  %3675 = vst [vmem:[%s3635 + $0x98] sm:$0xff] %v3674
                  %s3676 = sadd.s32 1, %s3633
                  %p3677 = scmp.ge.s32.totalorder %s3676, %s3625
                  %s3678 = scalar_select %p3677, 0, %s3676
                  %s3679 = smul.u32 %s3678, 160
                  %s3680 = smul.u32 %s3678, 160
                  %s3681 = scalar_lea.vmem %s3519, %s3679 [#allocation2]
                  %s3682 = scalar_lea.vmem %s3530, %s3680
                $region79: #{se_block.1} parent=73 // loop_footer
                  %s3630 = sadd.s32 %s3628, 1
                $region80: #{se_block.1} parent=73 // loop_footer_branch
                  %3627 = sbr.rel target = $region76
                $region81: #{se_block.1} parent=73 // loop_exit
                  _
                %s3683 = sdiv.u32.pop %s3526, 20
                %s3684 = srem.u32.pop %s3526, 20
                %s3685 = smul.u32 %s3683, 20
                %s3686 = smul.u32 8, %s3685
                %s3687 = scalar_lea.vmem %s3519, %s3686 [#allocation2]
                %s3688 = smul.u32 8, %s3685
                %s3689 = scalar_lea.vmem %s3530, %s3688
                // While loop
                $region82: #{se_block.1} parent=73 // loop_pre_header
                  _
                $region83: #{se_block.1} parent=73 // loop_header
                  %s3691 = sphi 0, %s3693
                  %p3692 = scmp.ge.s32.totalorder %s3691, %s3684
                  %s3696 = sphi 0, %s3703
                  %s3697 = sphi %s3687, %s3706
                  %s3698 = sphi %s3689, %s3707
                $region84: #{se_block.1} parent=73 // loop_header_branch
                  %3695 = sbr.rel (%p3692) target = $region88
                $region85: #{se_block.1} parent=73 // loop_body
                  %v3699 = vld [vmem:[%s3697] sm:$0xff]
                  %3700 = vst [vmem:[%s3698] sm:$0xff] %v3699
                  %s3701 = sadd.s32 1, %s3696
                  %p3702 = scmp.ge.s32.totalorder %s3701, %s3684
                  %s3703 = scalar_select %p3702, 0, %s3701
                  %s3704 = smul.u32 %s3703, 8
                  %s3705 = smul.u32 %s3703, 8
                  %s3706 = scalar_lea.vmem %s3687, %s3704 [#allocation2]
                  %s3707 = scalar_lea.vmem %s3689, %s3705
                $region86: #{se_block.1} parent=73 // loop_footer
                  %s3693 = sadd.s32 %s3691, 1
                $region87: #{se_block.1} parent=73 // loop_footer_branch
                  %3690 = sbr.rel target = $region83
                $region88: #{se_block.1} parent=73 // loop_exit
                  _
              $region74: #{se_block.1} parent=51 // pred_fallthru
                _
              // Predicated region
              $region89: #{se_block.1} parent=51 // pred_check
                _
              $region90: #{se_block.1} parent=51 // pred_check_branch
                %3709 = sbr.rel target = $region92
              $region91: #{se_block.1} parent=51 // pred_region
                _
              $region92: #{se_block.1} parent=51 // pred_fallthru
                _
            $region52: #{se_block.1} parent=47 // pred_fallthru
              _
            // Predicated region
            $region53: #{se_block.1} parent=47 // pred_check
              _
            $region54: #{se_block.1} parent=47 // pred_check_branch
              %3537 = sbr.rel target = $region56
            $region55: #{se_block.1} parent=47 // pred_region
              %s3539 = ssub.s32 256, 1
              %s3540 = sdiv.u32.pop %s3526, 20
              %s3541 = srem.u32.pop %s3526, 20
              // While loop
              $region57: #{se_block.1} parent=55 // loop_pre_header
                _
              $region58: #{se_block.1} parent=55 // loop_header
                %s3543 = sphi 0, %s3545
                %p3544 = scmp.ge.s32.totalorder %s3543, %s3540
                %s3548 = sphi 0, %s3593
                %s3549 = sphi %s3519, %s3596
                %s3550 = sphi %s3530, %s3597
              $region59: #{se_block.1} parent=55 // loop_header_branch
                %3547 = sbr.rel (%p3544) target = $region63
              $region60: #{se_block.1} parent=55 // loop_body
                %v3551 = vld [vmem:[%s3549] sm:%s3539]
                %3552 = vst [vmem:[%s3550] sm:%s3539] %v3551
                %v3553 = vld [vmem:[%s3549 + $0x8] sm:%s3539]
                %3554 = vst [vmem:[%s3550 + $0x8] sm:%s3539] %v3553
                %v3555 = vld [vmem:[%s3549 + $0x10] sm:%s3539]
                %3556 = vst [vmem:[%s3550 + $0x10] sm:%s3539] %v3555
                %v3557 = vld [vmem:[%s3549 + $0x18] sm:%s3539]
                %3558 = vst [vmem:[%s3550 + $0x18] sm:%s3539] %v3557
                %v3559 = vld [vmem:[%s3549 + $0x20] sm:%s3539]
                %3560 = vst [vmem:[%s3550 + $0x20] sm:%s3539] %v3559
                %v3561 = vld [vmem:[%s3549 + $0x28] sm:%s3539]
                %3562 = vst [vmem:[%s3550 + $0x28] sm:%s3539] %v3561
                %v3563 = vld [vmem:[%s3549 + $0x30] sm:%s3539]
                %3564 = vst [vmem:[%s3550 + $0x30] sm:%s3539] %v3563
                %v3565 = vld [vmem:[%s3549 + $0x38] sm:%s3539]
                %3566 = vst [vmem:[%s3550 + $0x38] sm:%s3539] %v3565
                %v3567 = vld [vmem:[%s3549 + $0x40] sm:%s3539]
                %3568 = vst [vmem:[%s3550 + $0x40] sm:%s3539] %v3567
                %v3569 = vld [vmem:[%s3549 + $0x48] sm:%s3539]
                %3570 = vst [vmem:[%s3550 + $0x48] sm:%s3539] %v3569
                %v3571 = vld [vmem:[%s3549 + $0x50] sm:%s3539]
                %3572 = vst [vmem:[%s3550 + $0x50] sm:%s3539] %v3571
                %v3573 = vld [vmem:[%s3549 + $0x58] sm:%s3539]
                %3574 = vst [vmem:[%s3550 + $0x58] sm:%s3539] %v3573
                %v3575 = vld [vmem:[%s3549 + $0x60] sm:%s3539]
                %3576 = vst [vmem:[%s3550 + $0x60] sm:%s3539] %v3575
                %v3577 = vld [vmem:[%s3549 + $0x68] sm:%s3539]
                %3578 = vst [vmem:[%s3550 + $0x68] sm:%s3539] %v3577
                %v3579 = vld [vmem:[%s3549 + $0x70] sm:%s3539]
                %3580 = vst [vmem:[%s3550 + $0x70] sm:%s3539] %v3579
                %v3581 = vld [vmem:[%s3549 + $0x78] sm:%s3539]
                %3582 = vst [vmem:[%s3550 + $0x78] sm:%s3539] %v3581
                %v3583 = vld [vmem:[%s3549 + $0x80] sm:%s3539]
                %3584 = vst [vmem:[%s3550 + $0x80] sm:%s3539] %v3583
                %v3585 = vld [vmem:[%s3549 + $0x88] sm:%s3539]
                %3586 = vst [vmem:[%s3550 + $0x88] sm:%s3539] %v3585
                %v3587 = vld [vmem:[%s3549 + $0x90] sm:%s3539]
                %3588 = vst [vmem:[%s3550 + $0x90] sm:%s3539] %v3587
                %v3589 = vld [vmem:[%s3549 + $0x98] sm:%s3539]
                %3590 = vst [vmem:[%s3550 + $0x98] sm:%s3539] %v3589
                %s3591 = sadd.s32 1, %s3548
                %p3592 = scmp.ge.s32.totalorder %s3591, %s3540
                %s3593 = scalar_select %p3592, 0, %s3591
                %s3594 = smul.u32 %s3593, 160
                %s3595 = smul.u32 %s3593, 160
                %s3596 = scalar_lea.vmem %s3519, %s3594 [#allocation2]
                %s3597 = scalar_lea.vmem %s3530, %s3595
              $region61: #{se_block.1} parent=55 // loop_footer
                %s3545 = sadd.s32 %s3543, 1
              $region62: #{se_block.1} parent=55 // loop_footer_branch
                %3542 = sbr.rel target = $region58
              $region63: #{se_block.1} parent=55 // loop_exit
                _
              %s3598 = sdiv.u32.pop %s3526, 20
              %s3599 = srem.u32.pop %s3526, 20
              %s3600 = smul.u32 %s3598, 20
              %s3601 = smul.u32 8, %s3600
              %s3602 = scalar_lea.vmem %s3519, %s3601 [#allocation2]
              %s3603 = smul.u32 8, %s3600
              %s3604 = scalar_lea.vmem %s3530, %s3603
              // While loop
              $region64: #{se_block.1} parent=55 // loop_pre_header
                _
              $region65: #{se_block.1} parent=55 // loop_header
                %s3606 = sphi 0, %s3608
                %p3607 = scmp.ge.s32.totalorder %s3606, %s3599
                %s3611 = sphi 0, %s3618
                %s3612 = sphi %s3602, %s3621
                %s3613 = sphi %s3604, %s3622
              $region66: #{se_block.1} parent=55 // loop_header_branch
                %3610 = sbr.rel (%p3607) target = $region70
              $region67: #{se_block.1} parent=55 // loop_body
                %v3614 = vld [vmem:[%s3612] sm:%s3539]
                %3615 = vst [vmem:[%s3613] sm:%s3539] %v3614
                %s3616 = sadd.s32 1, %s3611
                %p3617 = scmp.ge.s32.totalorder %s3616, %s3599
                %s3618 = scalar_select %p3617, 0, %s3616
                %s3619 = smul.u32 %s3618, 8
                %s3620 = smul.u32 %s3618, 8
                %s3621 = scalar_lea.vmem %s3602, %s3619 [#allocation2]
                %s3622 = scalar_lea.vmem %s3604, %s3620
              $region68: #{se_block.1} parent=55 // loop_footer
                %s3608 = sadd.s32 %s3606, 1
              $region69: #{se_block.1} parent=55 // loop_footer_branch
                %3605 = sbr.rel target = $region65
              $region70: #{se_block.1} parent=55 // loop_exit
                _
            $region56: #{se_block.1} parent=47 // pred_fallthru
              _
          $region48: #{se_block.1} parent=43 // pred_fallthru
            _
          %3710 = vnop
        $region44: #{se_block.1} parent=39 // pred_fallthru
          _
      $region40: #{se_block.1} parent=5 // pred_fallthru
        _
      %p3711 = scmp.le.s32.totalorder 2, %s11
      // Predicated region
      $region93: #{se_block.1} parent=5 // pred_check
        %p3712 = pneg %p3711
      $region94: #{se_block.1} parent=5 // pred_check_branch
        %3714 = sbr.rel (%p3712) target = $region96
      $region95: #{se_block.1} parent=5 // pred_region
        %s3715 = ssub.s32 %s11, 2
        // Predicated region
        $region97: #{se_block.1} parent=95 // pred_check
          %p3716 = pneg %p150
        $region98: #{se_block.1} parent=95 // pred_check_branch
          %3718 = sbr.rel (%p3716) target = $region100
        $region99: #{se_block.1} parent=95 // pred_region
          %s3719 = sand.u32 %s135, 1
          %s3720 = sand.u32 %s135, 1
          %s3721 = smul.addr %s3720, 160
          %s3722 = scalar_lea.vmem [#allocation2], %s3721
        $region100: #{se_block.1} parent=95 // pred_fallthru
          _
      $region96: #{se_block.1} parent=5 // pred_fallthru
        _
    $region6: #{se_block.1} parent=1 // loop_footer
      %s15 = sadd.s32 1, %s11
    $region7: #{se_block.1} parent=1 // loop_footer_branch
      %10 = sbr.rel target = $region3
    $region8: #{se_block.1} parent=1 // loop_exit
      _

</llo_original>
